<compile_context>
chip_gen: v7x
topology: tpu7x:2x2x1
jax: 0.10.0
libtpu: 0.0.40
codegen_flags: <defaults>
</compile_context>

<pallas_src>
import numpy as np
import jax
import jax.numpy as jnp
from jax import lax
from jax.experimental import pallas as pl
from jax.experimental.pallas import tpu as pltpu

H, W = 64, 128            # spatial size (W = 128 -> lane-dense flat layout)
HW = H * W
PW = (H + 2) * W          # flat length with one padding row above & below
CHUNK = 512               # 4 image rows per chunk; multiple of W so lane rolls never cross rows
NCH = HW // CHUNK
NUM_SEGMENTS = 10         # depth_segments
BOTTOM_PERCENT = 1
P_LOCAL = 0.5             # p in estimate_direct_signal_attenuation
F_SCALE = 2.0             # f in estimate_direct_signal_attenuation
CIN = 3
CIN_P = 8                 # channel-padded layer-1 input depth (sublane-aligned MXU K)
C1, C2 = 16, 32           # feature extractor channels
DEPTH_PAD = 1e9           # sentinel: |pad - depth| < 1 is never true -> out-of-image rows invalid

assert W & (W - 1) == 0 and CHUNK % W == 0 and HW % CHUNK == 0


# ----------------------------------------------------------------------------
# Single fused Pallas kernel:
#   phase 1: ULAP depth prior + depth-guided 3x3 masked local average of the per-pixel
#            D_c map + attenuation  -> J_c  (written to output and to padded conv scratch)
#   phase 2: 3x3 conv (3->16) + ReLU   (register-accumulated per 512-lane chunk)
#   phase 3: 3x3 conv (16->32) + ReLU  -> features
# ----------------------------------------------------------------------------
def eigm_fused_kernel(mu_ref, img_ref, dpad_ref, gpad_ref,
                      w1_ref, b1_ref, w2_ref, b2_ref,
                      jc_ref, feat_ref, xpad1_ref, xpad2_ref):
    # chunk-invariant column-validity masks (a chunk is a whole number of rows, so a
    # +-1-lane roll only wraps at positions these masks zero out anyway)
    col = lax.broadcasted_iota(jnp.int32, (1, CHUNK), 1) & (W - 1)
    ok_left = col >= 1              # neighbor at w-1 exists
    ok_right = col <= W - 2         # neighbor at w+1 exists

    def col_mask(dx):
        return None if dx == 0 else (ok_left if dx < 0 else ok_right)

    def shift_dx(x, dx):
        return x if dx == 0 else pltpu.roll(x, shift=(-dx) % CHUNK, axis=1)

    def slab(ref, c0, dy):
        start = pl.multiple_of(c0 + (dy + 1) * W, W)   # 128-lane aligned offset read
        return ref[:, pl.ds(start, CHUNK)]

    # zero-init the padded conv activation scratches ("same" zero-padding semantics;
    # xpad1 is also channel-padded 3 -> 8, extra rows stay zero)
    xpad1_ref[...] = jnp.zeros_like(xpad1_ref)
    xpad2_ref[:, 0:W] = jnp.zeros((C1, W), xpad2_ref.dtype)
    xpad2_ref[:, PW - W:PW] = jnp.zeros((C1, W), xpad2_ref.dtype)

    mu0, mu1, mu2 = mu_ref[0], mu_ref[1], mu_ref[2]

    # ---------- phase 1: fused 9-tap depth-guided local average + attenuation -> J_c
    def eigm_chunk(i, carry):
        c0 = pl.multiple_of(i * CHUNK, CHUNK)
        d_sl = {dy: slab(dpad_ref, c0, dy) for dy in (-1, 0, 1)}   # (1, CHUNK) depth
        g_sl = {dy: slab(gpad_ref, c0, dy) for dy in (-1, 0, 1)}   # (4, CHUNK) = [1, Dr, Dg, Db]
        d_c = d_sl[0]
        acc = jnp.zeros((4, CHUNK), jnp.float32)
        for dy in (-1, 0, 1):
            for dx in (-1, 0, 1):
                m = jnp.abs(shift_dx(d_sl[dy], dx) - d_c) < 1.0
                cm = col_mask(dx)
                if cm is not None:
                    m = m & cm
                acc = acc + jnp.where(m, shift_dx(g_sl[dy], dx), 0.0)
        # row 0 of acc is the valid-neighbor count (center tap always valid -> >= 1)
        a_prime = acc[1:4, :] / acc[0:1, :]            # exact divide (per review note)
        dmap_c = g_sl[0][1:4, :]
        a_c = P_LOCAL * dmap_c + (1.0 - P_LOCAL) * a_prime
        img = img_ref[:, pl.ds(c0, CHUNK)]             # (3, CHUNK) r, g, b
        d_ulap = mu0 + mu1 * jnp.maximum(img[1:2, :], img[2:3, :]) + mu2 * img[0:1, :]
        jc = (F_SCALE * a_c) * d_ulap                  # (3, CHUNK)
        jc_ref[:, pl.ds(c0, CHUNK)] = jc
        xpad1_ref[pl.ds(0, CIN), pl.ds(pl.multiple_of(c0 + W, W), CHUNK)] = jc
        return carry

    lax.fori_loop(0, NCH, eigm_chunk, 0)

    # ---------- phases 2/3: 3x3 conv + ReLU, register-accumulated per chunk (no RMW)
    def conv_pass(in_ref, w_ref, b_ref, store):
        def chunk(i, carry):
            c0 = pl.multiple_of(i * CHUNK, CHUNK)
            sl = {dy: slab(in_ref, c0, dy) for dy in (-1, 0, 1)}
            acc = jnp.zeros((w_ref.shape[1], CHUNK), jnp.float32)
            t = 0
            for dy in (-1, 0, 1):
                for dx in (-1, 0, 1):
                    xs = shift_dx(sl[dy], dx)
                    cm = col_mask(dx)
                    if cm is not None:
                        xs = jnp.where(cm, xs, 0.0)
                    acc = acc + jnp.dot(w_ref[t], xs.astype(jnp.bfloat16),
                                        preferred_element_type=jnp.float32)
                    t += 1
            store(c0, jnp.maximum(acc + b_ref[...], 0.0))
            return carry
        lax.fori_loop(0, NCH, chunk, 0)

    def store_layer1(c0, out):
        xpad2_ref[:, pl.ds(pl.multiple_of(c0 + W, W), CHUNK)] = out

    def store_layer2(c0, out):
        feat_ref[:, pl.ds(c0, CHUNK)] = out

    conv_pass(xpad1_ref, w1_ref, b1_ref, store_layer1)   # 3(->8 padded) -> C1
    conv_pass(xpad2_ref, w2_ref, b2_ref, store_layer2)   # C1 -> C2


def eigm_fused(mu, img_flat, dpad, gpad, w1t, b1c, w2t, b2c):
    # TODO(synk): for real image sizes make the chunk loop a grid axis with halo'd
    # index_maps and mark it "parallel" so both v7x TensorCores run; re-derive the VMEM
    # budget against v7x's 64 MiB (all live buffers here total < 3 MiB).
    return pl.pallas_call(
        eigm_fused_kernel,
        out_shape=(jax.ShapeDtypeStruct((CIN, HW), jnp.float32),   # J_c, flat
                   jax.ShapeDtypeStruct((C2, HW), jnp.float32)),   # features, flat
        grid=(1,),
        in_specs=[
            pl.BlockSpec(memory_space=pltpu.MemorySpace.SMEM),     # mu (3,)
            pl.BlockSpec((CIN, HW), lambda i: (0, 0)),             # image, flat
            pl.BlockSpec((1, PW), lambda i: (0, 0)),               # depth, padded flat
            pl.BlockSpec((4, PW), lambda i: (0, 0)),               # [ones; D_c map], padded flat
            pl.BlockSpec((9, C1, CIN_P), lambda i: (0, 0, 0)),     # w1 per-tap (Cout,Cin) bf16
            pl.BlockSpec((C1, 1), lambda i: (0, 0)),               # b1
            pl.BlockSpec((9, C2, C1), lambda i: (0, 0, 0)),        # w2 per-tap (Cout,Cin) bf16
            pl.BlockSpec((C2, 1), lambda i: (0, 0)),               # b2
        ],
        out_specs=(pl.BlockSpec((CIN, HW), lambda i: (0, 0)),
                   pl.BlockSpec((C2, HW), lambda i: (0, 0))),
        scratch_shapes=[pltpu.VMEM((CIN_P, PW), jnp.float32),      # padded J_c (layer-1 input)
                        pltpu.VMEM((C1, PW), jnp.float32)],        # padded layer-1 activation
        compiler_params=pltpu.CompilerParams(dimension_semantics=("arbitrary",)),
    )(mu, img_flat, dpad, gpad, w1t, b1c, w2t, b2c)


# ----------------------------------------------------------------------------
# On-device (plain JAX, fixed shapes) depth-segment background / direct-signal stats.
# Data-dependent masking + bottom-percent selection has no clean Pallas equivalent; it is
# kept on-device with fixed shapes, and the full sort is replaced by lax.top_k.
# ----------------------------------------------------------------------------
def estimate_background_and_direct_signal(image_flat, depth_flat,
                                          depth_segments=NUM_SEGMENTS,
                                          bottom_percent=BOTTOM_PERCENT):
    s = depth_segments
    dmin = jnp.min(depth_flat)
    dmax = jnp.max(depth_flat)
    t = jnp.arange(s + 1, dtype=jnp.float32) / jnp.float32(s)
    bins = dmin + (dmax - dmin) * t                                        # (s+1,)
    inseg = ((depth_flat[None, :] >= bins[:s, None])
             & (depth_flat[None, :] < bins[1:, None]))                     # (s, HW)
    # pixels in no half-open bin (depth == max) -> last segment for the per-pixel map
    segid = jnp.where(jnp.any(inseg, axis=0), jnp.argmax(inseg, axis=0), s - 1)
    onehot = inseg.astype(jnp.float32)
    n = jnp.sum(onehot, axis=1)
    n_i = n.astype(jnp.int32)
    seg_sum = jnp.einsum("sp,cp->sc", onehot, image_flat,
                         precision=jax.lax.Precision.HIGHEST)              # tiny, exactish
    seg_mean = seg_sum / jnp.maximum(n, 1.0)[:, None]
    min_rgb = jnp.min(image_flat, axis=0)                                  # (HW,)
    num_dark = (n_i * bottom_percent) // 100                               # (s,)
    masked = jnp.where(inseg, min_rgb[None, :], jnp.inf)
    k = max(1, (HW * bottom_percent) // 100)                               # static top-k size
    neg_topk, _ = lax.top_k(-masked, k)                                    # k smallest per segment
    vals = -neg_topk
    take = jnp.arange(k, dtype=jnp.int32)[None, :] < num_dark[:, None]
    # TODO(synk): torch yields NaN when a segment has < 100/bottom_percent pixels; we use 0.
    b_c = (jnp.sum(jnp.where(take, vals, 0.0), axis=1)
           / jnp.maximum(num_dark, 1).astype(jnp.float32))
    dc = seg_mean - b_c[:, None]
    dc = jnp.where((n_i > 0)[:, None], dc, 0.0)                            # empty seg -> 0
    return dc, segid


@jax.jit
def eigm_forward(image, depth, params):
    image = image.astype(jnp.float32)
    depth = depth.astype(jnp.float32)
    img_flat = image.reshape(CIN, HW)
    depth_flat = depth.reshape(HW)
    dc, segid = estimate_background_and_direct_signal(img_flat, depth_flat)

    # per-pixel D_c scatter as a one-hot matmul (MXU) instead of 30 masked mul-adds
    onehot = (segid[None, :] == jnp.arange(NUM_SEGMENTS)[:, None]).astype(jnp.float32)
    dmap = jnp.einsum("sc,sp->cp", dc, onehot,
                      precision=jax.lax.Precision.HIGHEST)                 # (3, HW), exact select

    dpad = jnp.pad(depth_flat.reshape(1, HW), ((0, 0), (W, W)), constant_values=DEPTH_PAD)
    gpad = jnp.pad(jnp.concatenate([jnp.ones((1, HW), jnp.float32), dmap], axis=0),
                   ((0, 0), (W, W)))

    # per-tap (Cout, Cin) weight matrices, bf16 at the MXU boundary (f32 accumulation)
    w1t = jnp.transpose(params["w1"].reshape(9, CIN, C1), (0, 2, 1))
    w1t = jnp.pad(w1t, ((0, 0), (0, 0), (0, CIN_P - CIN))).astype(jnp.bfloat16)
    w2t = jnp.transpose(params["w2"].reshape(9, C1, C2), (0, 2, 1)).astype(jnp.bfloat16)

    jc_flat, feat = eigm_fused(params["mu"].astype(jnp.float32), img_flat, dpad, gpad,
                               w1t, params["b1"].reshape(C1, 1).astype(jnp.float32),
                               w2t, params["b2"].reshape(C2, 1).astype(jnp.float32))
    return jc_flat.reshape(CIN, H, W), feat.reshape(1, C2, H, W)


# ----------------------------------------------------------------------------
# Pure numpy references (same interpretation) for validation.
# ----------------------------------------------------------------------------
def reference_segmentation(image, depth):
    s = NUM_SEGMENTS
    dmin, dmax = np.float32(depth.min()), np.float32(depth.max())
    t = np.arange(s + 1, dtype=np.float32) / np.float32(s)
    bins = (dmin + (dmax - dmin) * t).astype(np.float32)
    segid = np.full(depth.shape, s - 1, np.int32)
    dc_table = np.zeros((s, 3), np.float32)
    for i in range(s):
        mask = (depth >= bins[i]) & (depth < bins[i + 1])
        segid[mask] = i
        n = int(mask.sum())
        if n == 0:
            continue
        seg_img = image[:, mask]
        min_rgb = seg_img.min(axis=0)
        num_dark = (n * BOTTOM_PERCENT) // 100
        b_c = np.float32(np.sort(min_rgb)[:num_dark].mean()) if num_dark > 0 else np.float32(0.0)
        dc_table[i] = seg_img.mean(axis=1) - b_c
    return dc_table, segid


def reference_forward(mu, dc_table, image, depth, segid, w1, b1, w2, b2):
    r, g, b = image[0], image[1], image[2]
    d = mu[0] + mu[1] * np.maximum(g, b) + mu[2] * r
    hh, ww = depth.shape
    dmap = np.transpose(dc_table[segid], (2, 0, 1)).astype(np.float32)      # (3, H, W)

    nsum = np.zeros((3, hh, ww), np.float32)
    ncnt = np.zeros((hh, ww), np.float32)
    for dy in (-1, 0, 1):
        for dx in (-1, 0, 1):
            y0, y1 = max(0, -dy), hh - max(0, dy)
            x0, x1 = max(0, -dx), ww - max(0, dx)
            nb_d = depth[y0 + dy:y1 + dy, x0 + dx:x1 + dx]
            ct_d = depth[y0:y1, x0:x1]
            m = (np.abs(nb_d - ct_d) < 1.0).astype(np.float32)
            ncnt[y0:y1, x0:x1] += m
            nsum[:, y0:y1, x0:x1] += m[None] * dmap[:, y0 + dy:y1 + dy, x0 + dx:x1 + dx]
    a_prime = nsum / ncnt
    a_c = P_LOCAL * dmap + (1.0 - P_LOCAL) * a_prime
    j_c = (F_SCALE * a_c) * d[None]

    def conv_ref(x, wgt, bias):
        ph, pw, _ = x.shape
        xp = np.pad(x, ((1, 1), (1, 1), (0, 0)))
        out = np.zeros((ph, pw, wgt.shape[-1]), np.float32)
        for ky in range(3):
            for kx in range(3):
                out += xp[ky:ky + ph, kx:kx + pw, :] @ wgt[ky, kx]
        return np.maximum(out + bias, 0.0)

    x = np.transpose(j_c, (1, 2, 0))
    f1 = conv_ref(x, w1, b1)
    f2 = conv_ref(f1, w2, b2)
    return j_c, np.transpose(f2, (2, 0, 1))[None]


if __name__ == "__main__":
    key = jax.random.PRNGKey(0)
    k1, k2, k3, k4, k5, k6 = jax.random.split(key, 6)

    image = jax.random.uniform(k1, (CIN, H, W), jnp.float32)                       # RGB, CHW
    depth = jax.random.uniform(k2, (H, W), jnp.float32, minval=0.5, maxval=6.0)    # depth map

    params = {
        "mu": jnp.array([1.0, 1.0, 1.0], jnp.float32),                      # mu0, mu1, mu2
        "w1": jax.random.normal(k3, (3, 3, CIN, C1), jnp.float32) * 0.1,    # (ky,kx,Cin,Cout)
        "b1": jax.random.normal(k4, (C1,), jnp.float32) * 0.1,
        "w2": jax.random.normal(k5, (3, 3, C1, C2), jnp.float32) * 0.05,
        "b2": jax.random.normal(k6, (C2,), jnp.float32) * 0.1,
    }

    jc, feats = eigm_forward(image, depth, params)
    jc = jax.block_until_ready(jc)
    feats = jax.block_until_ready(feats)

    # --- validate the on-device segmentation against a torch-style numpy reference
    dc_jax, segid_jax = estimate_background_and_direct_signal(
        image.reshape(CIN, HW), depth.reshape(HW))
    dc_np, segid_np = reference_segmentation(np.asarray(image), np.asarray(depth))
    assert np.allclose(np.asarray(dc_jax), dc_np, rtol=2e-3, atol=2e-3), "D_c table mismatch"
    assert np.mean(np.asarray(segid_jax).reshape(H, W) == segid_np) > 0.999, "segid mismatch"

    # --- validate the fused Pallas pipeline (J_c and features) against numpy
    jc_ref, feats_ref = reference_forward(
        np.asarray(params["mu"]), np.asarray(dc_jax), np.asarray(image), np.asarray(depth),
        np.asarray(segid_jax).reshape(H, W),
        np.asarray(params["w1"]), np.asarray(params["b1"]),
        np.asarray(params["w2"]), np.asarray(params["b2"]))

    assert np.allclose(np.asarray(jc), jc_ref, rtol=5e-3, atol=5e-3), "J_c mismatch"
    assert np.allclose(np.asarray(feats), feats_ref, rtol=2e-2, atol=2e-2), "features mismatch"
    print("KERNEL_OK")
</pallas_src>

<mosaic_0001>
module attributes {stable_mosaic.version = 11 : i64} {
  func.func @eigm_fused_kernel(%arg0: i32, %arg1: memref<3xf32, #tpu.memory_space<smem>>, %arg2: memref<3x8192xf32, #tpu.memory_space<vmem>>, %arg3: memref<1x8448xf32, #tpu.memory_space<vmem>>, %arg4: memref<4x8448xf32, #tpu.memory_space<vmem>>, %arg5: memref<9x16x8xbf16, #tpu.memory_space<vmem>>, %arg6: memref<16x1xf32, #tpu.memory_space<vmem>>, %arg7: memref<9x32x16xbf16, #tpu.memory_space<vmem>>, %arg8: memref<32x1xf32, #tpu.memory_space<vmem>>, %arg9: memref<3x8192xf32, #tpu.memory_space<vmem>>, %arg10: memref<32x8192xf32, #tpu.memory_space<vmem>>, %arg11: memref<8x8448xf32, #tpu.memory_space<vmem>>, %arg12: memref<16x8448xf32, #tpu.memory_space<vmem>>) attributes {dimension_semantics = [#tpu.dimension_semantics<arbitrary>], iteration_bounds = array<i64: 1>, scalar_prefetch = 0 : i64, scratch_operands = 2 : i64, tpu.core_type = #tpu.core_type<tc>, window_params = [{transform_indices = @transform_0, window_bounds = array<i64: 3>}, {pipeline_mode = #tpu.pipeline_mode<synchronous>, transform_indices = @transform_1, window_bounds = array<i64: 3, 8192>}, {pipeline_mode = #tpu.pipeline_mode<synchronous>, transform_indices = @transform_2, window_bounds = array<i64: 1, 8448>}, {pipeline_mode = #tpu.pipeline_mode<synchronous>, transform_indices = @transform_3, window_bounds = array<i64: 4, 8448>}, {pipeline_mode = #tpu.pipeline_mode<synchronous>, transform_indices = @transform_4, window_bounds = array<i64: 9, 16, 8>}, {pipeline_mode = #tpu.pipeline_mode<synchronous>, transform_indices = @transform_5, window_bounds = array<i64: 16, 1>}, {pipeline_mode = #tpu.pipeline_mode<synchronous>, transform_indices = @transform_6, window_bounds = array<i64: 9, 32, 16>}, {pipeline_mode = #tpu.pipeline_mode<synchronous>, transform_indices = @transform_7, window_bounds = array<i64: 32, 1>}, {pipeline_mode = #tpu.pipeline_mode<synchronous>, transform_indices = @transform_8, window_bounds = array<i64: 3, 8192>}, {pipeline_mode = #tpu.pipeline_mode<synchronous>, transform_indices = @transform_9, window_bounds = array<i64: 32, 8192>}]} {
    %0 = tpu.iota {dimensions = array<i32: 1>} : vector<1x512xi32>
    %c127_i32 = arith.constant 127 : i32
    %1 = vector.broadcast %c127_i32 : i32 to vector<1x512xi32>
    %2 = arith.andi %0, %1 : vector<1x512xi32>
    %c1_i32 = arith.constant 1 : i32
    %3 = vector.broadcast %c1_i32 : i32 to vector<1x512xi32>
    %4 = arith.cmpi sge, %2, %3 : vector<1x512xi32>
    %c126_i32 = arith.constant 126 : i32
    %5 = vector.broadcast %c126_i32 : i32 to vector<1x512xi32>
    %6 = arith.cmpi sle, %2, %5 : vector<1x512xi32>
    %cst = arith.constant 0.000000e+00 : f32
    %7 = vector.broadcast %cst : f32 to vector<8x8448xf32>
    %c0 = arith.constant 0 : index
    %c0_0 = arith.constant 0 : index
    %8 = vector.load %arg11[%c0, %c0_0] : memref<8x8448xf32, #tpu.memory_space<vmem>>, vector<8x8448xf32>
    tpu.vector_store %arg11[%c0, %c0_0], %7 {strides = array<i32>} : memref<8x8448xf32, #tpu.memory_space<vmem>>, vector<8x8448xf32>,
    %cst_1 = arith.constant 0.000000e+00 : f32
    %9 = vector.broadcast %cst_1 : f32 to vector<16x128xf32>
    %c0_2 = arith.constant 0 : index
    %c0_3 = arith.constant 0 : index
    %10 = vector.load %arg12[%c0_2, %c0_3] : memref<16x8448xf32, #tpu.memory_space<vmem>>, vector<16x128xf32>
    tpu.vector_store %arg12[%c0_2, %c0_3], %9 {strides = array<i32>} : memref<16x8448xf32, #tpu.memory_space<vmem>>, vector<16x128xf32>,
    %cst_4 = arith.constant 0.000000e+00 : f32
    %11 = vector.broadcast %cst_4 : f32 to vector<16x128xf32>
    %c0_5 = arith.constant 0 : index
    %c8320 = arith.constant 8320 : index
    %12 = vector.load %arg12[%c0_5, %c8320] : memref<16x8448xf32, #tpu.memory_space<vmem>>, vector<16x128xf32>
    tpu.vector_store %arg12[%c0_5, %c8320], %11 {strides = array<i32>} : memref<16x8448xf32, #tpu.memory_space<vmem>>, vector<16x128xf32>,
    %c0_6 = arith.constant 0 : index
    %13 = memref.load %arg1[%c0_6] : memref<3xf32, #tpu.memory_space<smem>>
    %c1 = arith.constant 1 : index
    %14 = memref.load %arg1[%c1] : memref<3xf32, #tpu.memory_space<smem>>
    %c2 = arith.constant 2 : index
    %15 = memref.load %arg1[%c2] : memref<3xf32, #tpu.memory_space<smem>>
    %c0_i32 = arith.constant 0 : i32
    %c16_i32 = arith.constant 16 : i32
    %16 = arith.addi %c0_i32, %c16_i32 : i32
    %c1_i32_7 = arith.constant 1 : i32
    scf.for %arg13 = %c0_i32 to %16 step %c1_i32_7  : i32 {
      %c512_i32 = arith.constant 512 : i32
      %19 = arith.muli %arg13, %c512_i32 : i32
      %20 = tpu.assume_multiple %19, 512 : i32
      %c0_i32_17 = arith.constant 0 : i32
      %21 = arith.addi %20, %c0_i32_17 : i32
      %22 = tpu.assume_multiple %21, 128 : i32
      %c0_18 = arith.constant 0 : index
      %23 = arith.index_cast %22 : i32 to index
      %24 = vector.load %arg3[%c0_18, %23] : memref<1x8448xf32, #tpu.memory_space<vmem>>, vector<1x512xf32>
      %c128_i32 = arith.constant 128 : i32
      %25 = arith.addi %20, %c128_i32 : i32
      %26 = tpu.assume_multiple %25, 128 : i32
      %c0_19 = arith.constant 0 : index
      %27 = arith.index_cast %26 : i32 to index
      %28 = vector.load %arg3[%c0_19, %27] : memref<1x8448xf32, #tpu.memory_space<vmem>>, vector<1x512xf32>
      %c256_i32 = arith.constant 256 : i32
      %29 = arith.addi %20, %c256_i32 : i32
      %30 = tpu.assume_multiple %29, 128 : i32
      %c0_20 = arith.constant 0 : index
      %31 = arith.index_cast %30 : i32 to index
      %32 = vector.load %arg3[%c0_20, %31] : memref<1x8448xf32, #tpu.memory_space<vmem>>, vector<1x512xf32>
      %c0_i32_21 = arith.constant 0 : i32
      %33 = arith.addi %20, %c0_i32_21 : i32
      %34 = tpu.assume_multiple %33, 128 : i32
      %c0_22 = arith.constant 0 : index
      %35 = arith.index_cast %34 : i32 to index
      %36 = vector.load %arg4[%c0_22, %35] : memref<4x8448xf32, #tpu.memory_space<vmem>>, vector<4x512xf32>
      %c128_i32_23 = arith.constant 128 : i32
      %37 = arith.addi %20, %c128_i32_23 : i32
      %38 = tpu.assume_multiple %37, 128 : i32
      %c0_24 = arith.constant 0 : index
      %39 = arith.index_cast %38 : i32 to index
      %40 = vector.load %arg4[%c0_24, %39] : memref<4x8448xf32, #tpu.memory_space<vmem>>, vector<4x512xf32>
      %c256_i32_25 = arith.constant 256 : i32
      %41 = arith.addi %20, %c256_i32_25 : i32
      %42 = tpu.assume_multiple %41, 128 : i32
      %c0_26 = arith.constant 0 : index
      %43 = arith.index_cast %42 : i32 to index
      %44 = vector.load %arg4[%c0_26, %43] : memref<4x8448xf32, #tpu.memory_space<vmem>>, vector<4x512xf32>
      %cst_27 = arith.constant 0.000000e+00 : f32
      %45 = vector.broadcast %cst_27 : f32 to vector<4x512xf32>
      %c1_i32_28 = arith.constant 1 : i32
      %46 = tpu.dynamic_rotate %24 by %c1_i32_28 dim 1 : vector<1x512xf32>, i32 -> vector<1x512xf32>
      %47 = arith.subf %46, %28 : vector<1x512xf32>
      %48 = math.absf %47 : vector<1x512xf32>
      %cst_29 = arith.constant 1.000000e+00 : f32
      %49 = vector.broadcast %cst_29 : f32 to vector<1x512xf32>
      %50 = arith.cmpf olt, %48, %49 : vector<1x512xf32>
      %51 = arith.andi %50, %4 : vector<1x512xi1>
      %c1_i32_30 = arith.constant 1 : i32
      %52 = tpu.dynamic_rotate %36 by %c1_i32_30 dim 1 : vector<4x512xf32>, i32 -> vector<4x512xf32>
      %cst_31 = arith.constant 0.000000e+00 : f32
      %53 = vector.shape_cast %51 : vector<1x512xi1> to vector<1x512xi1>
      %54 = vector.broadcast %53 : vector<1x512xi1> to vector<4x512xi1>
      %55 = vector.broadcast %cst_31 : f32 to vector<4x512xf32>
      %56 = arith.select %54, %52, %55 : vector<4x512xi1>, vector<4x512xf32>
      %57 = arith.addf %45, %56 : vector<4x512xf32>
      %58 = arith.subf %24, %28 : vector<1x512xf32>
      %59 = math.absf %58 : vector<1x512xf32>
      %cst_32 = arith.constant 1.000000e+00 : f32
      %60 = vector.broadcast %cst_32 : f32 to vector<1x512xf32>
      %61 = arith.cmpf olt, %59, %60 : vector<1x512xf32>
      %cst_33 = arith.constant 0.000000e+00 : f32
      %62 = vector.shape_cast %61 : vector<1x512xi1> to vector<1x512xi1>
      %63 = vector.broadcast %62 : vector<1x512xi1> to vector<4x512xi1>
      %64 = vector.broadcast %cst_33 : f32 to vector<4x512xf32>
      %65 = arith.select %63, %36, %64 : vector<4x512xi1>, vector<4x512xf32>
      %66 = arith.addf %57, %65 : vector<4x512xf32>
      %c511_i32 = arith.constant 511 : i32
      %67 = tpu.dynamic_rotate %24 by %c511_i32 dim 1 : vector<1x512xf32>, i32 -> vector<1x512xf32>
      %68 = arith.subf %67, %28 : vector<1x512xf32>
      %69 = math.absf %68 : vector<1x512xf32>
      %cst_34 = arith.constant 1.000000e+00 : f32
      %70 = vector.broadcast %cst_34 : f32 to vector<1x512xf32>
      %71 = arith.cmpf olt, %69, %70 : vector<1x512xf32>
      %72 = arith.andi %71, %6 : vector<1x512xi1>
      %c511_i32_35 = arith.constant 511 : i32
      %73 = tpu.dynamic_rotate %36 by %c511_i32_35 dim 1 : vector<4x512xf32>, i32 -> vector<4x512xf32>
      %cst_36 = arith.constant 0.000000e+00 : f32
      %74 = vector.shape_cast %72 : vector<1x512xi1> to vector<1x512xi1>
      %75 = vector.broadcast %74 : vector<1x512xi1> to vector<4x512xi1>
      %76 = vector.broadcast %cst_36 : f32 to vector<4x512xf32>
      %77 = arith.select %75, %73, %76 : vector<4x512xi1>, vector<4x512xf32>
      %78 = arith.addf %66, %77 : vector<4x512xf32>
      %c1_i32_37 = arith.constant 1 : i32
      %79 = tpu.dynamic_rotate %28 by %c1_i32_37 dim 1 : vector<1x512xf32>, i32 -> vector<1x512xf32>
      %80 = arith.subf %79, %28 : vector<1x512xf32>
      %81 = math.absf %80 : vector<1x512xf32>
      %cst_38 = arith.constant 1.000000e+00 : f32
      %82 = vector.broadcast %cst_38 : f32 to vector<1x512xf32>
      %83 = arith.cmpf olt, %81, %82 : vector<1x512xf32>
      %84 = arith.andi %83, %4 : vector<1x512xi1>
      %c1_i32_39 = arith.constant 1 : i32
      %85 = tpu.dynamic_rotate %40 by %c1_i32_39 dim 1 : vector<4x512xf32>, i32 -> vector<4x512xf32>
      %cst_40 = arith.constant 0.000000e+00 : f32
      %86 = vector.shape_cast %84 : vector<1x512xi1> to vector<1x512xi1>
      %87 = vector.broadcast %86 : vector<1x512xi1> to vector<4x512xi1>
      %88 = vector.broadcast %cst_40 : f32 to vector<4x512xf32>
      %89 = arith.select %87, %85, %88 : vector<4x512xi1>, vector<4x512xf32>
      %90 = arith.addf %78, %89 : vector<4x512xf32>
      %91 = arith.subf %28, %28 : vector<1x512xf32>
      %92 = math.absf %91 : vector<1x512xf32>
      %cst_41 = arith.constant 1.000000e+00 : f32
      %93 = vector.broadcast %cst_41 : f32 to vector<1x512xf32>
      %94 = arith.cmpf olt, %92, %93 : vector<1x512xf32>
      %cst_42 = arith.constant 0.000000e+00 : f32
      %95 = vector.shape_cast %94 : vector<1x512xi1> to vector<1x512xi1>
      %96 = vector.broadcast %95 : vector<1x512xi1> to vector<4x512xi1>
      %97 = vector.broadcast %cst_42 : f32 to vector<4x512xf32>
      %98 = arith.select %96, %40, %97 : vector<4x512xi1>, vector<4x512xf32>
      %99 = arith.addf %90, %98 : vector<4x512xf32>
      %c511_i32_43 = arith.constant 511 : i32
      %100 = tpu.dynamic_rotate %28 by %c511_i32_43 dim 1 : vector<1x512xf32>, i32 -> vector<1x512xf32>
      %101 = arith.subf %100, %28 : vector<1x512xf32>
      %102 = math.absf %101 : vector<1x512xf32>
      %cst_44 = arith.constant 1.000000e+00 : f32
      %103 = vector.broadcast %cst_44 : f32 to vector<1x512xf32>
      %104 = arith.cmpf olt, %102, %103 : vector<1x512xf32>
      %105 = arith.andi %104, %6 : vector<1x512xi1>
      %c511_i32_45 = arith.constant 511 : i32
      %106 = tpu.dynamic_rotate %40 by %c511_i32_45 dim 1 : vector<4x512xf32>, i32 -> vector<4x512xf32>
      %cst_46 = arith.constant 0.000000e+00 : f32
      %107 = vector.shape_cast %105 : vector<1x512xi1> to vector<1x512xi1>
      %108 = vector.broadcast %107 : vector<1x512xi1> to vector<4x512xi1>
      %109 = vector.broadcast %cst_46 : f32 to vector<4x512xf32>
      %110 = arith.select %108, %106, %109 : vector<4x512xi1>, vector<4x512xf32>
      %111 = arith.addf %99, %110 : vector<4x512xf32>
      %c1_i32_47 = arith.constant 1 : i32
      %112 = tpu.dynamic_rotate %32 by %c1_i32_47 dim 1 : vector<1x512xf32>, i32 -> vector<1x512xf32>
      %113 = arith.subf %112, %28 : vector<1x512xf32>
      %114 = math.absf %113 : vector<1x512xf32>
      %cst_48 = arith.constant 1.000000e+00 : f32
      %115 = vector.broadcast %cst_48 : f32 to vector<1x512xf32>
      %116 = arith.cmpf olt, %114, %115 : vector<1x512xf32>
      %117 = arith.andi %116, %4 : vector<1x512xi1>
      %c1_i32_49 = arith.constant 1 : i32
      %118 = tpu.dynamic_rotate %44 by %c1_i32_49 dim 1 : vector<4x512xf32>, i32 -> vector<4x512xf32>
      %cst_50 = arith.constant 0.000000e+00 : f32
      %119 = vector.shape_cast %117 : vector<1x512xi1> to vector<1x512xi1>
      %120 = vector.broadcast %119 : vector<1x512xi1> to vector<4x512xi1>
      %121 = vector.broadcast %cst_50 : f32 to vector<4x512xf32>
      %122 = arith.select %120, %118, %121 : vector<4x512xi1>, vector<4x512xf32>
      %123 = arith.addf %111, %122 : vector<4x512xf32>
      %124 = arith.subf %32, %28 : vector<1x512xf32>
      %125 = math.absf %124 : vector<1x512xf32>
      %cst_51 = arith.constant 1.000000e+00 : f32
      %126 = vector.broadcast %cst_51 : f32 to vector<1x512xf32>
      %127 = arith.cmpf olt, %125, %126 : vector<1x512xf32>
      %cst_52 = arith.constant 0.000000e+00 : f32
      %128 = vector.shape_cast %127 : vector<1x512xi1> to vector<1x512xi1>
      %129 = vector.broadcast %128 : vector<1x512xi1> to vector<4x512xi1>
      %130 = vector.broadcast %cst_52 : f32 to vector<4x512xf32>
      %131 = arith.select %129, %44, %130 : vector<4x512xi1>, vector<4x512xf32>
      %132 = arith.addf %123, %131 : vector<4x512xf32>
      %c511_i32_53 = arith.constant 511 : i32
      %133 = tpu.dynamic_rotate %32 by %c511_i32_53 dim 1 : vector<1x512xf32>, i32 -> vector<1x512xf32>
      %134 = arith.subf %133, %28 : vector<1x512xf32>
      %135 = math.absf %134 : vector<1x512xf32>
      %cst_54 = arith.constant 1.000000e+00 : f32
      %136 = vector.broadcast %cst_54 : f32 to vector<1x512xf32>
      %137 = arith.cmpf olt, %135, %136 : vector<1x512xf32>
      %138 = arith.andi %137, %6 : vector<1x512xi1>
      %c511_i32_55 = arith.constant 511 : i32
      %139 = tpu.dynamic_rotate %44 by %c511_i32_55 dim 1 : vector<4x512xf32>, i32 -> vector<4x512xf32>
      %cst_56 = arith.constant 0.000000e+00 : f32
      %140 = vector.shape_cast %138 : vector<1x512xi1> to vector<1x512xi1>
      %141 = vector.broadcast %140 : vector<1x512xi1> to vector<4x512xi1>
      %142 = vector.broadcast %cst_56 : f32 to vector<4x512xf32>
      %143 = arith.select %141, %139, %142 : vector<4x512xi1>, vector<4x512xf32>
      %144 = arith.addf %132, %143 : vector<4x512xf32>
      %145 = vector.extract_strided_slice %144 {offsets = [1, 0], sizes = [3, 512], strides = [1, 1]} : vector<4x512xf32> to vector<3x512xf32>
      %146 = vector.extract_strided_slice %144 {offsets = [0, 0], sizes = [1, 512], strides = [1, 1]} : vector<4x512xf32> to vector<1x512xf32>
      %147 = vector.broadcast %146 : vector<1x512xf32> to vector<3x512xf32>
      %148 = arith.divf %145, %147 : vector<3x512xf32>
      %149 = vector.extract_strided_slice %40 {offsets = [1, 0], sizes = [3, 512], strides = [1, 1]} : vector<4x512xf32> to vector<3x512xf32>
      %cst_57 = arith.constant 5.000000e-01 : f32
      %150 = vector.broadcast %cst_57 : f32 to vector<3x512xf32>
      %151 = arith.mulf %150, %149 : vector<3x512xf32>
      %cst_58 = arith.constant 5.000000e-01 : f32
      %152 = vector.broadcast %cst_58 : f32 to vector<3x512xf32>
      %153 = arith.mulf %152, %148 : vector<3x512xf32>
      %154 = arith.addf %151, %153 : vector<3x512xf32>
      %c0_59 = arith.constant 0 : index
      %155 = arith.index_cast %20 : i32 to index
      %156 = vector.load %arg2[%c0_59, %155] : memref<3x8192xf32, #tpu.memory_space<vmem>>, vector<3x512xf32>
      %157 = vector.extract_strided_slice %156 {offsets = [1, 0], sizes = [1, 512], strides = [1, 1]} : vector<3x512xf32> to vector<1x512xf32>
      %158 = vector.extract_strided_slice %156 {offsets = [2, 0], sizes = [1, 512], strides = [1, 1]} : vector<3x512xf32> to vector<1x512xf32>
      %159 = arith.maximumf %157, %158 : vector<1x512xf32>
      %160 = vector.broadcast %14 : f32 to vector<1x512xf32>
      %161 = arith.mulf %160, %159 : vector<1x512xf32>
      %162 = vector.broadcast %13 : f32 to vector<1x512xf32>
      %163 = arith.addf %162, %161 : vector<1x512xf32>
      %164 = vector.extract_strided_slice %156 {offsets = [0, 0], sizes = [1, 512], strides = [1, 1]} : vector<3x512xf32> to vector<1x512xf32>
      %165 = vector.broadcast %15 : f32 to vector<1x512xf32>
      %166 = arith.mulf %165, %164 : vector<1x512xf32>
      %167 = arith.addf %163, %166 : vector<1x512xf32>
      %cst_60 = arith.constant 2.000000e+00 : f32
      %168 = vector.broadcast %cst_60 : f32 to vector<3x512xf32>
      %169 = arith.mulf %168, %154 : vector<3x512xf32>
      %170 = vector.broadcast %167 : vector<1x512xf32> to vector<3x512xf32>
      %171 = arith.mulf %169, %170 : vector<3x512xf32>
      %c0_61 = arith.constant 0 : index
      %172 = arith.index_cast %20 : i32 to index
      %173 = vector.load %arg9[%c0_61, %172] : memref<3x8192xf32, #tpu.memory_space<vmem>>, vector<3x512xf32>
      tpu.vector_store %arg9[%c0_61, %172], %171 {strides = array<i32>} : memref<3x8192xf32, #tpu.memory_space<vmem>>, vector<3x512xf32>,
      %c128_i32_62 = arith.constant 128 : i32
      %174 = arith.addi %20, %c128_i32_62 : i32
      %175 = tpu.assume_multiple %174, 128 : i32
      %c0_63 = arith.constant 0 : index
      %176 = arith.index_cast %175 : i32 to index
      %177 = vector.load %arg11[%c0_63, %176] : memref<8x8448xf32, #tpu.memory_space<vmem>>, vector<3x512xf32>
      tpu.vector_store %arg11[%c0_63, %176], %171 {strides = array<i32>} : memref<8x8448xf32, #tpu.memory_space<vmem>>, vector<3x512xf32>,
    }
    %c16_i32_8 = arith.constant 16 : i32
    %c0_i32_9 = arith.constant 0 : i32
    %c16_i32_10 = arith.constant 16 : i32
    %17 = arith.addi %c0_i32_9, %c16_i32_10 : i32
    %c1_i32_11 = arith.constant 1 : i32
    scf.for %arg13 = %c0_i32_9 to %17 step %c1_i32_11  : i32 {
      %c512_i32 = arith.constant 512 : i32
      %19 = arith.muli %arg13, %c512_i32 : i32
      %20 = tpu.assume_multiple %19, 512 : i32
      %c0_i32_17 = arith.constant 0 : i32
      %21 = arith.addi %20, %c0_i32_17 : i32
      %22 = tpu.assume_multiple %21, 128 : i32
      %c0_18 = arith.constant 0 : index
      %23 = arith.index_cast %22 : i32 to index
      %24 = vector.load %arg11[%c0_18, %23] : memref<8x8448xf32, #tpu.memory_space<vmem>>, vector<8x512xf32>
      %c128_i32 = arith.constant 128 : i32
      %25 = arith.addi %20, %c128_i32 : i32
      %26 = tpu.assume_multiple %25, 128 : i32
      %c0_19 = arith.constant 0 : index
      %27 = arith.index_cast %26 : i32 to index
      %28 = vector.load %arg11[%c0_19, %27] : memref<8x8448xf32, #tpu.memory_space<vmem>>, vector<8x512xf32>
      %c256_i32 = arith.constant 256 : i32
      %29 = arith.addi %20, %c256_i32 : i32
      %30 = tpu.assume_multiple %29, 128 : i32
      %c0_20 = arith.constant 0 : index
      %31 = arith.index_cast %30 : i32 to index
      %32 = vector.load %arg11[%c0_20, %31] : memref<8x8448xf32, #tpu.memory_space<vmem>>, vector<8x512xf32>
      %cst_21 = arith.constant 0.000000e+00 : f32
      %33 = vector.broadcast %cst_21 : f32 to vector<16x512xf32>
      %c1_i32_22 = arith.constant 1 : i32
      %34 = tpu.dynamic_rotate %24 by %c1_i32_22 dim 1 : vector<8x512xf32>, i32 -> vector<8x512xf32>
      %cst_23 = arith.constant 0.000000e+00 : f32
      %35 = vector.shape_cast %4 : vector<1x512xi1> to vector<1x512xi1>
      %36 = vector.broadcast %35 : vector<1x512xi1> to vector<8x512xi1>
      %37 = vector.broadcast %cst_23 : f32 to vector<8x512xf32>
      %38 = arith.select %36, %34, %37 : vector<8x512xi1>, vector<8x512xf32>
      %c0_24 = arith.constant 0 : index
      %c0_25 = arith.constant 0 : index
      %c0_26 = arith.constant 0 : index
      %39 = vector.load %arg5[%c0_24, %c0_25, %c0_26] : memref<9x16x8xbf16, #tpu.memory_space<vmem>>, vector<1x16x8xbf16>
      %40 = vector.shape_cast %39 : vector<1x16x8xbf16> to vector<16x8xbf16>
      %41 = arith.truncf %38 : vector<8x512xf32> to vector<8x512xbf16>
      %cst_27 = arith.constant dense<0.000000e+00> : vector<16x512xf32>
      %42 = tpu.matmul %40, %41, %cst_27 {dimension_numbers = #tpu.dot_dimension_numbers<[1], [0], [0], [1], [0, 0, 1, 1], [], []>} : vector<16x8xbf16>, vector<8x512xbf16>, vector<16x512xf32> -> vector<16x512xf32>
      %43 = arith.addf %33, %42 : vector<16x512xf32>
      %c1_28 = arith.constant 1 : index
      %c0_29 = arith.constant 0 : index
      %c0_30 = arith.constant 0 : index
      %44 = vector.load %arg5[%c1_28, %c0_29, %c0_30] : memref<9x16x8xbf16, #tpu.memory_space<vmem>>, vector<1x16x8xbf16>
      %45 = vector.shape_cast %44 : vector<1x16x8xbf16> to vector<16x8xbf16>
      %46 = arith.truncf %24 : vector<8x512xf32> to vector<8x512xbf16>
      %cst_31 = arith.constant dense<0.000000e+00> : vector<16x512xf32>
      %47 = tpu.matmul %45, %46, %cst_31 {dimension_numbers = #tpu.dot_dimension_numbers<[1], [0], [0], [1], [0, 0, 1, 1], [], []>} : vector<16x8xbf16>, vector<8x512xbf16>, vector<16x512xf32> -> vector<16x512xf32>
      %48 = arith.addf %43, %47 : vector<16x512xf32>
      %c511_i32 = arith.constant 511 : i32
      %49 = tpu.dynamic_rotate %24 by %c511_i32 dim 1 : vector<8x512xf32>, i32 -> vector<8x512xf32>
      %cst_32 = arith.constant 0.000000e+00 : f32
      %50 = vector.shape_cast %6 : vector<1x512xi1> to vector<1x512xi1>
      %51 = vector.broadcast %50 : vector<1x512xi1> to vector<8x512xi1>
      %52 = vector.broadcast %cst_32 : f32 to vector<8x512xf32>
      %53 = arith.select %51, %49, %52 : vector<8x512xi1>, vector<8x512xf32>
      %c2_33 = arith.constant 2 : index
      %c0_34 = arith.constant 0 : index
      %c0_35 = arith.constant 0 : index
      %54 = vector.load %arg5[%c2_33, %c0_34, %c0_35] : memref<9x16x8xbf16, #tpu.memory_space<vmem>>, vector<1x16x8xbf16>
      %55 = vector.shape_cast %54 : vector<1x16x8xbf16> to vector<16x8xbf16>
      %56 = arith.truncf %53 : vector<8x512xf32> to vector<8x512xbf16>
      %cst_36 = arith.constant dense<0.000000e+00> : vector<16x512xf32>
      %57 = tpu.matmul %55, %56, %cst_36 {dimension_numbers = #tpu.dot_dimension_numbers<[1], [0], [0], [1], [0, 0, 1, 1], [], []>} : vector<16x8xbf16>, vector<8x512xbf16>, vector<16x512xf32> -> vector<16x512xf32>
      %58 = arith.addf %48, %57 : vector<16x512xf32>
      %c1_i32_37 = arith.constant 1 : i32
      %59 = tpu.dynamic_rotate %28 by %c1_i32_37 dim 1 : vector<8x512xf32>, i32 -> vector<8x512xf32>
      %cst_38 = arith.constant 0.000000e+00 : f32
      %60 = vector.shape_cast %4 : vector<1x512xi1> to vector<1x512xi1>
      %61 = vector.broadcast %60 : vector<1x512xi1> to vector<8x512xi1>
      %62 = vector.broadcast %cst_38 : f32 to vector<8x512xf32>
      %63 = arith.select %61, %59, %62 : vector<8x512xi1>, vector<8x512xf32>
      %c3 = arith.constant 3 : index
      %c0_39 = arith.constant 0 : index
      %c0_40 = arith.constant 0 : index
      %64 = vector.load %arg5[%c3, %c0_39, %c0_40] : memref<9x16x8xbf16, #tpu.memory_space<vmem>>, vector<1x16x8xbf16>
      %65 = vector.shape_cast %64 : vector<1x16x8xbf16> to vector<16x8xbf16>
      %66 = arith.truncf %63 : vector<8x512xf32> to vector<8x512xbf16>
      %cst_41 = arith.constant dense<0.000000e+00> : vector<16x512xf32>
      %67 = tpu.matmul %65, %66, %cst_41 {dimension_numbers = #tpu.dot_dimension_numbers<[1], [0], [0], [1], [0, 0, 1, 1], [], []>} : vector<16x8xbf16>, vector<8x512xbf16>, vector<16x512xf32> -> vector<16x512xf32>
      %68 = arith.addf %58, %67 : vector<16x512xf32>
      %c4 = arith.constant 4 : index
      %c0_42 = arith.constant 0 : index
      %c0_43 = arith.constant 0 : index
      %69 = vector.load %arg5[%c4, %c0_42, %c0_43] : memref<9x16x8xbf16, #tpu.memory_space<vmem>>, vector<1x16x8xbf16>
      %70 = vector.shape_cast %69 : vector<1x16x8xbf16> to vector<16x8xbf16>
      %71 = arith.truncf %28 : vector<8x512xf32> to vector<8x512xbf16>
      %cst_44 = arith.constant dense<0.000000e+00> : vector<16x512xf32>
      %72 = tpu.matmul %70, %71, %cst_44 {dimension_numbers = #tpu.dot_dimension_numbers<[1], [0], [0], [1], [0, 0, 1, 1], [], []>} : vector<16x8xbf16>, vector<8x512xbf16>, vector<16x512xf32> -> vector<16x512xf32>
      %73 = arith.addf %68, %72 : vector<16x512xf32>
      %c511_i32_45 = arith.constant 511 : i32
      %74 = tpu.dynamic_rotate %28 by %c511_i32_45 dim 1 : vector<8x512xf32>, i32 -> vector<8x512xf32>
      %cst_46 = arith.constant 0.000000e+00 : f32
      %75 = vector.shape_cast %6 : vector<1x512xi1> to vector<1x512xi1>
      %76 = vector.broadcast %75 : vector<1x512xi1> to vector<8x512xi1>
      %77 = vector.broadcast %cst_46 : f32 to vector<8x512xf32>
      %78 = arith.select %76, %74, %77 : vector<8x512xi1>, vector<8x512xf32>
      %c5 = arith.constant 5 : index
      %c0_47 = arith.constant 0 : index
      %c0_48 = arith.constant 0 : index
      %79 = vector.load %arg5[%c5, %c0_47, %c0_48] : memref<9x16x8xbf16, #tpu.memory_space<vmem>>, vector<1x16x8xbf16>
      %80 = vector.shape_cast %79 : vector<1x16x8xbf16> to vector<16x8xbf16>
      %81 = arith.truncf %78 : vector<8x512xf32> to vector<8x512xbf16>
      %cst_49 = arith.constant dense<0.000000e+00> : vector<16x512xf32>
      %82 = tpu.matmul %80, %81, %cst_49 {dimension_numbers = #tpu.dot_dimension_numbers<[1], [0], [0], [1], [0, 0, 1, 1], [], []>} : vector<16x8xbf16>, vector<8x512xbf16>, vector<16x512xf32> -> vector<16x512xf32>
      %83 = arith.addf %73, %82 : vector<16x512xf32>
      %c1_i32_50 = arith.constant 1 : i32
      %84 = tpu.dynamic_rotate %32 by %c1_i32_50 dim 1 : vector<8x512xf32>, i32 -> vector<8x512xf32>
      %cst_51 = arith.constant 0.000000e+00 : f32
      %85 = vector.shape_cast %4 : vector<1x512xi1> to vector<1x512xi1>
      %86 = vector.broadcast %85 : vector<1x512xi1> to vector<8x512xi1>
      %87 = vector.broadcast %cst_51 : f32 to vector<8x512xf32>
      %88 = arith.select %86, %84, %87 : vector<8x512xi1>, vector<8x512xf32>
      %c6 = arith.constant 6 : index
      %c0_52 = arith.constant 0 : index
      %c0_53 = arith.constant 0 : index
      %89 = vector.load %arg5[%c6, %c0_52, %c0_53] : memref<9x16x8xbf16, #tpu.memory_space<vmem>>, vector<1x16x8xbf16>
      %90 = vector.shape_cast %89 : vector<1x16x8xbf16> to vector<16x8xbf16>
      %91 = arith.truncf %88 : vector<8x512xf32> to vector<8x512xbf16>
      %cst_54 = arith.constant dense<0.000000e+00> : vector<16x512xf32>
      %92 = tpu.matmul %90, %91, %cst_54 {dimension_numbers = #tpu.dot_dimension_numbers<[1], [0], [0], [1], [0, 0, 1, 1], [], []>} : vector<16x8xbf16>, vector<8x512xbf16>, vector<16x512xf32> -> vector<16x512xf32>
      %93 = arith.addf %83, %92 : vector<16x512xf32>
      %c7 = arith.constant 7 : index
      %c0_55 = arith.constant 0 : index
      %c0_56 = arith.constant 0 : index
      %94 = vector.load %arg5[%c7, %c0_55, %c0_56] : memref<9x16x8xbf16, #tpu.memory_space<vmem>>, vector<1x16x8xbf16>
      %95 = vector.shape_cast %94 : vector<1x16x8xbf16> to vector<16x8xbf16>
      %96 = arith.truncf %32 : vector<8x512xf32> to vector<8x512xbf16>
      %cst_57 = arith.constant dense<0.000000e+00> : vector<16x512xf32>
      %97 = tpu.matmul %95, %96, %cst_57 {dimension_numbers = #tpu.dot_dimension_numbers<[1], [0], [0], [1], [0, 0, 1, 1], [], []>} : vector<16x8xbf16>, vector<8x512xbf16>, vector<16x512xf32> -> vector<16x512xf32>
      %98 = arith.addf %93, %97 : vector<16x512xf32>
      %c511_i32_58 = arith.constant 511 : i32
      %99 = tpu.dynamic_rotate %32 by %c511_i32_58 dim 1 : vector<8x512xf32>, i32 -> vector<8x512xf32>
      %cst_59 = arith.constant 0.000000e+00 : f32
      %100 = vector.shape_cast %6 : vector<1x512xi1> to vector<1x512xi1>
      %101 = vector.broadcast %100 : vector<1x512xi1> to vector<8x512xi1>
      %102 = vector.broadcast %cst_59 : f32 to vector<8x512xf32>
      %103 = arith.select %101, %99, %102 : vector<8x512xi1>, vector<8x512xf32>
      %c8 = arith.constant 8 : index
      %c0_60 = arith.constant 0 : index
      %c0_61 = arith.constant 0 : index
      %104 = vector.load %arg5[%c8, %c0_60, %c0_61] : memref<9x16x8xbf16, #tpu.memory_space<vmem>>, vector<1x16x8xbf16>
      %105 = vector.shape_cast %104 : vector<1x16x8xbf16> to vector<16x8xbf16>
      %106 = arith.truncf %103 : vector<8x512xf32> to vector<8x512xbf16>
      %cst_62 = arith.constant dense<0.000000e+00> : vector<16x512xf32>
      %107 = tpu.matmul %105, %106, %cst_62 {dimension_numbers = #tpu.dot_dimension_numbers<[1], [0], [0], [1], [0, 0, 1, 1], [], []>} : vector<16x8xbf16>, vector<8x512xbf16>, vector<16x512xf32> -> vector<16x512xf32>
      %108 = arith.addf %98, %107 : vector<16x512xf32>
      %c0_63 = arith.constant 0 : index
      %c0_64 = arith.constant 0 : index
      %109 = vector.load %arg6[%c0_63, %c0_64] : memref<16x1xf32, #tpu.memory_space<vmem>>, vector<16x1xf32>
      %110 = vector.broadcast %109 : vector<16x1xf32> to vector<16x512xf32>
      %111 = arith.addf %108, %110 : vector<16x512xf32>
      %cst_65 = arith.constant 0.000000e+00 : f32
      %112 = vector.broadcast %cst_65 : f32 to vector<16x512xf32>
      %113 = arith.maximumf %111, %112 : vector<16x512xf32>
      %c128_i32_66 = arith.constant 128 : i32
      %114 = arith.addi %20, %c128_i32_66 : i32
      %115 = tpu.assume_multiple %114, 128 : i32
      %c0_67 = arith.constant 0 : index
      %116 = arith.index_cast %115 : i32 to index
      %117 = vector.load %arg12[%c0_67, %116] : memref<16x8448xf32, #tpu.memory_space<vmem>>, vector<16x512xf32>
      tpu.vector_store %arg12[%c0_67, %116], %113 {strides = array<i32>} : memref<16x8448xf32, #tpu.memory_space<vmem>>, vector<16x512xf32>,
    }
    %c16_i32_12 = arith.constant 16 : i32
    %c0_i32_13 = arith.constant 0 : i32
    %c16_i32_14 = arith.constant 16 : i32
    %18 = arith.addi %c0_i32_13, %c16_i32_14 : i32
    %c1_i32_15 = arith.constant 1 : i32
    scf.for %arg13 = %c0_i32_13 to %18 step %c1_i32_15  : i32 {
      %c512_i32 = arith.constant 512 : i32
      %19 = arith.muli %arg13, %c512_i32 : i32
      %20 = tpu.assume_multiple %19, 512 : i32
      %c0_i32_17 = arith.constant 0 : i32
      %21 = arith.addi %20, %c0_i32_17 : i32
      %22 = tpu.assume_multiple %21, 128 : i32
      %c0_18 = arith.constant 0 : index
      %23 = arith.index_cast %22 : i32 to index
      %24 = vector.load %arg12[%c0_18, %23] : memref<16x8448xf32, #tpu.memory_space<vmem>>, vector<16x512xf32>
      %c128_i32 = arith.constant 128 : i32
      %25 = arith.addi %20, %c128_i32 : i32
      %26 = tpu.assume_multiple %25, 128 : i32
      %c0_19 = arith.constant 0 : index
      %27 = arith.index_cast %26 : i32 to index
      %28 = vector.load %arg12[%c0_19, %27] : memref<16x8448xf32, #tpu.memory_space<vmem>>, vector<16x512xf32>
      %c256_i32 = arith.constant 256 : i32
      %29 = arith.addi %20, %c256_i32 : i32
      %30 = tpu.assume_multiple %29, 128 : i32
      %c0_20 = arith.constant 0 : index
      %31 = arith.index_cast %30 : i32 to index
      %32 = vector.load %arg12[%c0_20, %31] : memref<16x8448xf32, #tpu.memory_space<vmem>>, vector<16x512xf32>
      %cst_21 = arith.constant 0.000000e+00 : f32
      %33 = vector.broadcast %cst_21 : f32 to vector<32x512xf32>
      %c1_i32_22 = arith.constant 1 : i32
      %34 = tpu.dynamic_rotate %24 by %c1_i32_22 dim 1 : vector<16x512xf32>, i32 -> vector<16x512xf32>
      %cst_23 = arith.constant 0.000000e+00 : f32
      %35 = vector.shape_cast %4 : vector<1x512xi1> to vector<1x512xi1>
      %36 = vector.broadcast %35 : vector<1x512xi1> to vector<16x512xi1>
      %37 = vector.broadcast %cst_23 : f32 to vector<16x512xf32>
      %38 = arith.select %36, %34, %37 : vector<16x512xi1>, vector<16x512xf32>
      %c0_24 = arith.constant 0 : index
      %c0_25 = arith.constant 0 : index
      %c0_26 = arith.constant 0 : index
      %39 = vector.load %arg7[%c0_24, %c0_25, %c0_26] : memref<9x32x16xbf16, #tpu.memory_space<vmem>>, vector<1x32x16xbf16>
      %40 = vector.shape_cast %39 : vector<1x32x16xbf16> to vector<32x16xbf16>
      %41 = arith.truncf %38 : vector<16x512xf32> to vector<16x512xbf16>
      %cst_27 = arith.constant dense<0.000000e+00> : vector<32x512xf32>
      %42 = tpu.matmul %40, %41, %cst_27 {dimension_numbers = #tpu.dot_dimension_numbers<[1], [0], [0], [1], [0, 0, 1, 1], [], []>} : vector<32x16xbf16>, vector<16x512xbf16>, vector<32x512xf32> -> vector<32x512xf32>
      %43 = arith.addf %33, %42 : vector<32x512xf32>
      %c1_28 = arith.constant 1 : index
      %c0_29 = arith.constant 0 : index
      %c0_30 = arith.constant 0 : index
      %44 = vector.load %arg7[%c1_28, %c0_29, %c0_30] : memref<9x32x16xbf16, #tpu.memory_space<vmem>>, vector<1x32x16xbf16>
      %45 = vector.shape_cast %44 : vector<1x32x16xbf16> to vector<32x16xbf16>
      %46 = arith.truncf %24 : vector<16x512xf32> to vector<16x512xbf16>
      %cst_31 = arith.constant dense<0.000000e+00> : vector<32x512xf32>
      %47 = tpu.matmul %45, %46, %cst_31 {dimension_numbers = #tpu.dot_dimension_numbers<[1], [0], [0], [1], [0, 0, 1, 1], [], []>} : vector<32x16xbf16>, vector<16x512xbf16>, vector<32x512xf32> -> vector<32x512xf32>
      %48 = arith.addf %43, %47 : vector<32x512xf32>
      %c511_i32 = arith.constant 511 : i32
      %49 = tpu.dynamic_rotate %24 by %c511_i32 dim 1 : vector<16x512xf32>, i32 -> vector<16x512xf32>
      %cst_32 = arith.constant 0.000000e+00 : f32
      %50 = vector.shape_cast %6 : vector<1x512xi1> to vector<1x512xi1>
      %51 = vector.broadcast %50 : vector<1x512xi1> to vector<16x512xi1>
      %52 = vector.broadcast %cst_32 : f32 to vector<16x512xf32>
      %53 = arith.select %51, %49, %52 : vector<16x512xi1>, vector<16x512xf32>
      %c2_33 = arith.constant 2 : index
      %c0_34 = arith.constant 0 : index
      %c0_35 = arith.constant 0 : index
      %54 = vector.load %arg7[%c2_33, %c0_34, %c0_35] : memref<9x32x16xbf16, #tpu.memory_space<vmem>>, vector<1x32x16xbf16>
      %55 = vector.shape_cast %54 : vector<1x32x16xbf16> to vector<32x16xbf16>
      %56 = arith.truncf %53 : vector<16x512xf32> to vector<16x512xbf16>
      %cst_36 = arith.constant dense<0.000000e+00> : vector<32x512xf32>
      %57 = tpu.matmul %55, %56, %cst_36 {dimension_numbers = #tpu.dot_dimension_numbers<[1], [0], [0], [1], [0, 0, 1, 1], [], []>} : vector<32x16xbf16>, vector<16x512xbf16>, vector<32x512xf32> -> vector<32x512xf32>
      %58 = arith.addf %48, %57 : vector<32x512xf32>
      %c1_i32_37 = arith.constant 1 : i32
      %59 = tpu.dynamic_rotate %28 by %c1_i32_37 dim 1 : vector<16x512xf32>, i32 -> vector<16x512xf32>
      %cst_38 = arith.constant 0.000000e+00 : f32
      %60 = vector.shape_cast %4 : vector<1x512xi1> to vector<1x512xi1>
      %61 = vector.broadcast %60 : vector<1x512xi1> to vector<16x512xi1>
      %62 = vector.broadcast %cst_38 : f32 to vector<16x512xf32>
      %63 = arith.select %61, %59, %62 : vector<16x512xi1>, vector<16x512xf32>
      %c3 = arith.constant 3 : index
      %c0_39 = arith.constant 0 : index
      %c0_40 = arith.constant 0 : index
      %64 = vector.load %arg7[%c3, %c0_39, %c0_40] : memref<9x32x16xbf16, #tpu.memory_space<vmem>>, vector<1x32x16xbf16>
      %65 = vector.shape_cast %64 : vector<1x32x16xbf16> to vector<32x16xbf16>
      %66 = arith.truncf %63 : vector<16x512xf32> to vector<16x512xbf16>
      %cst_41 = arith.constant dense<0.000000e+00> : vector<32x512xf32>
      %67 = tpu.matmul %65, %66, %cst_41 {dimension_numbers = #tpu.dot_dimension_numbers<[1], [0], [0], [1], [0, 0, 1, 1], [], []>} : vector<32x16xbf16>, vector<16x512xbf16>, vector<32x512xf32> -> vector<32x512xf32>
      %68 = arith.addf %58, %67 : vector<32x512xf32>
      %c4 = arith.constant 4 : index
      %c0_42 = arith.constant 0 : index
      %c0_43 = arith.constant 0 : index
      %69 = vector.load %arg7[%c4, %c0_42, %c0_43] : memref<9x32x16xbf16, #tpu.memory_space<vmem>>, vector<1x32x16xbf16>
      %70 = vector.shape_cast %69 : vector<1x32x16xbf16> to vector<32x16xbf16>
      %71 = arith.truncf %28 : vector<16x512xf32> to vector<16x512xbf16>
      %cst_44 = arith.constant dense<0.000000e+00> : vector<32x512xf32>
      %72 = tpu.matmul %70, %71, %cst_44 {dimension_numbers = #tpu.dot_dimension_numbers<[1], [0], [0], [1], [0, 0, 1, 1], [], []>} : vector<32x16xbf16>, vector<16x512xbf16>, vector<32x512xf32> -> vector<32x512xf32>
      %73 = arith.addf %68, %72 : vector<32x512xf32>
      %c511_i32_45 = arith.constant 511 : i32
      %74 = tpu.dynamic_rotate %28 by %c511_i32_45 dim 1 : vector<16x512xf32>, i32 -> vector<16x512xf32>
      %cst_46 = arith.constant 0.000000e+00 : f32
      %75 = vector.shape_cast %6 : vector<1x512xi1> to vector<1x512xi1>
      %76 = vector.broadcast %75 : vector<1x512xi1> to vector<16x512xi1>
      %77 = vector.broadcast %cst_46 : f32 to vector<16x512xf32>
      %78 = arith.select %76, %74, %77 : vector<16x512xi1>, vector<16x512xf32>
      %c5 = arith.constant 5 : index
      %c0_47 = arith.constant 0 : index
      %c0_48 = arith.constant 0 : index
      %79 = vector.load %arg7[%c5, %c0_47, %c0_48] : memref<9x32x16xbf16, #tpu.memory_space<vmem>>, vector<1x32x16xbf16>
      %80 = vector.shape_cast %79 : vector<1x32x16xbf16> to vector<32x16xbf16>
      %81 = arith.truncf %78 : vector<16x512xf32> to vector<16x512xbf16>
      %cst_49 = arith.constant dense<0.000000e+00> : vector<32x512xf32>
      %82 = tpu.matmul %80, %81, %cst_49 {dimension_numbers = #tpu.dot_dimension_numbers<[1], [0], [0], [1], [0, 0, 1, 1], [], []>} : vector<32x16xbf16>, vector<16x512xbf16>, vector<32x512xf32> -> vector<32x512xf32>
      %83 = arith.addf %73, %82 : vector<32x512xf32>
      %c1_i32_50 = arith.constant 1 : i32
      %84 = tpu.dynamic_rotate %32 by %c1_i32_50 dim 1 : vector<16x512xf32>, i32 -> vector<16x512xf32>
      %cst_51 = arith.constant 0.000000e+00 : f32
      %85 = vector.shape_cast %4 : vector<1x512xi1> to vector<1x512xi1>
      %86 = vector.broadcast %85 : vector<1x512xi1> to vector<16x512xi1>
      %87 = vector.broadcast %cst_51 : f32 to vector<16x512xf32>
      %88 = arith.select %86, %84, %87 : vector<16x512xi1>, vector<16x512xf32>
      %c6 = arith.constant 6 : index
      %c0_52 = arith.constant 0 : index
      %c0_53 = arith.constant 0 : index
      %89 = vector.load %arg7[%c6, %c0_52, %c0_53] : memref<9x32x16xbf16, #tpu.memory_space<vmem>>, vector<1x32x16xbf16>
      %90 = vector.shape_cast %89 : vector<1x32x16xbf16> to vector<32x16xbf16>
      %91 = arith.truncf %88 : vector<16x512xf32> to vector<16x512xbf16>
      %cst_54 = arith.constant dense<0.000000e+00> : vector<32x512xf32>
      %92 = tpu.matmul %90, %91, %cst_54 {dimension_numbers = #tpu.dot_dimension_numbers<[1], [0], [0], [1], [0, 0, 1, 1], [], []>} : vector<32x16xbf16>, vector<16x512xbf16>, vector<32x512xf32> -> vector<32x512xf32>
      %93 = arith.addf %83, %92 : vector<32x512xf32>
      %c7 = arith.constant 7 : index
      %c0_55 = arith.constant 0 : index
      %c0_56 = arith.constant 0 : index
      %94 = vector.load %arg7[%c7, %c0_55, %c0_56] : memref<9x32x16xbf16, #tpu.memory_space<vmem>>, vector<1x32x16xbf16>
      %95 = vector.shape_cast %94 : vector<1x32x16xbf16> to vector<32x16xbf16>
      %96 = arith.truncf %32 : vector<16x512xf32> to vector<16x512xbf16>
      %cst_57 = arith.constant dense<0.000000e+00> : vector<32x512xf32>
      %97 = tpu.matmul %95, %96, %cst_57 {dimension_numbers = #tpu.dot_dimension_numbers<[1], [0], [0], [1], [0, 0, 1, 1], [], []>} : vector<32x16xbf16>, vector<16x512xbf16>, vector<32x512xf32> -> vector<32x512xf32>
      %98 = arith.addf %93, %97 : vector<32x512xf32>
      %c511_i32_58 = arith.constant 511 : i32
      %99 = tpu.dynamic_rotate %32 by %c511_i32_58 dim 1 : vector<16x512xf32>, i32 -> vector<16x512xf32>
      %cst_59 = arith.constant 0.000000e+00 : f32
      %100 = vector.shape_cast %6 : vector<1x512xi1> to vector<1x512xi1>
      %101 = vector.broadcast %100 : vector<1x512xi1> to vector<16x512xi1>
      %102 = vector.broadcast %cst_59 : f32 to vector<16x512xf32>
      %103 = arith.select %101, %99, %102 : vector<16x512xi1>, vector<16x512xf32>
      %c8 = arith.constant 8 : index
      %c0_60 = arith.constant 0 : index
      %c0_61 = arith.constant 0 : index
      %104 = vector.load %arg7[%c8, %c0_60, %c0_61] : memref<9x32x16xbf16, #tpu.memory_space<vmem>>, vector<1x32x16xbf16>
      %105 = vector.shape_cast %104 : vector<1x32x16xbf16> to vector<32x16xbf16>
      %106 = arith.truncf %103 : vector<16x512xf32> to vector<16x512xbf16>
      %cst_62 = arith.constant dense<0.000000e+00> : vector<32x512xf32>
      %107 = tpu.matmul %105, %106, %cst_62 {dimension_numbers = #tpu.dot_dimension_numbers<[1], [0], [0], [1], [0, 0, 1, 1], [], []>} : vector<32x16xbf16>, vector<16x512xbf16>, vector<32x512xf32> -> vector<32x512xf32>
      %108 = arith.addf %98, %107 : vector<32x512xf32>
      %c0_63 = arith.constant 0 : index
      %c0_64 = arith.constant 0 : index
      %109 = vector.load %arg8[%c0_63, %c0_64] : memref<32x1xf32, #tpu.memory_space<vmem>>, vector<32x1xf32>
      %110 = vector.broadcast %109 : vector<32x1xf32> to vector<32x512xf32>
      %111 = arith.addf %108, %110 : vector<32x512xf32>
      %cst_65 = arith.constant 0.000000e+00 : f32
      %112 = vector.broadcast %cst_65 : f32 to vector<32x512xf32>
      %113 = arith.maximumf %111, %112 : vector<32x512xf32>
      %c0_66 = arith.constant 0 : index
      %114 = arith.index_cast %20 : i32 to index
      %115 = vector.load %arg10[%c0_66, %114] : memref<32x8192xf32, #tpu.memory_space<vmem>>, vector<32x512xf32>
      tpu.vector_store %arg10[%c0_66, %114], %113 {strides = array<i32>} : memref<32x8192xf32, #tpu.memory_space<vmem>>, vector<32x512xf32>,
    }
    %c16_i32_16 = arith.constant 16 : i32
    return
  }
  func.func @transform_0(%arg0: i32) -> i32 {
    %c0_i32 = arith.constant 0 : i32
    %c0_i32_0 = arith.constant 0 : i32
    return %c0_i32 : i32
  }
  func.func @transform_1(%arg0: i32) -> (i32, i32) {
    %c0_i32 = arith.constant 0 : i32
    %c0_i32_0 = arith.constant 0 : i32
    %c0_i32_1 = arith.constant 0 : i32
    return %c0_i32, %c0_i32_0 : i32, i32
  }
  func.func @transform_2(%arg0: i32) -> (i32, i32) {
    %c0_i32 = arith.constant 0 : i32
    %c0_i32_0 = arith.constant 0 : i32
    %c0_i32_1 = arith.constant 0 : i32
    return %c0_i32, %c0_i32_0 : i32, i32
  }
  func.func @transform_3(%arg0: i32) -> (i32, i32) {
    %c0_i32 = arith.constant 0 : i32
    %c0_i32_0 = arith.constant 0 : i32
    %c0_i32_1 = arith.constant 0 : i32
    return %c0_i32, %c0_i32_0 : i32, i32
  }
  func.func @transform_4(%arg0: i32) -> (i32, i32, i32) {
    %c0_i32 = arith.constant 0 : i32
    %c0_i32_0 = arith.constant 0 : i32
    %c0_i32_1 = arith.constant 0 : i32
    %c0_i32_2 = arith.constant 0 : i32
    return %c0_i32, %c0_i32_0, %c0_i32_1 : i32, i32, i32
  }
  func.func @transform_5(%arg0: i32) -> (i32, i32) {
    %c0_i32 = arith.constant 0 : i32
    %c0_i32_0 = arith.constant 0 : i32
    %c0_i32_1 = arith.constant 0 : i32
    return %c0_i32, %c0_i32_0 : i32, i32
  }
  func.func @transform_6(%arg0: i32) -> (i32, i32, i32) {
    %c0_i32 = arith.constant 0 : i32
    %c0_i32_0 = arith.constant 0 : i32
    %c0_i32_1 = arith.constant 0 : i32
    %c0_i32_2 = arith.constant 0 : i32
    return %c0_i32, %c0_i32_0, %c0_i32_1 : i32, i32, i32
  }
  func.func @transform_7(%arg0: i32) -> (i32, i32) {
    %c0_i32 = arith.constant 0 : i32
    %c0_i32_0 = arith.constant 0 : i32
    %c0_i32_1 = arith.constant 0 : i32
    return %c0_i32, %c0_i32_0 : i32, i32
  }
  func.func @transform_8(%arg0: i32) -> (i32, i32) {
    %c0_i32 = arith.constant 0 : i32
    %c0_i32_0 = arith.constant 0 : i32
    %c0_i32_1 = arith.constant 0 : i32
    return %c0_i32, %c0_i32_0 : i32, i32
  }
  func.func @transform_9(%arg0: i32) -> (i32, i32) {
    %c0_i32 = arith.constant 0 : i32
    %c0_i32_0 = arith.constant 0 : i32
    %c0_i32_1 = arith.constant 0 : i32
    return %c0_i32, %c0_i32_0 : i32, i32
  }
}

</mosaic_0001>

<llo_original>
// kernel: eigm_forward.1
$region0: #{eigm_forward.1}
  #allocation0 [shape = 'u32[]', space=smem, size = 0x4, offset = 0x4, fixed_abs, tag = 'smem constant byte address 0x4 - core index']
  #allocation1 [shape = 'u32[144,128]{1,0:T(1,128)}', space=vmem, size = 0x12000, scoped, tag = 'internal scratch']
  #allocation2 [shape = 'f32[8,8448]{1,0:T(8,128)}', space=vmem, size = 0x42000, scoped, tag = 'scratch operand']
  #allocation3 [shape = 'f32[16,8448]{1,0:T(8,128)}', space=vmem, size = 0x84000, scoped, tag = 'scratch operand']
  %s0 = inlined_call_operand.vmem [shape: f32[3], index: 0, kind: input, shape index: {}]
  %s1 = inlined_call_operand.vmem [shape: f32[3,8192], index: 1, kind: input, shape index: {}]
  %s2 = inlined_call_operand.vmem [shape: f32[1,8448], index: 2, kind: input, shape index: {}]
  %s3 = inlined_call_operand.vmem [shape: f32[4,8448], index: 3, kind: input, shape index: {}]
  %s4 = inlined_call_operand.vmem [shape: bf16[9,16,8], index: 4, kind: input, shape index: {}]
  %s5 = inlined_call_operand.vmem [shape: f32[16,1], index: 5, kind: input, shape index: {}]
  %s6 = inlined_call_operand.vmem [shape: bf16[9,32,16], index: 6, kind: input, shape index: {}]
  %s7 = inlined_call_operand.vmem [shape: f32[32,1], index: 7, kind: input, shape index: {}]
  %s8 = inlined_call_operand.vmem [shape: f32[3,8192], index: 8, kind: output, shape index: {0}]
  %s9 = inlined_call_operand.vmem [shape: f32[32,8192], index: 9, kind: output, shape index: {1}]
  %10 = xla_tuple %s8, %s9
  %s11 = sld [smem:[#allocation0]]
  $region75: #{eigm_forward.1} parent=0
    _
  %s13 = ssub.s32 1, %s11
  %s14 = scalar_select 0, %s13, %s11
  $region1: #{eigm_forward.1} parent=0
    #allocation4 [shape = 'u8[512]{0}', space=smem, size = 0x200, scoped, tag = 'input window, operand 0, single buffered']
    #allocation5 [shape = 's32[1]{0}', space=sflag, size = 0x4, scoped, tag = 'scoped memory for eigm_forward.1']
    %15 = vsyncpa [#allocation5], 0
    // Predicated region
    $region2: #{eigm_forward.1} parent=1 // pred_check
      _
    $region3: #{eigm_forward.1} parent=1 // pred_check_branch
      %17 = sbr.rel (0) target = $region5
    $region4: #{eigm_forward.1} parent=1 // pred_region
      %s19 = ssub.s32 16, 16
      %20 = vsyncadd [#allocation5], %s19
      %s22 = sshll.u32 %s0, 4
      %s23 = int_to_ptr.vmem [resolvable:$true] %s22
      %25 = dma.vmem_to_smem %s23, 16, [#allocation4], [#allocation5]
    $region5: #{eigm_forward.1} parent=1 // pred_fallthru
      _
    // Predicated region
    $region6: #{eigm_forward.1} parent=1 // pred_check
      _
    $region7: #{eigm_forward.1} parent=1 // pred_check_branch
      %27 = sbr.rel (0) target = $region9
    $region8: #{eigm_forward.1} parent=1 // pred_region
      _
    $region9: #{eigm_forward.1} parent=1 // pred_fallthru
      _
    // Predicated region
    $region10: #{eigm_forward.1} parent=1 // pred_check
      _
    $region11: #{eigm_forward.1} parent=1 // pred_check_branch
      %29 = sbr.rel (0) target = $region13
    $region12: #{eigm_forward.1} parent=1 // pred_region
      _
    $region13: #{eigm_forward.1} parent=1 // pred_fallthru
      _
    // Predicated region
    $region14: #{eigm_forward.1} parent=1 // pred_check
      _
    $region15: #{eigm_forward.1} parent=1 // pred_check_branch
      %31 = sbr.rel (0) target = $region17
    $region16: #{eigm_forward.1} parent=1 // pred_region
      _
    $region17: #{eigm_forward.1} parent=1 // pred_fallthru
      _
    // Predicated region
    $region18: #{eigm_forward.1} parent=1 // pred_check
      _
    $region19: #{eigm_forward.1} parent=1 // pred_check_branch
      %33 = sbr.rel (0) target = $region21
    $region20: #{eigm_forward.1} parent=1 // pred_region
      _
    $region21: #{eigm_forward.1} parent=1 // pred_fallthru
      _
    // Predicated region
    $region22: #{eigm_forward.1} parent=1 // pred_check
      _
    $region23: #{eigm_forward.1} parent=1 // pred_check_branch
      %35 = sbr.rel (0) target = $region25
    $region24: #{eigm_forward.1} parent=1 // pred_region
      _
    $region25: #{eigm_forward.1} parent=1 // pred_fallthru
      _
    // Predicated region
    $region26: #{eigm_forward.1} parent=1 // pred_check
      _
    $region27: #{eigm_forward.1} parent=1 // pred_check_branch
      %37 = sbr.rel (0) target = $region29
    $region28: #{eigm_forward.1} parent=1 // pred_region
      _
    $region29: #{eigm_forward.1} parent=1 // pred_fallthru
      _
    // Predicated region
    $region30: #{eigm_forward.1} parent=1 // pred_check
      _
    $region31: #{eigm_forward.1} parent=1 // pred_check_branch
      %39 = sbr.rel (0) target = $region33
    $region32: #{eigm_forward.1} parent=1 // pred_region
      _
    $region33: #{eigm_forward.1} parent=1 // pred_fallthru
      _
    // Predicated region
    $region34: #{eigm_forward.1} parent=1 // pred_check
      _
    $region35: #{eigm_forward.1} parent=1 // pred_check_branch
      %41 = sbr.rel (0) target = $region37
    $region36: #{eigm_forward.1} parent=1 // pred_region
      %42 = dma.done [#allocation5], 16
    $region37: #{eigm_forward.1} parent=1 // pred_fallthru
      _
    %43 = sfence
    %v45 = vlaneseq
    %v46 = vand.u32 %v45, 127
    %v47 = vadd.s32 %v46, 128
    %v48 = vadd.s32 %v46, 256
    %v49 = vadd.s32 %v46, 384
    %v50 = vand.u32 %v46, 127
    %v51 = vand.u32 %v47, 127
    %v52 = vand.u32 %v48, 127
    %v53 = vand.u32 %v49, 127
    %vm54 = vcmp.ge.s32.totalorder %v50, 1
    %vm55 = vcmp.ge.s32.totalorder %v51, 1
    %vm56 = vcmp.ge.s32.totalorder %v52, 1
    %vm57 = vcmp.ge.s32.totalorder %v53, 1
    %vm58 = vcmp.le.s32.totalorder %v50, 126
    %vm59 = vcmp.le.s32.totalorder %v51, 126
    %vm60 = vcmp.le.s32.totalorder %v52, 126
    %vm61 = vcmp.le.s32.totalorder %v53, 126
    %62 = vst [vmem:[#allocation2] sm:$0xff] 0.0
    %63 = vst [vmem:[#allocation2 + $0x8] sm:$0xff] 0.0
    %64 = vst [vmem:[#allocation2 + $0x10] sm:$0xff] 0.0
    %65 = vst [vmem:[#allocation2 + $0x18] sm:$0xff] 0.0
    %66 = vst [vmem:[#allocation2 + $0x20] sm:$0xff] 0.0
    %67 = vst [vmem:[#allocation2 + $0x28] sm:$0xff] 0.0
    %68 = vst [vmem:[#allocation2 + $0x30] sm:$0xff] 0.0
    %69 = vst [vmem:[#allocation2 + $0x38] sm:$0xff] 0.0
    %70 = vst [vmem:[#allocation2 + $0x40] sm:$0xff] 0.0
    %71 = vst [vmem:[#allocation2 + $0x48] sm:$0xff] 0.0
    %72 = vst [vmem:[#allocation2 + $0x50] sm:$0xff] 0.0
    %73 = vst [vmem:[#allocation2 + $0x58] sm:$0xff] 0.0
    %74 = vst [vmem:[#allocation2 + $0x60] sm:$0xff] 0.0
    %75 = vst [vmem:[#allocation2 + $0x68] sm:$0xff] 0.0
    %76 = vst [vmem:[#allocation2 + $0x70] sm:$0xff] 0.0
    %77 = vst [vmem:[#allocation2 + $0x78] sm:$0xff] 0.0
    %78 = vst [vmem:[#allocation2 + $0x80] sm:$0xff] 0.0
    %79 = vst [vmem:[#allocation2 + $0x88] sm:$0xff] 0.0
    %80 = vst [vmem:[#allocation2 + $0x90] sm:$0xff] 0.0
    %81 = vst [vmem:[#allocation2 + $0x98] sm:$0xff] 0.0
    %82 = vst [vmem:[#allocation2 + $0xa0] sm:$0xff] 0.0
    %83 = vst [vmem:[#allocation2 + $0xa8] sm:$0xff] 0.0
    %84 = vst [vmem:[#allocation2 + $0xb0] sm:$0xff] 0.0
    %85 = vst [vmem:[#allocation2 + $0xb8] sm:$0xff] 0.0
    %86 = vst [vmem:[#allocation2 + $0xc0] sm:$0xff] 0.0
    %87 = vst [vmem:[#allocation2 + $0xc8] sm:$0xff] 0.0
    %88 = vst [vmem:[#allocation2 + $0xd0] sm:$0xff] 0.0
    %89 = vst [vmem:[#allocation2 + $0xd8] sm:$0xff] 0.0
    %90 = vst [vmem:[#allocation2 + $0xe0] sm:$0xff] 0.0
    %91 = vst [vmem:[#allocation2 + $0xe8] sm:$0xff] 0.0
    %92 = vst [vmem:[#allocation2 + $0xf0] sm:$0xff] 0.0
    %93 = vst [vmem:[#allocation2 + $0xf8] sm:$0xff] 0.0
    %94 = vst [vmem:[#allocation2 + $0x100] sm:$0xff] 0.0
    %95 = vst [vmem:[#allocation2 + $0x108] sm:$0xff] 0.0
    %96 = vst [vmem:[#allocation2 + $0x110] sm:$0xff] 0.0
    %97 = vst [vmem:[#allocation2 + $0x118] sm:$0xff] 0.0
    %98 = vst [vmem:[#allocation2 + $0x120] sm:$0xff] 0.0
    %99 = vst [vmem:[#allocation2 + $0x128] sm:$0xff] 0.0
    %100 = vst [vmem:[#allocation2 + $0x130] sm:$0xff] 0.0
    %101 = vst [vmem:[#allocation2 + $0x138] sm:$0xff] 0.0
    %102 = vst [vmem:[#allocation2 + $0x140] sm:$0xff] 0.0
    %103 = vst [vmem:[#allocation2 + $0x148] sm:$0xff] 0.0
    %104 = vst [vmem:[#allocation2 + $0x150] sm:$0xff] 0.0
    %105 = vst [vmem:[#allocation2 + $0x158] sm:$0xff] 0.0
    %106 = vst [vmem:[#allocation2 + $0x160] sm:$0xff] 0.0
    %107 = vst [vmem:[#allocation2 + $0x168] sm:$0xff] 0.0
    %108 = vst [vmem:[#allocation2 + $0x170] sm:$0xff] 0.0
    %109 = vst [vmem:[#allocation2 + $0x178] sm:$0xff] 0.0
    %110 = vst [vmem:[#allocation2 + $0x180] sm:$0xff] 0.0
    %111 = vst [vmem:[#allocation2 + $0x188] sm:$0xff] 0.0
    %112 = vst [vmem:[#allocation2 + $0x190] sm:$0xff] 0.0
    %113 = vst [vmem:[#allocation2 + $0x198] sm:$0xff] 0.0
    %114 = vst [vmem:[#allocation2 + $0x1a0] sm:$0xff] 0.0
    %115 = vst [vmem:[#allocation2 + $0x1a8] sm:$0xff] 0.0
    %116 = vst [vmem:[#allocation2 + $0x1b0] sm:$0xff] 0.0
    %117 = vst [vmem:[#allocation2 + $0x1b8] sm:$0xff] 0.0
    %118 = vst [vmem:[#allocation2 + $0x1c0] sm:$0xff] 0.0
    %119 = vst [vmem:[#allocation2 + $0x1c8] sm:$0xff] 0.0
    %120 = vst [vmem:[#allocation2 + $0x1d0] sm:$0xff] 0.0
    %121 = vst [vmem:[#allocation2 + $0x1d8] sm:$0xff] 0.0
    %122 = vst [vmem:[#allocation2 + $0x1e0] sm:$0xff] 0.0
    %123 = vst [vmem:[#allocation2 + $0x1e8] sm:$0xff] 0.0
    %124 = vst [vmem:[#allocation2 + $0x1f0] sm:$0xff] 0.0
    %125 = vst [vmem:[#allocation2 + $0x1f8] sm:$0xff] 0.0
    %126 = vst [vmem:[#allocation2 + $0x200] sm:$0xff] 0.0
    %127 = vst [vmem:[#allocation2 + $0x208] sm:$0xff] 0.0
    %128 = vst [vmem:[#allocation3] sm:$0xff] 0.0
    %129 = vst [vmem:[#allocation3 + $0x210] sm:$0xff] 0.0
    %130 = vst [vmem:[#allocation3 + $0x208] sm:$0xff] 0.0
    %131 = vst [vmem:[#allocation3 + $0x418] sm:$0xff] 0.0
    %s132 = sld [smem:[#allocation4]]
    %s133 = sld [smem:[#allocation4 + $0x1]]
    %s134 = sld [smem:[#allocation4 + $0x2]]
    loop: start=0, step=1, limit=16
    $region38: #{eigm_forward.1} parent=1 // loop_pre_header
      _
    $region39: #{eigm_forward.1} parent=1 // loop_header
      %s136 = sphi 0, %s140
      %p137 = scmp.ge.s32.totalorder %s136, 16
    $region40: #{eigm_forward.1} parent=1 // loop_header_branch
      %139 = sbr.rel (%p137) target = $region44
    $region41: #{eigm_forward.1} parent=1 // loop_body
      %s141 = smul.u32 %s136, 512
      %s142 = sshra.s32 %s141, 7
      %s143 = sand.u32 %s141, 127
      %s144 = scalar_lea.vmem %s2, %s142
      %v145 = vld [vmem:[%s144] sm:$0xf]
      %s146 = sadd.s32 %s141, 128
      %s147 = sshra.s32 %s146, 7
      %s148 = sand.u32 %s146, 127
      %s149 = scalar_lea.vmem %s2, %s147
      %v150 = vld [vmem:[%s149] sm:$0xf]
      %s151 = sadd.s32 %s141, 256
      %s152 = sshra.s32 %s151, 7
      %s153 = sand.u32 %s151, 127
      %s154 = scalar_lea.vmem %s2, %s152
      %v155 = vld [vmem:[%s154] sm:$0xf]
      %s156 = smul.addr %s142, 4
      %s157 = scalar_lea.vmem %s3, %s156
      %v158 = vld [vmem:[%s157] sm:$0xff]
      %v159 = vld [vmem:[%s157 + $0x8] sm:$0xff]
      %s160 = smul.addr %s147, 4
      %s161 = scalar_lea.vmem %s3, %s160
      %v162 = vld [vmem:[%s161] sm:$0xff]
      %v163 = vld [vmem:[%s161 + $0x8] sm:$0xff]
      %s164 = smul.addr %s152, 4
      %s165 = scalar_lea.vmem %s3, %s164
      %v166 = vld [vmem:[%s165] sm:$0xff]
      %v167 = vld [vmem:[%s165 + $0x8] sm:$0xff]
      %v169 = vlaneseq
      %v170 = vshrl.u32 %v169, 7
      %v171 = vsub.s32 0, %v170
      %v172 = vrot.slane %v145, %v171
      %v173 = vlaneseq
      %v174 = vshrl.u32 %v173, 7
      %v175 = vsub.s32 1, %v174
      %v176 = vrot.slane %v145, %v175
      %v177 = vlaneseq
      %v178 = vshrl.u32 %v177, 7
      %v179 = vsub.s32 2, %v178
      %v180 = vrot.slane %v145, %v179
      %v181 = vlaneseq
      %v182 = vshrl.u32 %v181, 7
      %v183 = vsub.s32 3, %v182
      %v184 = vrot.slane %v145, %v183
      %189 = vrot.lane.b32.xlu0 %v172, 1
      %v190 = vpop.permute.xlu0 %189
      %191 = vrot.lane.b32.xlu0 %v176, 1
      %v192 = vpop.permute.xlu0 %191
      %193 = vrot.lane.b32.xlu0 %v180, 1
      %v194 = vpop.permute.xlu0 %193
      %195 = vrot.lane.b32.xlu0 %v184, 1
      %v196 = vpop.permute.xlu0 %195
      %vm197 = vcmp.lt.s32.totalorder %v46, 1
      %v198 = vsel %vm197, %v194, %v196
      %v199 = vsel %vm197, %v192, %v194
      %v200 = vsel %vm197, %v190, %v192
      %v201 = vsel %vm197, %v196, %v190
      %v203 = vlaneseq
      %v204 = vshrl.u32 %v203, 7
      %v205 = vsub.s32 0, %v204
      %v206 = vrot.slane %v150, %v205
      %v207 = vlaneseq
      %v208 = vshrl.u32 %v207, 7
      %v209 = vsub.s32 1, %v208
      %v210 = vrot.slane %v150, %v209
      %v211 = vlaneseq
      %v212 = vshrl.u32 %v211, 7
      %v213 = vsub.s32 2, %v212
      %v214 = vrot.slane %v150, %v213
      %v215 = vlaneseq
      %v216 = vshrl.u32 %v215, 7
      %v217 = vsub.s32 3, %v216
      %v218 = vrot.slane %v150, %v217
      %v223 = vsub.f32 %v201, %v206
      %v224 = vsub.f32 %v200, %v210
      %v225 = vsub.f32 %v199, %v214
      %v226 = vsub.f32 %v198, %v218
      %v227 = vand.u32 2147483647, %v223
      %v228 = vand.u32 2147483647, %v224
      %v229 = vand.u32 2147483647, %v225
      %v230 = vand.u32 2147483647, %v226
      %vm231 = vcmp.lt.f32.partialorder %v227, 1.0
      %vm232 = vcmp.lt.f32.partialorder %v228, 1.0
      %vm233 = vcmp.lt.f32.partialorder %v229, 1.0
      %vm234 = vcmp.lt.f32.partialorder %v230, 1.0
      %vm235 = vmand %vm231, %vm54
      %vm236 = vmand %vm232, %vm55
      %vm237 = vmand %vm233, %vm56
      %vm238 = vmand %vm234, %vm57
      %v241 = vcombine.high %v158, %v158
      %v242 = vcombine.high %v159, %v159
      %245 = vrot.lane.b32.xlu0 %v158, 1
      %v246 = vpop.permute.xlu0 %245
      %247 = vrot.lane.b32.xlu0 %v241, 1
      %v248 = vpop.permute.xlu0 %247
      %249 = vrot.lane.b32.xlu0 %v159, 1
      %v250 = vpop.permute.xlu0 %249
      %251 = vrot.lane.b32.xlu0 %v242, 1
      %v252 = vpop.permute.xlu0 %251
      %v253 = vsel %vm197, %v250, %v252
      %v254 = vsel %vm197, %v248, %v250
      %v255 = vsel %vm197, %v246, %v248
      %v256 = vsel %vm197, %v252, %v246
      %v257 = vsel %vm235, 1, 0
      %v258 = vsel %vm236, 1, 0
      %v259 = vsel %vm237, 1, 0
      %v260 = vsel %vm238, 1, 0
      %v261 = vlaneseq
      %v262 = vshrl.u32 %v261, 7
      %v263 = vsub.s32 0, %v262
      %v264 = vrot.slane %v257, %v263
      %v265 = vlaneseq
      %v266 = vshrl.u32 %v265, 7
      %v267 = vsub.s32 0, %v266
      %v268 = vrot.slane %v258, %v267
      %v269 = vlaneseq
      %v270 = vshrl.u32 %v269, 7
      %v271 = vsub.s32 0, %v270
      %v272 = vrot.slane %v259, %v271
      %v273 = vlaneseq
      %v274 = vshrl.u32 %v273, 7
      %v275 = vsub.s32 0, %v274
      %v276 = vrot.slane %v260, %v275
      %vm277 = vcmp.eq.s32.totalorder %v264, 1
      %vm278 = vcmp.eq.s32.totalorder %v268, 1
      %vm279 = vcmp.eq.s32.totalorder %v272, 1
      %vm280 = vcmp.eq.s32.totalorder %v276, 1
      %v281 = vsel %vm277, %v256, 0.0
      %v282 = vsel %vm278, %v255, 0.0
      %v283 = vsel %vm279, %v254, 0.0
      %v284 = vsel %vm280, %v253, 0.0
      %v285 = vadd.f32 %v281, 0.0
      %v286 = vadd.f32 %v282, 0.0
      %v287 = vadd.f32 %v283, 0.0
      %v288 = vadd.f32 %v284, 0.0
      %v289 = vsub.f32 %v145, %v150
      %v290 = vand.u32 2147483647, %v289
      %vm291 = vcmp.lt.f32.partialorder %v290, 1.0
      %v292 = vsel %vm291, 1, 0
      %v293 = vlaneseq
      %v294 = vshrl.u32 %v293, 7
      %v295 = vsub.s32 0, %v294
      %v296 = vrot.slane %v292, %v295
      %v297 = vlaneseq
      %v298 = vshrl.u32 %v297, 7
      %v299 = vsub.s32 1, %v298
      %v300 = vrot.slane %v292, %v299
      %v301 = vlaneseq
      %v302 = vshrl.u32 %v301, 7
      %v303 = vsub.s32 2, %v302
      %v304 = vrot.slane %v292, %v303
      %v305 = vlaneseq
      %v306 = vshrl.u32 %v305, 7
      %v307 = vsub.s32 3, %v306
      %v308 = vrot.slane %v292, %v307
      %vm309 = vcmp.eq.s32.totalorder %v296, 1
      %vm310 = vcmp.eq.s32.totalorder %v300, 1
      %vm311 = vcmp.eq.s32.totalorder %v304, 1
      %vm312 = vcmp.eq.s32.totalorder %v308, 1
      %v313 = vsel %vm309, %v158, 0.0
      %v314 = vsel %vm310, %v241, 0.0
      %v315 = vsel %vm311, %v159, 0.0
      %v316 = vsel %vm312, %v242, 0.0
      %v317 = vadd.f32 %v285, %v313
      %v318 = vadd.f32 %v286, %v314
      %v319 = vadd.f32 %v287, %v315
      %v320 = vadd.f32 %v288, %v316
      %321 = vrot.lane.b32.xlu0 %v172, 127
      %v322 = vpop.permute.xlu0 %321
      %323 = vrot.lane.b32.xlu0 %v176, 127
      %v324 = vpop.permute.xlu0 %323
      %325 = vrot.lane.b32.xlu0 %v180, 127
      %v326 = vpop.permute.xlu0 %325
      %327 = vrot.lane.b32.xlu0 %v184, 127
      %v328 = vpop.permute.xlu0 %327
      %vm329 = vcmp.lt.s32.totalorder %v46, 127
      %v330 = vsel %vm329, %v326, %v328
      %v331 = vsel %vm329, %v324, %v326
      %v332 = vsel %vm329, %v322, %v324
      %v333 = vsel %vm329, %v328, %v322
      %v334 = vsub.f32 %v332, %v206
      %v335 = vsub.f32 %v331, %v210
      %v336 = vsub.f32 %v330, %v214
      %v337 = vsub.f32 %v333, %v218
      %v338 = vand.u32 2147483647, %v334
      %v339 = vand.u32 2147483647, %v335
      %v340 = vand.u32 2147483647, %v336
      %v341 = vand.u32 2147483647, %v337
      %vm342 = vcmp.lt.f32.partialorder %v338, 1.0
      %vm343 = vcmp.lt.f32.partialorder %v339, 1.0
      %vm344 = vcmp.lt.f32.partialorder %v340, 1.0
      %vm345 = vcmp.lt.f32.partialorder %v341, 1.0
      %vm346 = vmand %vm342, %vm58
      %vm347 = vmand %vm343, %vm59
      %vm348 = vmand %vm344, %vm60
      %vm349 = vmand %vm345, %vm61
      %350 = vrot.lane.b32.xlu0 %v158, 127
      %v351 = vpop.permute.xlu0 %350
      %352 = vrot.lane.b32.xlu0 %v241, 127
      %v353 = vpop.permute.xlu0 %352
      %354 = vrot.lane.b32.xlu0 %v159, 127
      %v355 = vpop.permute.xlu0 %354
      %356 = vrot.lane.b32.xlu0 %v242, 127
      %v357 = vpop.permute.xlu0 %356
      %v358 = vsel %vm329, %v355, %v357
      %v359 = vsel %vm329, %v353, %v355
      %v360 = vsel %vm329, %v351, %v353
      %v361 = vsel %vm329, %v357, %v351
      %v362 = vsel %vm346, 1, 0
      %v363 = vsel %vm347, 1, 0
      %v364 = vsel %vm348, 1, 0
      %v365 = vsel %vm349, 1, 0
      %v366 = vlaneseq
      %v367 = vshrl.u32 %v366, 7
      %v368 = vsub.s32 0, %v367
      %v369 = vrot.slane %v362, %v368
      %v370 = vlaneseq
      %v371 = vshrl.u32 %v370, 7
      %v372 = vsub.s32 0, %v371
      %v373 = vrot.slane %v363, %v372
      %v374 = vlaneseq
      %v375 = vshrl.u32 %v374, 7
      %v376 = vsub.s32 0, %v375
      %v377 = vrot.slane %v364, %v376
      %v378 = vlaneseq
      %v379 = vshrl.u32 %v378, 7
      %v380 = vsub.s32 0, %v379
      %v381 = vrot.slane %v365, %v380
      %vm382 = vcmp.eq.s32.totalorder %v369, 1
      %vm383 = vcmp.eq.s32.totalorder %v373, 1
      %vm384 = vcmp.eq.s32.totalorder %v377, 1
      %vm385 = vcmp.eq.s32.totalorder %v381, 1
      %v386 = vsel %vm382, %v360, 0.0
      %v387 = vsel %vm383, %v359, 0.0
      %v388 = vsel %vm384, %v358, 0.0
      %v389 = vsel %vm385, %v361, 0.0
      %v390 = vadd.f32 %v317, %v386
      %v391 = vadd.f32 %v318, %v387
      %v392 = vadd.f32 %v319, %v388
      %v393 = vadd.f32 %v320, %v389
      %394 = vrot.lane.b32.xlu0 %v206, 1
      %v395 = vpop.permute.xlu0 %394
      %396 = vrot.lane.b32.xlu0 %v210, 1
      %v397 = vpop.permute.xlu0 %396
      %398 = vrot.lane.b32.xlu0 %v214, 1
      %v399 = vpop.permute.xlu0 %398
      %400 = vrot.lane.b32.xlu0 %v218, 1
      %v401 = vpop.permute.xlu0 %400
      %v402 = vsel %vm197, %v399, %v401
      %v403 = vsel %vm197, %v397, %v399
      %v404 = vsel %vm197, %v395, %v397
      %v405 = vsel %vm197, %v401, %v395
      %v406 = vsub.f32 %v405, %v206
      %v407 = vsub.f32 %v404, %v210
      %v408 = vsub.f32 %v403, %v214
      %v409 = vsub.f32 %v402, %v218
      %v410 = vand.u32 2147483647, %v406
      %v411 = vand.u32 2147483647, %v407
      %v412 = vand.u32 2147483647, %v408
      %v413 = vand.u32 2147483647, %v409
      %vm414 = vcmp.lt.f32.partialorder %v410, 1.0
      %vm415 = vcmp.lt.f32.partialorder %v411, 1.0
      %vm416 = vcmp.lt.f32.partialorder %v412, 1.0
      %vm417 = vcmp.lt.f32.partialorder %v413, 1.0
      %vm418 = vmand %vm414, %vm54
      %vm419 = vmand %vm415, %vm55
      %vm420 = vmand %vm416, %vm56
      %vm421 = vmand %vm417, %vm57
      %v424 = vcombine.high %v162, %v162
      %v425 = vcombine.high %v163, %v163
      %428 = vrot.lane.b32.xlu0 %v162, 1
      %v429 = vpop.permute.xlu0 %428
      %430 = vrot.lane.b32.xlu0 %v424, 1
      %v431 = vpop.permute.xlu0 %430
      %432 = vrot.lane.b32.xlu0 %v163, 1
      %v433 = vpop.permute.xlu0 %432
      %434 = vrot.lane.b32.xlu0 %v425, 1
      %v435 = vpop.permute.xlu0 %434
      %v436 = vsel %vm197, %v433, %v435
      %v437 = vsel %vm197, %v431, %v433
      %v438 = vsel %vm197, %v429, %v431
      %v439 = vsel %vm197, %v435, %v429
      %v440 = vsel %vm418, 1, 0
      %v441 = vsel %vm419, 1, 0
      %v442 = vsel %vm420, 1, 0
      %v443 = vsel %vm421, 1, 0
      %v444 = vlaneseq
      %v445 = vshrl.u32 %v444, 7
      %v446 = vsub.s32 0, %v445
      %v447 = vrot.slane %v440, %v446
      %v448 = vlaneseq
      %v449 = vshrl.u32 %v448, 7
      %v450 = vsub.s32 0, %v449
      %v451 = vrot.slane %v441, %v450
      %v452 = vlaneseq
      %v453 = vshrl.u32 %v452, 7
      %v454 = vsub.s32 0, %v453
      %v455 = vrot.slane %v442, %v454
      %v456 = vlaneseq
      %v457 = vshrl.u32 %v456, 7
      %v458 = vsub.s32 0, %v457
      %v459 = vrot.slane %v443, %v458
      %vm460 = vcmp.eq.s32.totalorder %v447, 1
      %vm461 = vcmp.eq.s32.totalorder %v451, 1
      %vm462 = vcmp.eq.s32.totalorder %v455, 1
      %vm463 = vcmp.eq.s32.totalorder %v459, 1
      %v464 = vsel %vm460, %v439, 0.0
      %v465 = vsel %vm461, %v438, 0.0
      %v466 = vsel %vm462, %v437, 0.0
      %v467 = vsel %vm463, %v436, 0.0
      %v468 = vadd.f32 %v390, %v464
      %v469 = vadd.f32 %v391, %v465
      %v470 = vadd.f32 %v392, %v466
      %v471 = vadd.f32 %v393, %v467
      %v472 = vsub.f32 %v150, %v150
      %v473 = vand.u32 2147483647, %v472
      %vm474 = vcmp.lt.f32.partialorder %v473, 1.0
      %v475 = vsel %vm474, 1, 0
      %v476 = vlaneseq
      %v477 = vshrl.u32 %v476, 7
      %v478 = vsub.s32 0, %v477
      %v479 = vrot.slane %v475, %v478
      %v480 = vlaneseq
      %v481 = vshrl.u32 %v480, 7
      %v482 = vsub.s32 1, %v481
      %v483 = vrot.slane %v475, %v482
      %v484 = vlaneseq
      %v485 = vshrl.u32 %v484, 7
      %v486 = vsub.s32 2, %v485
      %v487 = vrot.slane %v475, %v486
      %v488 = vlaneseq
      %v489 = vshrl.u32 %v488, 7
      %v490 = vsub.s32 3, %v489
      %v491 = vrot.slane %v475, %v490
      %vm492 = vcmp.eq.s32.totalorder %v479, 1
      %vm493 = vcmp.eq.s32.totalorder %v483, 1
      %vm494 = vcmp.eq.s32.totalorder %v487, 1
      %vm495 = vcmp.eq.s32.totalorder %v491, 1
      %v496 = vsel %vm492, %v162, 0.0
      %v497 = vsel %vm493, %v424, 0.0
      %v498 = vsel %vm494, %v163, 0.0
      %v499 = vsel %vm495, %v425, 0.0
      %v500 = vadd.f32 %v468, %v496
      %v501 = vadd.f32 %v469, %v497
      %v502 = vadd.f32 %v470, %v498
      %v503 = vadd.f32 %v471, %v499
      %504 = vrot.lane.b32.xlu0 %v206, 127
      %v505 = vpop.permute.xlu0 %504
      %506 = vrot.lane.b32.xlu0 %v210, 127
      %v507 = vpop.permute.xlu0 %506
      %508 = vrot.lane.b32.xlu0 %v214, 127
      %v509 = vpop.permute.xlu0 %508
      %510 = vrot.lane.b32.xlu0 %v218, 127
      %v511 = vpop.permute.xlu0 %510
      %v512 = vsel %vm329, %v509, %v511
      %v513 = vsel %vm329, %v507, %v509
      %v514 = vsel %vm329, %v505, %v507
      %v515 = vsel %vm329, %v511, %v505
      %v516 = vsub.f32 %v514, %v206
      %v517 = vsub.f32 %v513, %v210
      %v518 = vsub.f32 %v512, %v214
      %v519 = vsub.f32 %v515, %v218
      %v520 = vand.u32 2147483647, %v516
      %v521 = vand.u32 2147483647, %v517
      %v522 = vand.u32 2147483647, %v518
      %v523 = vand.u32 2147483647, %v519
      %vm524 = vcmp.lt.f32.partialorder %v520, 1.0
      %vm525 = vcmp.lt.f32.partialorder %v521, 1.0
      %vm526 = vcmp.lt.f32.partialorder %v522, 1.0
      %vm527 = vcmp.lt.f32.partialorder %v523, 1.0
      %vm528 = vmand %vm524, %vm58
      %vm529 = vmand %vm525, %vm59
      %vm530 = vmand %vm526, %vm60
      %vm531 = vmand %vm527, %vm61
      %532 = vrot.lane.b32.xlu0 %v162, 127
      %v533 = vpop.permute.xlu0 %532
      %534 = vrot.lane.b32.xlu0 %v424, 127
      %v535 = vpop.permute.xlu0 %534
      %536 = vrot.lane.b32.xlu0 %v163, 127
      %v537 = vpop.permute.xlu0 %536
      %538 = vrot.lane.b32.xlu0 %v425, 127
      %v539 = vpop.permute.xlu0 %538
      %v540 = vsel %vm329, %v537, %v539
      %v541 = vsel %vm329, %v535, %v537
      %v542 = vsel %vm329, %v533, %v535
      %v543 = vsel %vm329, %v539, %v533
      %v544 = vsel %vm528, 1, 0
      %v545 = vsel %vm529, 1, 0
      %v546 = vsel %vm530, 1, 0
      %v547 = vsel %vm531, 1, 0
      %v548 = vlaneseq
      %v549 = vshrl.u32 %v548, 7
      %v550 = vsub.s32 0, %v549
      %v551 = vrot.slane %v544, %v550
      %v552 = vlaneseq
      %v553 = vshrl.u32 %v552, 7
      %v554 = vsub.s32 0, %v553
      %v555 = vrot.slane %v545, %v554
      %v556 = vlaneseq
      %v557 = vshrl.u32 %v556, 7
      %v558 = vsub.s32 0, %v557
      %v559 = vrot.slane %v546, %v558
      %v560 = vlaneseq
      %v561 = vshrl.u32 %v560, 7
      %v562 = vsub.s32 0, %v561
      %v563 = vrot.slane %v547, %v562
      %vm564 = vcmp.eq.s32.totalorder %v551, 1
      %vm565 = vcmp.eq.s32.totalorder %v555, 1
      %vm566 = vcmp.eq.s32.totalorder %v559, 1
      %vm567 = vcmp.eq.s32.totalorder %v563, 1
      %v568 = vsel %vm564, %v542, 0.0
      %v569 = vsel %vm565, %v541, 0.0
      %v570 = vsel %vm566, %v540, 0.0
      %v571 = vsel %vm567, %v543, 0.0
      %v572 = vadd.f32 %v500, %v568
      %v573 = vadd.f32 %v501, %v569
      %v574 = vadd.f32 %v502, %v570
      %v575 = vadd.f32 %v503, %v571
      %v577 = vlaneseq
      %v578 = vshrl.u32 %v577, 7
      %v579 = vsub.s32 0, %v578
      %v580 = vrot.slane %v155, %v579
      %v581 = vlaneseq
      %v582 = vshrl.u32 %v581, 7
      %v583 = vsub.s32 1, %v582
      %v584 = vrot.slane %v155, %v583
      %v585 = vlaneseq
      %v586 = vshrl.u32 %v585, 7
      %v587 = vsub.s32 2, %v586
      %v588 = vrot.slane %v155, %v587
      %v589 = vlaneseq
      %v590 = vshrl.u32 %v589, 7
      %v591 = vsub.s32 3, %v590
      %v592 = vrot.slane %v155, %v591
      %597 = vrot.lane.b32.xlu0 %v580, 1
      %v598 = vpop.permute.xlu0 %597
      %599 = vrot.lane.b32.xlu0 %v584, 1
      %v600 = vpop.permute.xlu0 %599
      %601 = vrot.lane.b32.xlu0 %v588, 1
      %v602 = vpop.permute.xlu0 %601
      %603 = vrot.lane.b32.xlu0 %v592, 1
      %v604 = vpop.permute.xlu0 %603
      %v605 = vsel %vm197, %v602, %v604
      %v606 = vsel %vm197, %v600, %v602
      %v607 = vsel %vm197, %v598, %v600
      %v608 = vsel %vm197, %v604, %v598
      %v609 = vsub.f32 %v608, %v206
      %v610 = vsub.f32 %v607, %v210
      %v611 = vsub.f32 %v606, %v214
      %v612 = vsub.f32 %v605, %v218
      %v613 = vand.u32 2147483647, %v609
      %v614 = vand.u32 2147483647, %v610
      %v615 = vand.u32 2147483647, %v611
      %v616 = vand.u32 2147483647, %v612
      %vm617 = vcmp.lt.f32.partialorder %v613, 1.0
      %vm618 = vcmp.lt.f32.partialorder %v614, 1.0
      %vm619 = vcmp.lt.f32.partialorder %v615, 1.0
      %vm620 = vcmp.lt.f32.partialorder %v616, 1.0
      %vm621 = vmand %vm617, %vm54
      %vm622 = vmand %vm618, %vm55
      %vm623 = vmand %vm619, %vm56
      %vm624 = vmand %vm620, %vm57
      %v627 = vcombine.high %v166, %v166
      %v628 = vcombine.high %v167, %v167
      %631 = vrot.lane.b32.xlu0 %v166, 1
      %v632 = vpop.permute.xlu0 %631
      %633 = vrot.lane.b32.xlu0 %v627, 1
      %v634 = vpop.permute.xlu0 %633
      %635 = vrot.lane.b32.xlu0 %v167, 1
      %v636 = vpop.permute.xlu0 %635
      %637 = vrot.lane.b32.xlu0 %v628, 1
      %v638 = vpop.permute.xlu0 %637
      %v639 = vsel %vm197, %v636, %v638
      %v640 = vsel %vm197, %v634, %v636
      %v641 = vsel %vm197, %v632, %v634
      %v642 = vsel %vm197, %v638, %v632
      %v643 = vsel %vm621, 1, 0
      %v644 = vsel %vm622, 1, 0
      %v645 = vsel %vm623, 1, 0
      %v646 = vsel %vm624, 1, 0
      %v647 = vlaneseq
      %v648 = vshrl.u32 %v647, 7
      %v649 = vsub.s32 0, %v648
      %v650 = vrot.slane %v643, %v649
      %v651 = vlaneseq
      %v652 = vshrl.u32 %v651, 7
      %v653 = vsub.s32 0, %v652
      %v654 = vrot.slane %v644, %v653
      %v655 = vlaneseq
      %v656 = vshrl.u32 %v655, 7
      %v657 = vsub.s32 0, %v656
      %v658 = vrot.slane %v645, %v657
      %v659 = vlaneseq
      %v660 = vshrl.u32 %v659, 7
      %v661 = vsub.s32 0, %v660
      %v662 = vrot.slane %v646, %v661
      %vm663 = vcmp.eq.s32.totalorder %v650, 1
      %vm664 = vcmp.eq.s32.totalorder %v654, 1
      %vm665 = vcmp.eq.s32.totalorder %v658, 1
      %vm666 = vcmp.eq.s32.totalorder %v662, 1
      %v667 = vsel %vm663, %v642, 0.0
      %v668 = vsel %vm664, %v641, 0.0
      %v669 = vsel %vm665, %v640, 0.0
      %v670 = vsel %vm666, %v639, 0.0
      %v671 = vadd.f32 %v572, %v667
      %v672 = vadd.f32 %v573, %v668
      %v673 = vadd.f32 %v574, %v669
      %v674 = vadd.f32 %v575, %v670
      %v675 = vsub.f32 %v155, %v150
      %v676 = vand.u32 2147483647, %v675
      %vm677 = vcmp.lt.f32.partialorder %v676, 1.0
      %v678 = vsel %vm677, 1, 0
      %v679 = vlaneseq
      %v680 = vshrl.u32 %v679, 7
      %v681 = vsub.s32 0, %v680
      %v682 = vrot.slane %v678, %v681
      %v683 = vlaneseq
      %v684 = vshrl.u32 %v683, 7
      %v685 = vsub.s32 1, %v684
      %v686 = vrot.slane %v678, %v685
      %v687 = vlaneseq
      %v688 = vshrl.u32 %v687, 7
      %v689 = vsub.s32 2, %v688
      %v690 = vrot.slane %v678, %v689
      %v691 = vlaneseq
      %v692 = vshrl.u32 %v691, 7
      %v693 = vsub.s32 3, %v692
      %v694 = vrot.slane %v678, %v693
      %vm695 = vcmp.eq.s32.totalorder %v682, 1
      %vm696 = vcmp.eq.s32.totalorder %v686, 1
      %vm697 = vcmp.eq.s32.totalorder %v690, 1
      %vm698 = vcmp.eq.s32.totalorder %v694, 1
      %v699 = vsel %vm695, %v166, 0.0
      %v700 = vsel %vm696, %v627, 0.0
      %v701 = vsel %vm697, %v167, 0.0
      %v702 = vsel %vm698, %v628, 0.0
      %v703 = vadd.f32 %v671, %v699
      %v704 = vadd.f32 %v672, %v700
      %v705 = vadd.f32 %v673, %v701
      %v706 = vadd.f32 %v674, %v702
      %707 = vrot.lane.b32.xlu0 %v580, 127
      %v708 = vpop.permute.xlu0 %707
      %709 = vrot.lane.b32.xlu0 %v584, 127
      %v710 = vpop.permute.xlu0 %709
      %711 = vrot.lane.b32.xlu0 %v588, 127
      %v712 = vpop.permute.xlu0 %711
      %713 = vrot.lane.b32.xlu0 %v592, 127
      %v714 = vpop.permute.xlu0 %713
      %v715 = vsel %vm329, %v712, %v714
      %v716 = vsel %vm329, %v710, %v712
      %v717 = vsel %vm329, %v708, %v710
      %v718 = vsel %vm329, %v714, %v708
      %v719 = vsub.f32 %v717, %v206
      %v720 = vsub.f32 %v716, %v210
      %v721 = vsub.f32 %v715, %v214
      %v722 = vsub.f32 %v718, %v218
      %v723 = vand.u32 2147483647, %v719
      %v724 = vand.u32 2147483647, %v720
      %v725 = vand.u32 2147483647, %v721
      %v726 = vand.u32 2147483647, %v722
      %vm727 = vcmp.lt.f32.partialorder %v723, 1.0
      %vm728 = vcmp.lt.f32.partialorder %v724, 1.0
      %vm729 = vcmp.lt.f32.partialorder %v725, 1.0
      %vm730 = vcmp.lt.f32.partialorder %v726, 1.0
      %vm731 = vmand %vm727, %vm58
      %vm732 = vmand %vm728, %vm59
      %vm733 = vmand %vm729, %vm60
      %vm734 = vmand %vm730, %vm61
      %735 = vrot.lane.b32.xlu0 %v166, 127
      %v736 = vpop.permute.xlu0 %735
      %737 = vrot.lane.b32.xlu0 %v627, 127
      %v738 = vpop.permute.xlu0 %737
      %739 = vrot.lane.b32.xlu0 %v167, 127
      %v740 = vpop.permute.xlu0 %739
      %741 = vrot.lane.b32.xlu0 %v628, 127
      %v742 = vpop.permute.xlu0 %741
      %v743 = vsel %vm329, %v740, %v742
      %v744 = vsel %vm329, %v738, %v740
      %v745 = vsel %vm329, %v736, %v738
      %v746 = vsel %vm329, %v742, %v736
      %v747 = vsel %vm731, 1, 0
      %v748 = vsel %vm732, 1, 0
      %v749 = vsel %vm733, 1, 0
      %v750 = vsel %vm734, 1, 0
      %v751 = vlaneseq
      %v752 = vshrl.u32 %v751, 7
      %v753 = vsub.s32 0, %v752
      %v754 = vrot.slane %v747, %v753
      %v755 = vlaneseq
      %v756 = vshrl.u32 %v755, 7
      %v757 = vsub.s32 0, %v756
      %v758 = vrot.slane %v748, %v757
      %v759 = vlaneseq
      %v760 = vshrl.u32 %v759, 7
      %v761 = vsub.s32 0, %v760
      %v762 = vrot.slane %v749, %v761
      %v763 = vlaneseq
      %v764 = vshrl.u32 %v763, 7
      %v765 = vsub.s32 0, %v764
      %v766 = vrot.slane %v750, %v765
      %vm767 = vcmp.eq.s32.totalorder %v754, 1
      %vm768 = vcmp.eq.s32.totalorder %v758, 1
      %vm769 = vcmp.eq.s32.totalorder %v762, 1
      %vm770 = vcmp.eq.s32.totalorder %v766, 1
      %v771 = vsel %vm767, %v745, 0.0
      %v772 = vsel %vm768, %v744, 0.0
      %v773 = vsel %vm769, %v743, 0.0
      %v774 = vsel %vm770, %v746, 0.0
      %v775 = vadd.f32 %v703, %v771
      %v776 = vadd.f32 %v704, %v772
      %v777 = vadd.f32 %v705, %v773
      %v778 = vadd.f32 %v706, %v774
      %v779 = vlaneseq
      %v780 = vshrl.u32 %v779, 7
      %v781 = vsub.s32 0, %v780
      %v782 = vrot.slane %v775, %v781
      %v783 = vlaneseq
      %v784 = vshrl.u32 %v783, 7
      %v785 = vsub.s32 0, %v784
      %v786 = vrot.slane %v776, %v785
      %v787 = vlaneseq
      %v788 = vshrl.u32 %v787, 7
      %v789 = vsub.s32 0, %v788
      %v790 = vrot.slane %v777, %v789
      %v791 = vlaneseq
      %v792 = vshrl.u32 %v791, 7
      %v793 = vsub.s32 0, %v792
      %v794 = vrot.slane %v778, %v793
      %v795 = vrcp.pop %v782
      %v796 = vmul.f32 %v775, %v795
      %v797 = vrcp.pop %v786
      %v798 = vmul.f32 %v776, %v797
      %v799 = vrcp.pop %v790
      %v800 = vmul.f32 %v777, %v799
      %v801 = vrcp.pop %v794
      %v802 = vmul.f32 %v778, %v801
      %v803 = vmul.f32 %v162, 0.5
      %v804 = vmul.f32 %v163, 0.5
      %v805 = vmul.f32 %v796, 0.5
      %v806 = vmul.f32 %v798, 0.5
      %v807 = vmul.f32 %v800, 0.5
      %v808 = vmul.f32 %v802, 0.5
      %v813 = vcombine.low %v805, %v806
      %v814 = vcombine.low %v807, %v808
      %v817 = vadd.f32 %v803, %v813
      %v818 = vadd.f32 %v804, %v814
      %s819 = sshra.s32 %s141, 7
      %s820 = sand.u32 %s141, 127
      %s821 = smul.addr %s819, 4
      %s822 = scalar_lea.vmem %s1, %s821
      %v823 = vld [vmem:[%s822] sm:$0x77]
      %v824 = vld [vmem:[%s822 + $0x8] sm:$0x77]
      %v827 = vrot.slane %v823, 5
      %v828 = vrot.slane %v827, 4
      %v829 = vrot.slane %v824, 5
      %v830 = vrot.slane %v829, 4
      %v833 = vmax.f32 %v823, %v828
      %v834 = vmax.f32 %v824, %v830
      %v835 = vstv %s133
      %v836 = vmul.f32 %v835, %v833
      %v837 = vmul.f32 %v835, %v834
      %v838 = vstv %s132
      %v839 = vadd.f32 %v838, %v836
      %v840 = vadd.f32 %v838, %v837
      %v841 = vstv %s134
      %v842 = vmul.f32 %v841, %v823
      %v843 = vmul.f32 %v841, %v824
      %v846 = vrot.slane %v842, 7
      %v847 = vrot.slane %v843, 7
      %v850 = vadd.f32 %v839, %v846
      %v851 = vadd.f32 %v840, %v847
      %v852 = vmul.f32 %v817, 2.0
      %v853 = vmul.f32 %v818, 2.0
      %v856 = vlaneseq
      %v857 = vshrl.u32 %v856, 7
      %v858 = vsub.s32 1, %v857
      %v859 = vrot.slane %v850, %v858
      %v860 = vlaneseq
      %v861 = vshrl.u32 %v860, 7
      %v862 = vsub.s32 5, %v861
      %v863 = vrot.slane %v850, %v862
      %v864 = vlaneseq
      %v865 = vshrl.u32 %v864, 7
      %v866 = vsub.s32 1, %v865
      %v867 = vrot.slane %v851, %v866
      %v868 = vlaneseq
      %v869 = vshrl.u32 %v868, 7
      %v870 = vsub.s32 5, %v869
      %v871 = vrot.slane %v851, %v870
      %v876 = vlaneseq
      %v877 = vshrl.u32 %v876, 7
      %v878 = vsub.s32 1, %v877
      %v879 = vrot.slane %v859, %v878
      %v880 = vlaneseq
      %v881 = vshrl.u32 %v880, 7
      %v882 = vsub.s32 1, %v881
      %v883 = vrot.slane %v863, %v882
      %v884 = vlaneseq
      %v885 = vshrl.u32 %v884, 7
      %v886 = vsub.s32 1, %v885
      %v887 = vrot.slane %v867, %v886
      %v888 = vlaneseq
      %v889 = vshrl.u32 %v888, 7
      %v890 = vsub.s32 1, %v889
      %v891 = vrot.slane %v871, %v890
      %v896 = vcombine.low %v879, %v883
      %v897 = vcombine.low %v887, %v891
      %v898 = vrot.slane %v896, 7
      %v899 = vrot.slane %v897, 7
      %v902 = vmul.f32 %v852, %v898
      %v903 = vmul.f32 %v853, %v899
      %v906 = vrot.slane %v902, 5
      %v907 = vrot.slane %v906, 4
      %v908 = vrot.slane %v903, 5
      %v909 = vrot.slane %v908, 4
      %s912 = smul.addr %s819, 4
      %s913 = scalar_lea.vmem %s8, %s912
      %914 = vst [vmem:[%s913] sm:$0x77] %v907
      %915 = vst [vmem:[%s913 + $0x8] sm:$0x77] %v909
      %v916 = vcombine.high %v902, %v902
      %v917 = vcombine.high %v903, %v903
      %v918 = vrot.slane %v902, 1
      %v919 = vrot.slane %v916, 1
      %v920 = vrot.slane %v903, 1
      %v921 = vrot.slane %v917, 1
      %s926 = smul.addr %s147, 8
      %s927 = scalar_lea.vmem [#allocation2], %s926
      %928 = vst [vmem:[%s927] sm:$0x7] %v918
      %929 = vst [vmem:[%s927 + $0x8] sm:$0x7] %v919
      %930 = vst [vmem:[%s927 + $0x10] sm:$0x7] %v920
      %931 = vst [vmem:[%s927 + $0x18] sm:$0x7] %v921
    $region42: #{eigm_forward.1} parent=1 // loop_footer
      %s140 = sadd.s32 1, %s136
    $region43: #{eigm_forward.1} parent=1 // loop_footer_branch
      %135 = sbr.rel target = $region39
    $region44: #{eigm_forward.1} parent=1 // loop_exit
      _
    loop: start=0, step=1, limit=16
    $region45: #{eigm_forward.1} parent=1 // loop_pre_header
      _
    $region46: #{eigm_forward.1} parent=1 // loop_header
      %s933 = sphi 0, %s937
      %p934 = scmp.ge.s32.totalorder %s933, 16
    $region47: #{eigm_forward.1} parent=1 // loop_header_branch
      %936 = sbr.rel (%p934) target = $region51
    $region48: #{eigm_forward.1} parent=1 // loop_body
      %s938 = smul.u32 %s933, 512
      %s939 = sshra.s32 %s938, 7
      %s940 = sand.u32 %s938, 127
      %s941 = smul.addr %s939, 8
      %s942 = scalar_lea.vmem [#allocation2], %s941
      %v943 = vld [vmem:[%s942] sm:$0xff]
      %v944 = vld [vmem:[%s942 + $0x8] sm:$0xff]
      %v945 = vld [vmem:[%s942 + $0x10] sm:$0xff]
      %v946 = vld [vmem:[%s942 + $0x18] sm:$0xff]
      %s947 = sadd.s32 %s938, 128
      %s948 = sshra.s32 %s947, 7
      %s949 = sand.u32 %s947, 127
      %s950 = smul.addr %s948, 8
      %s951 = scalar_lea.vmem [#allocation2], %s950
      %v952 = vld [vmem:[%s951] sm:$0xff]
      %v953 = vld [vmem:[%s951 + $0x8] sm:$0xff]
      %v954 = vld [vmem:[%s951 + $0x10] sm:$0xff]
      %v955 = vld [vmem:[%s951 + $0x18] sm:$0xff]
      %s956 = sadd.s32 %s938, 256
      %s957 = sshra.s32 %s956, 7
      %s958 = sand.u32 %s956, 127
      %s959 = smul.addr %s957, 8
      %s960 = scalar_lea.vmem [#allocation2], %s959
      %v961 = vld [vmem:[%s960] sm:$0xff]
      %v962 = vld [vmem:[%s960 + $0x8] sm:$0xff]
      %v963 = vld [vmem:[%s960 + $0x10] sm:$0xff]
      %v964 = vld [vmem:[%s960 + $0x18] sm:$0xff]
      %965 = vrot.lane.b32.xlu0 %v943, 1
      %v966 = vpop.permute.xlu0 %965
      %967 = vrot.lane.b32.xlu0 %v944, 1
      %v968 = vpop.permute.xlu0 %967
      %969 = vrot.lane.b32.xlu0 %v945, 1
      %v970 = vpop.permute.xlu0 %969
      %971 = vrot.lane.b32.xlu0 %v946, 1
      %v972 = vpop.permute.xlu0 %971
      %vm973 = vcmp.lt.s32.totalorder %v46, 1
      %v974 = vsel %vm973, %v970, %v972
      %v975 = vsel %vm973, %v968, %v970
      %v976 = vsel %vm973, %v966, %v968
      %v977 = vsel %vm973, %v972, %v966
      %v978 = vsel %vm54, 1, 0
      %v979 = vsel %vm55, 1, 0
      %v980 = vsel %vm56, 1, 0
      %v981 = vsel %vm57, 1, 0
      %vm982 = vcmp.eq.s32.totalorder %v978, 1
      %vm983 = vcmp.eq.s32.totalorder %v979, 1
      %vm984 = vcmp.eq.s32.totalorder %v980, 1
      %vm985 = vcmp.eq.s32.totalorder %v981, 1
      %v986 = vsel %vm982, %v977, 0.0
      %v987 = vsel %vm983, %v976, 0.0
      %v988 = vsel %vm984, %v975, 0.0
      %v989 = vsel %vm985, %v974, 0.0
      %v990 = vld [vmem:[%s4] sm:$0xf]
      %v991 = vld [vmem:[%s4 + $0x4] sm:$0xf]
      %v992 = vpack.c.bf16 %v986, %v986
      %v993 = vpack.c.bf16 %v987, %v987
      %v994 = vpack.c.bf16 %v988, %v988
      %v995 = vpack.c.bf16 %v989, %v989
      %s996 = scalar_lea.vmem %s4, 8
      %v997 = vld [vmem:[%s996] sm:$0xf]
      %v998 = vld [vmem:[%s996 + $0x4] sm:$0xf]
      %v999 = vpack.c.bf16 %v943, %v943
      %v1000 = vpack.c.bf16 %v944, %v944
      %v1001 = vpack.c.bf16 %v945, %v945
      %v1002 = vpack.c.bf16 %v946, %v946
      %v1005 = vunpack.c.l.b16 %v997
      %v1006 = vunpack.c.l.b16 %v998
      %v1007 = vpack.c.b16 %v1006, %v1005
      %vm1008 = vcmask 64512
      %v1010 = vsel %vm1008, %v1007, 0
      %vm1012 = vcmask 1043456
      %v1014 = vsel %vm1012, %v999, 0
      %v1017 = vsel %vm1012, %v1000, 0
      %v1020 = vsel %vm1012, %v1001, 0
      %v1023 = vsel %vm1012, %v1002, 0
      %1025 = vmatprep.subr.bf16.mxu0 %v1017
      %1026 = vmatpush1.bf16.msra.mxu0 %v1014
      %1027 = vmatprep.subr.bf16.mxu0 0
      %1028 = vmatpush1.bf16.msra.mxu0 0
      %1029 = vmatprep.subr.bf16.mxu0 0
      %1030 = vmatpush1.bf16.msra.mxu0 0
      %1031 = vmatprep.subr.bf16.mxu0 0
      %1032 = vmatpush1.bf16.msra.mxu0 0
      %1033 = vmatprep.subr.bf16.mxu0 0
      %1034 = vmatpush1.bf16.msra.mxu0 0
      %1035 = vmatprep.subr.bf16.mxu0 0
      %1036 = vmatpush1.bf16.msra.mxu0 0
      %1037 = vmatprep.subr.bf16.mxu0 0
      %1038 = vmatpush1.bf16.msra.mxu0 0
      %1039 = vmatprep.subr.bf16.mxu0 0
      %1040 = vmatpush1.bf16.msra.mxu0 0
      %1041 = vmatprep.subr.bf16.mxu0 0
      %1042 = vmatpush1.bf16.msra.mxu0 0
      %1043 = vmatprep.subr.bf16.mxu0 0
      %1044 = vmatpush1.bf16.msra.mxu0 0
      %1045 = vmatprep.subr.bf16.mxu0 0
      %1046 = vmatpush1.bf16.msra.mxu0 0
      %1047 = vmatprep.subr.bf16.mxu0 0
      %1048 = vmatpush1.bf16.msra.mxu0 0
      %1049 = vmatprep.subr.bf16.mxu0 0
      %1050 = vmatpush1.bf16.msra.mxu0 0
      %1051 = vmatprep.subr.bf16.mxu0 0
      %1052 = vmatpush1.bf16.msra.mxu0 0
      %1053 = vmatprep.subr.bf16.mxu0 0
      %1054 = vmatpush1.bf16.msra.mxu0 0
      %1055 = vmatprep.subr.bf16.mxu0 0
      %1056 = vmatpush1.bf16.msra.mxu0 0
      %1057 = vmatprep.mubr.bf16.mxu0 0
      %1058 = vmatmul.mubr.bf16.gmra.mrb[0].mxu0 %v1010
      %v1059 = vpop.f32.mrb[0].mxu0
      %v1060 = vadd.f32 0.0, %v1059
      %v1061 = vpop.f32.mrb[0].mxu0
      %v1062 = vadd.f32 0.0, %v1061
      %v1063 = vpop.f32.mrb[0].mxu0
      %v1064 = vadd.f32 0.0, %v1063
      %v1065 = vpop.f32.mrb[0].mxu0
      %v1066 = vadd.f32 0.0, %v1065
      %1067 = vdwg.mxu0
      %1068 = vmatprep.subr.bf16.mxu0 %v1023
      %1069 = vmatpush1.bf16.msra.mxu0 %v1020
      %1070 = vmatprep.subr.bf16.mxu0 0
      %1071 = vmatpush1.bf16.msra.mxu0 0
      %1072 = vmatprep.subr.bf16.mxu0 0
      %1073 = vmatpush1.bf16.msra.mxu0 0
      %1074 = vmatprep.subr.bf16.mxu0 0
      %1075 = vmatpush1.bf16.msra.mxu0 0
      %1076 = vmatprep.subr.bf16.mxu0 0
      %1077 = vmatpush1.bf16.msra.mxu0 0
      %1078 = vmatprep.subr.bf16.mxu0 0
      %1079 = vmatpush1.bf16.msra.mxu0 0
      %1080 = vmatprep.subr.bf16.mxu0 0
      %1081 = vmatpush1.bf16.msra.mxu0 0
      %1082 = vmatprep.subr.bf16.mxu0 0
      %1083 = vmatpush1.bf16.msra.mxu0 0
      %1084 = vmatprep.subr.bf16.mxu0 0
      %1085 = vmatpush1.bf16.msra.mxu0 0
      %1086 = vmatprep.subr.bf16.mxu0 0
      %1087 = vmatpush1.bf16.msra.mxu0 0
      %1088 = vmatprep.subr.bf16.mxu0 0
      %1089 = vmatpush1.bf16.msra.mxu0 0
      %1090 = vmatprep.subr.bf16.mxu0 0
      %1091 = vmatpush1.bf16.msra.mxu0 0
      %1092 = vmatprep.subr.bf16.mxu0 0
      %1093 = vmatpush1.bf16.msra.mxu0 0
      %1094 = vmatprep.subr.bf16.mxu0 0
      %1095 = vmatpush1.bf16.msra.mxu0 0
      %1096 = vmatprep.subr.bf16.mxu0 0
      %1097 = vmatpush1.bf16.msra.mxu0 0
      %1098 = vmatprep.subr.bf16.mxu0 0
      %1099 = vmatpush1.bf16.msra.mxu0 0
      %1100 = vmatprep.mubr.bf16.mxu0 0
      %1101 = vmatmul.mubr.bf16.gmra.mrb[0].mxu0 %v1010
      %v1102 = vpop.f32.mrb[0].mxu0
      %v1103 = vadd.f32 0.0, %v1102
      %v1104 = vpop.f32.mrb[0].mxu0
      %v1105 = vadd.f32 0.0, %v1104
      %v1106 = vpop.f32.mrb[0].mxu0
      %v1107 = vadd.f32 0.0, %v1106
      %v1108 = vpop.f32.mrb[0].mxu0
      %v1109 = vadd.f32 0.0, %v1108
      %1110 = vdwg.mxu0
      %v1113 = vunpack.c.l.b16 %v990
      %v1114 = vunpack.c.l.b16 %v991
      %v1115 = vpack.c.b16 %v1114, %v1113
      %v1117 = vsel %vm1008, %v1115, 0
      %v1120 = vsel %vm1012, %v992, 0
      %v1123 = vsel %vm1012, %v993, 0
      %v1126 = vsel %vm1012, %v994, 0
      %v1129 = vsel %vm1012, %v995, 0
      %1131 = vmatprep.subr.bf16.mxu0 %v1123
      %1132 = vmatpush1.bf16.msra.mxu0 %v1120
      %1133 = vmatprep.subr.bf16.mxu0 0
      %1134 = vmatpush1.bf16.msra.mxu0 0
      %1135 = vmatprep.subr.bf16.mxu0 0
      %1136 = vmatpush1.bf16.msra.mxu0 0
      %1137 = vmatprep.subr.bf16.mxu0 0
      %1138 = vmatpush1.bf16.msra.mxu0 0
      %1139 = vmatprep.subr.bf16.mxu0 0
      %1140 = vmatpush1.bf16.msra.mxu0 0
      %1141 = vmatprep.subr.bf16.mxu0 0
      %1142 = vmatpush1.bf16.msra.mxu0 0
      %1143 = vmatprep.subr.bf16.mxu0 0
      %1144 = vmatpush1.bf16.msra.mxu0 0
      %1145 = vmatprep.subr.bf16.mxu0 0
      %1146 = vmatpush1.bf16.msra.mxu0 0
      %1147 = vmatprep.subr.bf16.mxu0 0
      %1148 = vmatpush1.bf16.msra.mxu0 0
      %1149 = vmatprep.subr.bf16.mxu0 0
      %1150 = vmatpush1.bf16.msra.mxu0 0
      %1151 = vmatprep.subr.bf16.mxu0 0
      %1152 = vmatpush1.bf16.msra.mxu0 0
      %1153 = vmatprep.subr.bf16.mxu0 0
      %1154 = vmatpush1.bf16.msra.mxu0 0
      %1155 = vmatprep.subr.bf16.mxu0 0
      %1156 = vmatpush1.bf16.msra.mxu0 0
      %1157 = vmatprep.subr.bf16.mxu0 0
      %1158 = vmatpush1.bf16.msra.mxu0 0
      %1159 = vmatprep.subr.bf16.mxu0 0
      %1160 = vmatpush1.bf16.msra.mxu0 0
      %1161 = vmatprep.subr.bf16.mxu0 0
      %1162 = vmatpush1.bf16.msra.mxu0 0
      %1163 = vmatprep.mubr.bf16.mxu0 0
      %1164 = vmatmul.mubr.bf16.gmra.mrb[0].mxu0 %v1117
      %v1165 = vpop.f32.mrb[0].mxu0
      %v1166 = vadd.f32 %v1060, %v1165
      %v1167 = vpop.f32.mrb[0].mxu0
      %v1168 = vadd.f32 %v1062, %v1167
      %v1169 = vpop.f32.mrb[0].mxu0
      %v1170 = vadd.f32 %v1064, %v1169
      %v1171 = vpop.f32.mrb[0].mxu0
      %v1172 = vadd.f32 %v1066, %v1171
      %1173 = vdwg.mxu0
      %1174 = vmatprep.subr.bf16.mxu0 %v1129
      %1175 = vmatpush1.bf16.msra.mxu0 %v1126
      %1176 = vmatprep.subr.bf16.mxu0 0
      %1177 = vmatpush1.bf16.msra.mxu0 0
      %1178 = vmatprep.subr.bf16.mxu0 0
      %1179 = vmatpush1.bf16.msra.mxu0 0
      %1180 = vmatprep.subr.bf16.mxu0 0
      %1181 = vmatpush1.bf16.msra.mxu0 0
      %1182 = vmatprep.subr.bf16.mxu0 0
      %1183 = vmatpush1.bf16.msra.mxu0 0
      %1184 = vmatprep.subr.bf16.mxu0 0
      %1185 = vmatpush1.bf16.msra.mxu0 0
      %1186 = vmatprep.subr.bf16.mxu0 0
      %1187 = vmatpush1.bf16.msra.mxu0 0
      %1188 = vmatprep.subr.bf16.mxu0 0
      %1189 = vmatpush1.bf16.msra.mxu0 0
      %1190 = vmatprep.subr.bf16.mxu0 0
      %1191 = vmatpush1.bf16.msra.mxu0 0
      %1192 = vmatprep.subr.bf16.mxu0 0
      %1193 = vmatpush1.bf16.msra.mxu0 0
      %1194 = vmatprep.subr.bf16.mxu0 0
      %1195 = vmatpush1.bf16.msra.mxu0 0
      %1196 = vmatprep.subr.bf16.mxu0 0
      %1197 = vmatpush1.bf16.msra.mxu0 0
      %1198 = vmatprep.subr.bf16.mxu0 0
      %1199 = vmatpush1.bf16.msra.mxu0 0
      %1200 = vmatprep.subr.bf16.mxu0 0
      %1201 = vmatpush1.bf16.msra.mxu0 0
      %1202 = vmatprep.subr.bf16.mxu0 0
      %1203 = vmatpush1.bf16.msra.mxu0 0
      %1204 = vmatprep.subr.bf16.mxu0 0
      %1205 = vmatpush1.bf16.msra.mxu0 0
      %1206 = vmatprep.mubr.bf16.mxu0 0
      %1207 = vmatmul.mubr.bf16.gmra.mrb[0].mxu0 %v1117
      %v1208 = vpop.f32.mrb[0].mxu0
      %v1209 = vadd.f32 %v1103, %v1208
      %v1210 = vpop.f32.mrb[0].mxu0
      %v1211 = vadd.f32 %v1105, %v1210
      %v1212 = vpop.f32.mrb[0].mxu0
      %v1213 = vadd.f32 %v1107, %v1212
      %v1214 = vpop.f32.mrb[0].mxu0
      %v1215 = vadd.f32 %v1109, %v1214
      %1216 = vdwg.mxu0
      %1217 = vrot.lane.b32.xlu0 %v943, 127
      %v1218 = vpop.permute.xlu0 %1217
      %1219 = vrot.lane.b32.xlu0 %v944, 127
      %v1220 = vpop.permute.xlu0 %1219
      %1221 = vrot.lane.b32.xlu0 %v945, 127
      %v1222 = vpop.permute.xlu0 %1221
      %1223 = vrot.lane.b32.xlu0 %v946, 127
      %v1224 = vpop.permute.xlu0 %1223
      %vm1225 = vcmp.lt.s32.totalorder %v46, 127
      %v1226 = vsel %vm1225, %v1222, %v1224
      %v1227 = vsel %vm1225, %v1220, %v1222
      %v1228 = vsel %vm1225, %v1218, %v1220
      %v1229 = vsel %vm1225, %v1224, %v1218
      %v1230 = vsel %vm58, 1, 0
      %v1231 = vsel %vm59, 1, 0
      %v1232 = vsel %vm60, 1, 0
      %v1233 = vsel %vm61, 1, 0
      %vm1234 = vcmp.eq.s32.totalorder %v1230, 1
      %vm1235 = vcmp.eq.s32.totalorder %v1231, 1
      %vm1236 = vcmp.eq.s32.totalorder %v1232, 1
      %vm1237 = vcmp.eq.s32.totalorder %v1233, 1
      %v1238 = vsel %vm1234, %v1228, 0.0
      %v1239 = vsel %vm1235, %v1227, 0.0
      %v1240 = vsel %vm1236, %v1226, 0.0
      %v1241 = vsel %vm1237, %v1229, 0.0
      %s1242 = scalar_lea.vmem %s4, 16
      %v1243 = vld [vmem:[%s1242] sm:$0xf]
      %v1244 = vld [vmem:[%s1242 + $0x4] sm:$0xf]
      %v1245 = vpack.c.bf16 %v1238, %v1238
      %v1246 = vpack.c.bf16 %v1239, %v1239
      %v1247 = vpack.c.bf16 %v1240, %v1240
      %v1248 = vpack.c.bf16 %v1241, %v1241
      %v1251 = vunpack.c.l.b16 %v1243
      %v1252 = vunpack.c.l.b16 %v1244
      %v1253 = vpack.c.b16 %v1252, %v1251
      %v1255 = vsel %vm1008, %v1253, 0
      %v1258 = vsel %vm1012, %v1245, 0
      %v1261 = vsel %vm1012, %v1246, 0
      %v1264 = vsel %vm1012, %v1247, 0
      %v1267 = vsel %vm1012, %v1248, 0
      %1269 = vmatprep.subr.bf16.mxu0 %v1261
      %1270 = vmatpush1.bf16.msra.mxu0 %v1258
      %1271 = vmatprep.subr.bf16.mxu0 0
      %1272 = vmatpush1.bf16.msra.mxu0 0
      %1273 = vmatprep.subr.bf16.mxu0 0
      %1274 = vmatpush1.bf16.msra.mxu0 0
      %1275 = vmatprep.subr.bf16.mxu0 0
      %1276 = vmatpush1.bf16.msra.mxu0 0
      %1277 = vmatprep.subr.bf16.mxu0 0
      %1278 = vmatpush1.bf16.msra.mxu0 0
      %1279 = vmatprep.subr.bf16.mxu0 0
      %1280 = vmatpush1.bf16.msra.mxu0 0
      %1281 = vmatprep.subr.bf16.mxu0 0
      %1282 = vmatpush1.bf16.msra.mxu0 0
      %1283 = vmatprep.subr.bf16.mxu0 0
      %1284 = vmatpush1.bf16.msra.mxu0 0
      %1285 = vmatprep.subr.bf16.mxu0 0
      %1286 = vmatpush1.bf16.msra.mxu0 0
      %1287 = vmatprep.subr.bf16.mxu0 0
      %1288 = vmatpush1.bf16.msra.mxu0 0
      %1289 = vmatprep.subr.bf16.mxu0 0
      %1290 = vmatpush1.bf16.msra.mxu0 0
      %1291 = vmatprep.subr.bf16.mxu0 0
      %1292 = vmatpush1.bf16.msra.mxu0 0
      %1293 = vmatprep.subr.bf16.mxu0 0
      %1294 = vmatpush1.bf16.msra.mxu0 0
      %1295 = vmatprep.subr.bf16.mxu0 0
      %1296 = vmatpush1.bf16.msra.mxu0 0
      %1297 = vmatprep.subr.bf16.mxu0 0
      %1298 = vmatpush1.bf16.msra.mxu0 0
      %1299 = vmatprep.subr.bf16.mxu0 0
      %1300 = vmatpush1.bf16.msra.mxu0 0
      %1301 = vmatprep.mubr.bf16.mxu0 0
      %1302 = vmatmul.mubr.bf16.gmra.mrb[0].mxu0 %v1255
      %v1303 = vpop.f32.mrb[0].mxu0
      %v1304 = vadd.f32 0.0, %v1303
      %v1305 = vpop.f32.mrb[0].mxu0
      %v1306 = vadd.f32 0.0, %v1305
      %v1307 = vpop.f32.mrb[0].mxu0
      %v1308 = vadd.f32 0.0, %v1307
      %v1309 = vpop.f32.mrb[0].mxu0
      %v1310 = vadd.f32 0.0, %v1309
      %1311 = vdwg.mxu0
      %1312 = vmatprep.subr.bf16.mxu0 %v1267
      %1313 = vmatpush1.bf16.msra.mxu0 %v1264
      %1314 = vmatprep.subr.bf16.mxu0 0
      %1315 = vmatpush1.bf16.msra.mxu0 0
      %1316 = vmatprep.subr.bf16.mxu0 0
      %1317 = vmatpush1.bf16.msra.mxu0 0
      %1318 = vmatprep.subr.bf16.mxu0 0
      %1319 = vmatpush1.bf16.msra.mxu0 0
      %1320 = vmatprep.subr.bf16.mxu0 0
      %1321 = vmatpush1.bf16.msra.mxu0 0
      %1322 = vmatprep.subr.bf16.mxu0 0
      %1323 = vmatpush1.bf16.msra.mxu0 0
      %1324 = vmatprep.subr.bf16.mxu0 0
      %1325 = vmatpush1.bf16.msra.mxu0 0
      %1326 = vmatprep.subr.bf16.mxu0 0
      %1327 = vmatpush1.bf16.msra.mxu0 0
      %1328 = vmatprep.subr.bf16.mxu0 0
      %1329 = vmatpush1.bf16.msra.mxu0 0
      %1330 = vmatprep.subr.bf16.mxu0 0
      %1331 = vmatpush1.bf16.msra.mxu0 0
      %1332 = vmatprep.subr.bf16.mxu0 0
      %1333 = vmatpush1.bf16.msra.mxu0 0
      %1334 = vmatprep.subr.bf16.mxu0 0
      %1335 = vmatpush1.bf16.msra.mxu0 0
      %1336 = vmatprep.subr.bf16.mxu0 0
      %1337 = vmatpush1.bf16.msra.mxu0 0
      %1338 = vmatprep.subr.bf16.mxu0 0
      %1339 = vmatpush1.bf16.msra.mxu0 0
      %1340 = vmatprep.subr.bf16.mxu0 0
      %1341 = vmatpush1.bf16.msra.mxu0 0
      %1342 = vmatprep.subr.bf16.mxu0 0
      %1343 = vmatpush1.bf16.msra.mxu0 0
      %1344 = vmatprep.mubr.bf16.mxu0 0
      %1345 = vmatmul.mubr.bf16.gmra.mrb[0].mxu0 %v1255
      %v1346 = vpop.f32.mrb[0].mxu0
      %v1347 = vadd.f32 0.0, %v1346
      %v1348 = vpop.f32.mrb[0].mxu0
      %v1349 = vadd.f32 0.0, %v1348
      %v1350 = vpop.f32.mrb[0].mxu0
      %v1351 = vadd.f32 0.0, %v1350
      %v1352 = vpop.f32.mrb[0].mxu0
      %v1353 = vadd.f32 0.0, %v1352
      %1354 = vdwg.mxu0
      %v1355 = vadd.f32 %v1166, %v1304
      %v1356 = vadd.f32 %v1168, %v1306
      %v1357 = vadd.f32 %v1209, %v1347
      %v1358 = vadd.f32 %v1211, %v1349
      %v1359 = vadd.f32 %v1170, %v1308
      %v1360 = vadd.f32 %v1172, %v1310
      %v1361 = vadd.f32 %v1213, %v1351
      %v1362 = vadd.f32 %v1215, %v1353
      %1363 = vrot.lane.b32.xlu0 %v952, 1
      %v1364 = vpop.permute.xlu0 %1363
      %1365 = vrot.lane.b32.xlu0 %v953, 1
      %v1366 = vpop.permute.xlu0 %1365
      %1367 = vrot.lane.b32.xlu0 %v954, 1
      %v1368 = vpop.permute.xlu0 %1367
      %1369 = vrot.lane.b32.xlu0 %v955, 1
      %v1370 = vpop.permute.xlu0 %1369
      %v1371 = vsel %vm973, %v1368, %v1370
      %v1372 = vsel %vm973, %v1366, %v1368
      %v1373 = vsel %vm973, %v1364, %v1366
      %v1374 = vsel %vm973, %v1370, %v1364
      %v1375 = vsel %vm982, %v1374, 0.0
      %v1376 = vsel %vm983, %v1373, 0.0
      %v1377 = vsel %vm984, %v1372, 0.0
      %v1378 = vsel %vm985, %v1371, 0.0
      %s1379 = scalar_lea.vmem %s4, 24
      %v1380 = vld [vmem:[%s1379] sm:$0xf]
      %v1381 = vld [vmem:[%s1379 + $0x4] sm:$0xf]
      %v1382 = vpack.c.bf16 %v1375, %v1375
      %v1383 = vpack.c.bf16 %v1376, %v1376
      %v1384 = vpack.c.bf16 %v1377, %v1377
      %v1385 = vpack.c.bf16 %v1378, %v1378
      %v1388 = vunpack.c.l.b16 %v1380
      %v1389 = vunpack.c.l.b16 %v1381
      %v1390 = vpack.c.b16 %v1389, %v1388
      %v1392 = vsel %vm1008, %v1390, 0
      %v1395 = vsel %vm1012, %v1382, 0
      %v1398 = vsel %vm1012, %v1383, 0
      %v1401 = vsel %vm1012, %v1384, 0
      %v1404 = vsel %vm1012, %v1385, 0
      %1406 = vmatprep.subr.bf16.mxu0 %v1398
      %1407 = vmatpush1.bf16.msra.mxu0 %v1395
      %1408 = vmatprep.subr.bf16.mxu0 0
      %1409 = vmatpush1.bf16.msra.mxu0 0
      %1410 = vmatprep.subr.bf16.mxu0 0
      %1411 = vmatpush1.bf16.msra.mxu0 0
      %1412 = vmatprep.subr.bf16.mxu0 0
      %1413 = vmatpush1.bf16.msra.mxu0 0
      %1414 = vmatprep.subr.bf16.mxu0 0
      %1415 = vmatpush1.bf16.msra.mxu0 0
      %1416 = vmatprep.subr.bf16.mxu0 0
      %1417 = vmatpush1.bf16.msra.mxu0 0
      %1418 = vmatprep.subr.bf16.mxu0 0
      %1419 = vmatpush1.bf16.msra.mxu0 0
      %1420 = vmatprep.subr.bf16.mxu0 0
      %1421 = vmatpush1.bf16.msra.mxu0 0
      %1422 = vmatprep.subr.bf16.mxu0 0
      %1423 = vmatpush1.bf16.msra.mxu0 0
      %1424 = vmatprep.subr.bf16.mxu0 0
      %1425 = vmatpush1.bf16.msra.mxu0 0
      %1426 = vmatprep.subr.bf16.mxu0 0
      %1427 = vmatpush1.bf16.msra.mxu0 0
      %1428 = vmatprep.subr.bf16.mxu0 0
      %1429 = vmatpush1.bf16.msra.mxu0 0
      %1430 = vmatprep.subr.bf16.mxu0 0
      %1431 = vmatpush1.bf16.msra.mxu0 0
      %1432 = vmatprep.subr.bf16.mxu0 0
      %1433 = vmatpush1.bf16.msra.mxu0 0
      %1434 = vmatprep.subr.bf16.mxu0 0
      %1435 = vmatpush1.bf16.msra.mxu0 0
      %1436 = vmatprep.subr.bf16.mxu0 0
      %1437 = vmatpush1.bf16.msra.mxu0 0
      %1438 = vmatprep.mubr.bf16.mxu0 0
      %1439 = vmatmul.mubr.bf16.gmra.mrb[0].mxu0 %v1392
      %v1440 = vpop.f32.mrb[0].mxu0
      %v1441 = vadd.f32 0.0, %v1440
      %v1442 = vpop.f32.mrb[0].mxu0
      %v1443 = vadd.f32 0.0, %v1442
      %v1444 = vpop.f32.mrb[0].mxu0
      %v1445 = vadd.f32 0.0, %v1444
      %v1446 = vpop.f32.mrb[0].mxu0
      %v1447 = vadd.f32 0.0, %v1446
      %1448 = vdwg.mxu0
      %1449 = vmatprep.subr.bf16.mxu0 %v1404
      %1450 = vmatpush1.bf16.msra.mxu0 %v1401
      %1451 = vmatprep.subr.bf16.mxu0 0
      %1452 = vmatpush1.bf16.msra.mxu0 0
      %1453 = vmatprep.subr.bf16.mxu0 0
      %1454 = vmatpush1.bf16.msra.mxu0 0
      %1455 = vmatprep.subr.bf16.mxu0 0
      %1456 = vmatpush1.bf16.msra.mxu0 0
      %1457 = vmatprep.subr.bf16.mxu0 0
      %1458 = vmatpush1.bf16.msra.mxu0 0
      %1459 = vmatprep.subr.bf16.mxu0 0
      %1460 = vmatpush1.bf16.msra.mxu0 0
      %1461 = vmatprep.subr.bf16.mxu0 0
      %1462 = vmatpush1.bf16.msra.mxu0 0
      %1463 = vmatprep.subr.bf16.mxu0 0
      %1464 = vmatpush1.bf16.msra.mxu0 0
      %1465 = vmatprep.subr.bf16.mxu0 0
      %1466 = vmatpush1.bf16.msra.mxu0 0
      %1467 = vmatprep.subr.bf16.mxu0 0
      %1468 = vmatpush1.bf16.msra.mxu0 0
      %1469 = vmatprep.subr.bf16.mxu0 0
      %1470 = vmatpush1.bf16.msra.mxu0 0
      %1471 = vmatprep.subr.bf16.mxu0 0
      %1472 = vmatpush1.bf16.msra.mxu0 0
      %1473 = vmatprep.subr.bf16.mxu0 0
      %1474 = vmatpush1.bf16.msra.mxu0 0
      %1475 = vmatprep.subr.bf16.mxu0 0
      %1476 = vmatpush1.bf16.msra.mxu0 0
      %1477 = vmatprep.subr.bf16.mxu0 0
      %1478 = vmatpush1.bf16.msra.mxu0 0
      %1479 = vmatprep.subr.bf16.mxu0 0
      %1480 = vmatpush1.bf16.msra.mxu0 0
      %1481 = vmatprep.mubr.bf16.mxu0 0
      %1482 = vmatmul.mubr.bf16.gmra.mrb[0].mxu0 %v1392
      %v1483 = vpop.f32.mrb[0].mxu0
      %v1484 = vadd.f32 0.0, %v1483
      %v1485 = vpop.f32.mrb[0].mxu0
      %v1486 = vadd.f32 0.0, %v1485
      %v1487 = vpop.f32.mrb[0].mxu0
      %v1488 = vadd.f32 0.0, %v1487
      %v1489 = vpop.f32.mrb[0].mxu0
      %v1490 = vadd.f32 0.0, %v1489
      %1491 = vdwg.mxu0
      %v1492 = vadd.f32 %v1355, %v1441
      %v1493 = vadd.f32 %v1356, %v1443
      %v1494 = vadd.f32 %v1357, %v1484
      %v1495 = vadd.f32 %v1358, %v1486
      %v1496 = vadd.f32 %v1359, %v1445
      %v1497 = vadd.f32 %v1360, %v1447
      %v1498 = vadd.f32 %v1361, %v1488
      %v1499 = vadd.f32 %v1362, %v1490
      %s1500 = scalar_lea.vmem %s4, 32
      %v1501 = vld [vmem:[%s1500] sm:$0xf]
      %v1502 = vld [vmem:[%s1500 + $0x4] sm:$0xf]
      %v1503 = vpack.c.bf16 %v952, %v952
      %v1504 = vpack.c.bf16 %v953, %v953
      %v1505 = vpack.c.bf16 %v954, %v954
      %v1506 = vpack.c.bf16 %v955, %v955
      %v1509 = vunpack.c.l.b16 %v1501
      %v1510 = vunpack.c.l.b16 %v1502
      %v1511 = vpack.c.b16 %v1510, %v1509
      %v1513 = vsel %vm1008, %v1511, 0
      %v1516 = vsel %vm1012, %v1503, 0
      %v1519 = vsel %vm1012, %v1504, 0
      %v1522 = vsel %vm1012, %v1505, 0
      %v1525 = vsel %vm1012, %v1506, 0
      %1527 = vmatprep.subr.bf16.mxu0 %v1519
      %1528 = vmatpush1.bf16.msra.mxu0 %v1516
      %1529 = vmatprep.subr.bf16.mxu0 0
      %1530 = vmatpush1.bf16.msra.mxu0 0
      %1531 = vmatprep.subr.bf16.mxu0 0
      %1532 = vmatpush1.bf16.msra.mxu0 0
      %1533 = vmatprep.subr.bf16.mxu0 0
      %1534 = vmatpush1.bf16.msra.mxu0 0
      %1535 = vmatprep.subr.bf16.mxu0 0
      %1536 = vmatpush1.bf16.msra.mxu0 0
      %1537 = vmatprep.subr.bf16.mxu0 0
      %1538 = vmatpush1.bf16.msra.mxu0 0
      %1539 = vmatprep.subr.bf16.mxu0 0
      %1540 = vmatpush1.bf16.msra.mxu0 0
      %1541 = vmatprep.subr.bf16.mxu0 0
      %1542 = vmatpush1.bf16.msra.mxu0 0
      %1543 = vmatprep.subr.bf16.mxu0 0
      %1544 = vmatpush1.bf16.msra.mxu0 0
      %1545 = vmatprep.subr.bf16.mxu0 0
      %1546 = vmatpush1.bf16.msra.mxu0 0
      %1547 = vmatprep.subr.bf16.mxu0 0
      %1548 = vmatpush1.bf16.msra.mxu0 0
      %1549 = vmatprep.subr.bf16.mxu0 0
      %1550 = vmatpush1.bf16.msra.mxu0 0
      %1551 = vmatprep.subr.bf16.mxu0 0
      %1552 = vmatpush1.bf16.msra.mxu0 0
      %1553 = vmatprep.subr.bf16.mxu0 0
      %1554 = vmatpush1.bf16.msra.mxu0 0
      %1555 = vmatprep.subr.bf16.mxu0 0
      %1556 = vmatpush1.bf16.msra.mxu0 0
      %1557 = vmatprep.subr.bf16.mxu0 0
      %1558 = vmatpush1.bf16.msra.mxu0 0
      %1559 = vmatprep.mubr.bf16.mxu0 0
      %1560 = vmatmul.mubr.bf16.gmra.mrb[0].mxu0 %v1513
      %v1561 = vpop.f32.mrb[0].mxu0
      %v1562 = vadd.f32 0.0, %v1561
      %v1563 = vpop.f32.mrb[0].mxu0
      %v1564 = vadd.f32 0.0, %v1563
      %v1565 = vpop.f32.mrb[0].mxu0
      %v1566 = vadd.f32 0.0, %v1565
      %v1567 = vpop.f32.mrb[0].mxu0
      %v1568 = vadd.f32 0.0, %v1567
      %1569 = vdwg.mxu0
      %1570 = vmatprep.subr.bf16.mxu0 %v1525
      %1571 = vmatpush1.bf16.msra.mxu0 %v1522
      %1572 = vmatprep.subr.bf16.mxu0 0
      %1573 = vmatpush1.bf16.msra.mxu0 0
      %1574 = vmatprep.subr.bf16.mxu0 0
      %1575 = vmatpush1.bf16.msra.mxu0 0
      %1576 = vmatprep.subr.bf16.mxu0 0
      %1577 = vmatpush1.bf16.msra.mxu0 0
      %1578 = vmatprep.subr.bf16.mxu0 0
      %1579 = vmatpush1.bf16.msra.mxu0 0
      %1580 = vmatprep.subr.bf16.mxu0 0
      %1581 = vmatpush1.bf16.msra.mxu0 0
      %1582 = vmatprep.subr.bf16.mxu0 0
      %1583 = vmatpush1.bf16.msra.mxu0 0
      %1584 = vmatprep.subr.bf16.mxu0 0
      %1585 = vmatpush1.bf16.msra.mxu0 0
      %1586 = vmatprep.subr.bf16.mxu0 0
      %1587 = vmatpush1.bf16.msra.mxu0 0
      %1588 = vmatprep.subr.bf16.mxu0 0
      %1589 = vmatpush1.bf16.msra.mxu0 0
      %1590 = vmatprep.subr.bf16.mxu0 0
      %1591 = vmatpush1.bf16.msra.mxu0 0
      %1592 = vmatprep.subr.bf16.mxu0 0
      %1593 = vmatpush1.bf16.msra.mxu0 0
      %1594 = vmatprep.subr.bf16.mxu0 0
      %1595 = vmatpush1.bf16.msra.mxu0 0
      %1596 = vmatprep.subr.bf16.mxu0 0
      %1597 = vmatpush1.bf16.msra.mxu0 0
      %1598 = vmatprep.subr.bf16.mxu0 0
      %1599 = vmatpush1.bf16.msra.mxu0 0
      %1600 = vmatprep.subr.bf16.mxu0 0
      %1601 = vmatpush1.bf16.msra.mxu0 0
      %1602 = vmatprep.mubr.bf16.mxu0 0
      %1603 = vmatmul.mubr.bf16.gmra.mrb[0].mxu0 %v1513
      %v1604 = vpop.f32.mrb[0].mxu0
      %v1605 = vadd.f32 0.0, %v1604
      %v1606 = vpop.f32.mrb[0].mxu0
      %v1607 = vadd.f32 0.0, %v1606
      %v1608 = vpop.f32.mrb[0].mxu0
      %v1609 = vadd.f32 0.0, %v1608
      %v1610 = vpop.f32.mrb[0].mxu0
      %v1611 = vadd.f32 0.0, %v1610
      %1612 = vdwg.mxu0
      %v1613 = vadd.f32 %v1492, %v1562
      %v1614 = vadd.f32 %v1493, %v1564
      %v1615 = vadd.f32 %v1494, %v1605
      %v1616 = vadd.f32 %v1495, %v1607
      %v1617 = vadd.f32 %v1496, %v1566
      %v1618 = vadd.f32 %v1497, %v1568
      %v1619 = vadd.f32 %v1498, %v1609
      %v1620 = vadd.f32 %v1499, %v1611
      %1621 = vrot.lane.b32.xlu0 %v952, 127
      %v1622 = vpop.permute.xlu0 %1621
      %1623 = vrot.lane.b32.xlu0 %v953, 127
      %v1624 = vpop.permute.xlu0 %1623
      %1625 = vrot.lane.b32.xlu0 %v954, 127
      %v1626 = vpop.permute.xlu0 %1625
      %1627 = vrot.lane.b32.xlu0 %v955, 127
      %v1628 = vpop.permute.xlu0 %1627
      %v1629 = vsel %vm1225, %v1626, %v1628
      %v1630 = vsel %vm1225, %v1624, %v1626
      %v1631 = vsel %vm1225, %v1622, %v1624
      %v1632 = vsel %vm1225, %v1628, %v1622
      %v1633 = vsel %vm1234, %v1631, 0.0
      %v1634 = vsel %vm1235, %v1630, 0.0
      %v1635 = vsel %vm1236, %v1629, 0.0
      %v1636 = vsel %vm1237, %v1632, 0.0
      %s1637 = scalar_lea.vmem %s4, 40
      %v1638 = vld [vmem:[%s1637] sm:$0xf]
      %v1639 = vld [vmem:[%s1637 + $0x4] sm:$0xf]
      %v1640 = vpack.c.bf16 %v1633, %v1633
      %v1641 = vpack.c.bf16 %v1634, %v1634
      %v1642 = vpack.c.bf16 %v1635, %v1635
      %v1643 = vpack.c.bf16 %v1636, %v1636
      %v1646 = vunpack.c.l.b16 %v1638
      %v1647 = vunpack.c.l.b16 %v1639
      %v1648 = vpack.c.b16 %v1647, %v1646
      %v1650 = vsel %vm1008, %v1648, 0
      %v1653 = vsel %vm1012, %v1640, 0
      %v1656 = vsel %vm1012, %v1641, 0
      %v1659 = vsel %vm1012, %v1642, 0
      %v1662 = vsel %vm1012, %v1643, 0
      %1664 = vmatprep.subr.bf16.mxu0 %v1656
      %1665 = vmatpush1.bf16.msra.mxu0 %v1653
      %1666 = vmatprep.subr.bf16.mxu0 0
      %1667 = vmatpush1.bf16.msra.mxu0 0
      %1668 = vmatprep.subr.bf16.mxu0 0
      %1669 = vmatpush1.bf16.msra.mxu0 0
      %1670 = vmatprep.subr.bf16.mxu0 0
      %1671 = vmatpush1.bf16.msra.mxu0 0
      %1672 = vmatprep.subr.bf16.mxu0 0
      %1673 = vmatpush1.bf16.msra.mxu0 0
      %1674 = vmatprep.subr.bf16.mxu0 0
      %1675 = vmatpush1.bf16.msra.mxu0 0
      %1676 = vmatprep.subr.bf16.mxu0 0
      %1677 = vmatpush1.bf16.msra.mxu0 0
      %1678 = vmatprep.subr.bf16.mxu0 0
      %1679 = vmatpush1.bf16.msra.mxu0 0
      %1680 = vmatprep.subr.bf16.mxu0 0
      %1681 = vmatpush1.bf16.msra.mxu0 0
      %1682 = vmatprep.subr.bf16.mxu0 0
      %1683 = vmatpush1.bf16.msra.mxu0 0
      %1684 = vmatprep.subr.bf16.mxu0 0
      %1685 = vmatpush1.bf16.msra.mxu0 0
      %1686 = vmatprep.subr.bf16.mxu0 0
      %1687 = vmatpush1.bf16.msra.mxu0 0
      %1688 = vmatprep.subr.bf16.mxu0 0
      %1689 = vmatpush1.bf16.msra.mxu0 0
      %1690 = vmatprep.subr.bf16.mxu0 0
      %1691 = vmatpush1.bf16.msra.mxu0 0
      %1692 = vmatprep.subr.bf16.mxu0 0
      %1693 = vmatpush1.bf16.msra.mxu0 0
      %1694 = vmatprep.subr.bf16.mxu0 0
      %1695 = vmatpush1.bf16.msra.mxu0 0
      %1696 = vmatprep.mubr.bf16.mxu0 0
      %1697 = vmatmul.mubr.bf16.gmra.mrb[0].mxu0 %v1650
      %v1698 = vpop.f32.mrb[0].mxu0
      %v1699 = vadd.f32 0.0, %v1698
      %v1700 = vpop.f32.mrb[0].mxu0
      %v1701 = vadd.f32 0.0, %v1700
      %v1702 = vpop.f32.mrb[0].mxu0
      %v1703 = vadd.f32 0.0, %v1702
      %v1704 = vpop.f32.mrb[0].mxu0
      %v1705 = vadd.f32 0.0, %v1704
      %1706 = vdwg.mxu0
      %1707 = vmatprep.subr.bf16.mxu0 %v1662
      %1708 = vmatpush1.bf16.msra.mxu0 %v1659
      %1709 = vmatprep.subr.bf16.mxu0 0
      %1710 = vmatpush1.bf16.msra.mxu0 0
      %1711 = vmatprep.subr.bf16.mxu0 0
      %1712 = vmatpush1.bf16.msra.mxu0 0
      %1713 = vmatprep.subr.bf16.mxu0 0
      %1714 = vmatpush1.bf16.msra.mxu0 0
      %1715 = vmatprep.subr.bf16.mxu0 0
      %1716 = vmatpush1.bf16.msra.mxu0 0
      %1717 = vmatprep.subr.bf16.mxu0 0
      %1718 = vmatpush1.bf16.msra.mxu0 0
      %1719 = vmatprep.subr.bf16.mxu0 0
      %1720 = vmatpush1.bf16.msra.mxu0 0
      %1721 = vmatprep.subr.bf16.mxu0 0
      %1722 = vmatpush1.bf16.msra.mxu0 0
      %1723 = vmatprep.subr.bf16.mxu0 0
      %1724 = vmatpush1.bf16.msra.mxu0 0
      %1725 = vmatprep.subr.bf16.mxu0 0
      %1726 = vmatpush1.bf16.msra.mxu0 0
      %1727 = vmatprep.subr.bf16.mxu0 0
      %1728 = vmatpush1.bf16.msra.mxu0 0
      %1729 = vmatprep.subr.bf16.mxu0 0
      %1730 = vmatpush1.bf16.msra.mxu0 0
      %1731 = vmatprep.subr.bf16.mxu0 0
      %1732 = vmatpush1.bf16.msra.mxu0 0
      %1733 = vmatprep.subr.bf16.mxu0 0
      %1734 = vmatpush1.bf16.msra.mxu0 0
      %1735 = vmatprep.subr.bf16.mxu0 0
      %1736 = vmatpush1.bf16.msra.mxu0 0
      %1737 = vmatprep.subr.bf16.mxu0 0
      %1738 = vmatpush1.bf16.msra.mxu0 0
      %1739 = vmatprep.mubr.bf16.mxu0 0
      %1740 = vmatmul.mubr.bf16.gmra.mrb[0].mxu0 %v1650
      %v1741 = vpop.f32.mrb[0].mxu0
      %v1742 = vadd.f32 0.0, %v1741
      %v1743 = vpop.f32.mrb[0].mxu0
      %v1744 = vadd.f32 0.0, %v1743
      %v1745 = vpop.f32.mrb[0].mxu0
      %v1746 = vadd.f32 0.0, %v1745
      %v1747 = vpop.f32.mrb[0].mxu0
      %v1748 = vadd.f32 0.0, %v1747
      %1749 = vdwg.mxu0
      %v1750 = vadd.f32 %v1613, %v1699
      %v1751 = vadd.f32 %v1614, %v1701
      %v1752 = vadd.f32 %v1615, %v1742
      %v1753 = vadd.f32 %v1616, %v1744
      %v1754 = vadd.f32 %v1617, %v1703
      %v1755 = vadd.f32 %v1618, %v1705
      %v1756 = vadd.f32 %v1619, %v1746
      %v1757 = vadd.f32 %v1620, %v1748
      %1758 = vrot.lane.b32.xlu0 %v961, 1
      %v1759 = vpop.permute.xlu0 %1758
      %1760 = vrot.lane.b32.xlu0 %v962, 1
      %v1761 = vpop.permute.xlu0 %1760
      %1762 = vrot.lane.b32.xlu0 %v963, 1
      %v1763 = vpop.permute.xlu0 %1762
      %1764 = vrot.lane.b32.xlu0 %v964, 1
      %v1765 = vpop.permute.xlu0 %1764
      %v1766 = vsel %vm973, %v1763, %v1765
      %v1767 = vsel %vm973, %v1761, %v1763
      %v1768 = vsel %vm973, %v1759, %v1761
      %v1769 = vsel %vm973, %v1765, %v1759
      %v1770 = vsel %vm982, %v1769, 0.0
      %v1771 = vsel %vm983, %v1768, 0.0
      %v1772 = vsel %vm984, %v1767, 0.0
      %v1773 = vsel %vm985, %v1766, 0.0
      %s1774 = scalar_lea.vmem %s4, 48
      %v1775 = vld [vmem:[%s1774] sm:$0xf]
      %v1776 = vld [vmem:[%s1774 + $0x4] sm:$0xf]
      %v1777 = vpack.c.bf16 %v1770, %v1770
      %v1778 = vpack.c.bf16 %v1771, %v1771
      %v1779 = vpack.c.bf16 %v1772, %v1772
      %v1780 = vpack.c.bf16 %v1773, %v1773
      %v1783 = vunpack.c.l.b16 %v1775
      %v1784 = vunpack.c.l.b16 %v1776
      %v1785 = vpack.c.b16 %v1784, %v1783
      %v1787 = vsel %vm1008, %v1785, 0
      %v1790 = vsel %vm1012, %v1777, 0
      %v1793 = vsel %vm1012, %v1778, 0
      %v1796 = vsel %vm1012, %v1779, 0
      %v1799 = vsel %vm1012, %v1780, 0
      %1801 = vmatprep.subr.bf16.mxu0 %v1793
      %1802 = vmatpush1.bf16.msra.mxu0 %v1790
      %1803 = vmatprep.subr.bf16.mxu0 0
      %1804 = vmatpush1.bf16.msra.mxu0 0
      %1805 = vmatprep.subr.bf16.mxu0 0
      %1806 = vmatpush1.bf16.msra.mxu0 0
      %1807 = vmatprep.subr.bf16.mxu0 0
      %1808 = vmatpush1.bf16.msra.mxu0 0
      %1809 = vmatprep.subr.bf16.mxu0 0
      %1810 = vmatpush1.bf16.msra.mxu0 0
      %1811 = vmatprep.subr.bf16.mxu0 0
      %1812 = vmatpush1.bf16.msra.mxu0 0
      %1813 = vmatprep.subr.bf16.mxu0 0
      %1814 = vmatpush1.bf16.msra.mxu0 0
      %1815 = vmatprep.subr.bf16.mxu0 0
      %1816 = vmatpush1.bf16.msra.mxu0 0
      %1817 = vmatprep.subr.bf16.mxu0 0
      %1818 = vmatpush1.bf16.msra.mxu0 0
      %1819 = vmatprep.subr.bf16.mxu0 0
      %1820 = vmatpush1.bf16.msra.mxu0 0
      %1821 = vmatprep.subr.bf16.mxu0 0
      %1822 = vmatpush1.bf16.msra.mxu0 0
      %1823 = vmatprep.subr.bf16.mxu0 0
      %1824 = vmatpush1.bf16.msra.mxu0 0
      %1825 = vmatprep.subr.bf16.mxu0 0
      %1826 = vmatpush1.bf16.msra.mxu0 0
      %1827 = vmatprep.subr.bf16.mxu0 0
      %1828 = vmatpush1.bf16.msra.mxu0 0
      %1829 = vmatprep.subr.bf16.mxu0 0
      %1830 = vmatpush1.bf16.msra.mxu0 0
      %1831 = vmatprep.subr.bf16.mxu0 0
      %1832 = vmatpush1.bf16.msra.mxu0 0
      %1833 = vmatprep.mubr.bf16.mxu0 0
      %1834 = vmatmul.mubr.bf16.gmra.mrb[0].mxu0 %v1787
      %v1835 = vpop.f32.mrb[0].mxu0
      %v1836 = vadd.f32 0.0, %v1835
      %v1837 = vpop.f32.mrb[0].mxu0
      %v1838 = vadd.f32 0.0, %v1837
      %v1839 = vpop.f32.mrb[0].mxu0
      %v1840 = vadd.f32 0.0, %v1839
      %v1841 = vpop.f32.mrb[0].mxu0
      %v1842 = vadd.f32 0.0, %v1841
      %1843 = vdwg.mxu0
      %1844 = vmatprep.subr.bf16.mxu0 %v1799
      %1845 = vmatpush1.bf16.msra.mxu0 %v1796
      %1846 = vmatprep.subr.bf16.mxu0 0
      %1847 = vmatpush1.bf16.msra.mxu0 0
      %1848 = vmatprep.subr.bf16.mxu0 0
      %1849 = vmatpush1.bf16.msra.mxu0 0
      %1850 = vmatprep.subr.bf16.mxu0 0
      %1851 = vmatpush1.bf16.msra.mxu0 0
      %1852 = vmatprep.subr.bf16.mxu0 0
      %1853 = vmatpush1.bf16.msra.mxu0 0
      %1854 = vmatprep.subr.bf16.mxu0 0
      %1855 = vmatpush1.bf16.msra.mxu0 0
      %1856 = vmatprep.subr.bf16.mxu0 0
      %1857 = vmatpush1.bf16.msra.mxu0 0
      %1858 = vmatprep.subr.bf16.mxu0 0
      %1859 = vmatpush1.bf16.msra.mxu0 0
      %1860 = vmatprep.subr.bf16.mxu0 0
      %1861 = vmatpush1.bf16.msra.mxu0 0
      %1862 = vmatprep.subr.bf16.mxu0 0
      %1863 = vmatpush1.bf16.msra.mxu0 0
      %1864 = vmatprep.subr.bf16.mxu0 0
      %1865 = vmatpush1.bf16.msra.mxu0 0
      %1866 = vmatprep.subr.bf16.mxu0 0
      %1867 = vmatpush1.bf16.msra.mxu0 0
      %1868 = vmatprep.subr.bf16.mxu0 0
      %1869 = vmatpush1.bf16.msra.mxu0 0
      %1870 = vmatprep.subr.bf16.mxu0 0
      %1871 = vmatpush1.bf16.msra.mxu0 0
      %1872 = vmatprep.subr.bf16.mxu0 0
      %1873 = vmatpush1.bf16.msra.mxu0 0
      %1874 = vmatprep.subr.bf16.mxu0 0
      %1875 = vmatpush1.bf16.msra.mxu0 0
      %1876 = vmatprep.mubr.bf16.mxu0 0
      %1877 = vmatmul.mubr.bf16.gmra.mrb[0].mxu0 %v1787
      %v1878 = vpop.f32.mrb[0].mxu0
      %v1879 = vadd.f32 0.0, %v1878
      %v1880 = vpop.f32.mrb[0].mxu0
      %v1881 = vadd.f32 0.0, %v1880
      %v1882 = vpop.f32.mrb[0].mxu0
      %v1883 = vadd.f32 0.0, %v1882
      %v1884 = vpop.f32.mrb[0].mxu0
      %v1885 = vadd.f32 0.0, %v1884
      %1886 = vdwg.mxu0
      %v1887 = vadd.f32 %v1750, %v1836
      %v1888 = vadd.f32 %v1751, %v1838
      %v1889 = vadd.f32 %v1752, %v1879
      %v1890 = vadd.f32 %v1753, %v1881
      %v1891 = vadd.f32 %v1754, %v1840
      %v1892 = vadd.f32 %v1755, %v1842
      %v1893 = vadd.f32 %v1756, %v1883
      %v1894 = vadd.f32 %v1757, %v1885
      %s1895 = scalar_lea.vmem %s4, 56
      %v1896 = vld [vmem:[%s1895] sm:$0xf]
      %v1897 = vld [vmem:[%s1895 + $0x4] sm:$0xf]
      %v1898 = vpack.c.bf16 %v961, %v961
      %v1899 = vpack.c.bf16 %v962, %v962
      %v1900 = vpack.c.bf16 %v963, %v963
      %v1901 = vpack.c.bf16 %v964, %v964
      %v1904 = vunpack.c.l.b16 %v1896
      %v1905 = vunpack.c.l.b16 %v1897
      %v1906 = vpack.c.b16 %v1905, %v1904
      %v1908 = vsel %vm1008, %v1906, 0
      %v1911 = vsel %vm1012, %v1898, 0
      %v1914 = vsel %vm1012, %v1899, 0
      %v1917 = vsel %vm1012, %v1900, 0
      %v1920 = vsel %vm1012, %v1901, 0
      %1922 = vmatprep.subr.bf16.mxu0 %v1914
      %1923 = vmatpush1.bf16.msra.mxu0 %v1911
      %1924 = vmatprep.subr.bf16.mxu0 0
      %1925 = vmatpush1.bf16.msra.mxu0 0
      %1926 = vmatprep.subr.bf16.mxu0 0
      %1927 = vmatpush1.bf16.msra.mxu0 0
      %1928 = vmatprep.subr.bf16.mxu0 0
      %1929 = vmatpush1.bf16.msra.mxu0 0
      %1930 = vmatprep.subr.bf16.mxu0 0
      %1931 = vmatpush1.bf16.msra.mxu0 0
      %1932 = vmatprep.subr.bf16.mxu0 0
      %1933 = vmatpush1.bf16.msra.mxu0 0
      %1934 = vmatprep.subr.bf16.mxu0 0
      %1935 = vmatpush1.bf16.msra.mxu0 0
      %1936 = vmatprep.subr.bf16.mxu0 0
      %1937 = vmatpush1.bf16.msra.mxu0 0
      %1938 = vmatprep.subr.bf16.mxu0 0
      %1939 = vmatpush1.bf16.msra.mxu0 0
      %1940 = vmatprep.subr.bf16.mxu0 0
      %1941 = vmatpush1.bf16.msra.mxu0 0
      %1942 = vmatprep.subr.bf16.mxu0 0
      %1943 = vmatpush1.bf16.msra.mxu0 0
      %1944 = vmatprep.subr.bf16.mxu0 0
      %1945 = vmatpush1.bf16.msra.mxu0 0
      %1946 = vmatprep.subr.bf16.mxu0 0
      %1947 = vmatpush1.bf16.msra.mxu0 0
      %1948 = vmatprep.subr.bf16.mxu0 0
      %1949 = vmatpush1.bf16.msra.mxu0 0
      %1950 = vmatprep.subr.bf16.mxu0 0
      %1951 = vmatpush1.bf16.msra.mxu0 0
      %1952 = vmatprep.subr.bf16.mxu0 0
      %1953 = vmatpush1.bf16.msra.mxu0 0
      %1954 = vmatprep.mubr.bf16.mxu0 0
      %1955 = vmatmul.mubr.bf16.gmra.mrb[0].mxu0 %v1908
      %v1956 = vpop.f32.mrb[0].mxu0
      %v1957 = vadd.f32 0.0, %v1956
      %v1958 = vpop.f32.mrb[0].mxu0
      %v1959 = vadd.f32 0.0, %v1958
      %v1960 = vpop.f32.mrb[0].mxu0
      %v1961 = vadd.f32 0.0, %v1960
      %v1962 = vpop.f32.mrb[0].mxu0
      %v1963 = vadd.f32 0.0, %v1962
      %1964 = vdwg.mxu0
      %1965 = vmatprep.subr.bf16.mxu0 %v1920
      %1966 = vmatpush1.bf16.msra.mxu0 %v1917
      %1967 = vmatprep.subr.bf16.mxu0 0
      %1968 = vmatpush1.bf16.msra.mxu0 0
      %1969 = vmatprep.subr.bf16.mxu0 0
      %1970 = vmatpush1.bf16.msra.mxu0 0
      %1971 = vmatprep.subr.bf16.mxu0 0
      %1972 = vmatpush1.bf16.msra.mxu0 0
      %1973 = vmatprep.subr.bf16.mxu0 0
      %1974 = vmatpush1.bf16.msra.mxu0 0
      %1975 = vmatprep.subr.bf16.mxu0 0
      %1976 = vmatpush1.bf16.msra.mxu0 0
      %1977 = vmatprep.subr.bf16.mxu0 0
      %1978 = vmatpush1.bf16.msra.mxu0 0
      %1979 = vmatprep.subr.bf16.mxu0 0
      %1980 = vmatpush1.bf16.msra.mxu0 0
      %1981 = vmatprep.subr.bf16.mxu0 0
      %1982 = vmatpush1.bf16.msra.mxu0 0
      %1983 = vmatprep.subr.bf16.mxu0 0
      %1984 = vmatpush1.bf16.msra.mxu0 0
      %1985 = vmatprep.subr.bf16.mxu0 0
      %1986 = vmatpush1.bf16.msra.mxu0 0
      %1987 = vmatprep.subr.bf16.mxu0 0
      %1988 = vmatpush1.bf16.msra.mxu0 0
      %1989 = vmatprep.subr.bf16.mxu0 0
      %1990 = vmatpush1.bf16.msra.mxu0 0
      %1991 = vmatprep.subr.bf16.mxu0 0
      %1992 = vmatpush1.bf16.msra.mxu0 0
      %1993 = vmatprep.subr.bf16.mxu0 0
      %1994 = vmatpush1.bf16.msra.mxu0 0
      %1995 = vmatprep.subr.bf16.mxu0 0
      %1996 = vmatpush1.bf16.msra.mxu0 0
      %1997 = vmatprep.mubr.bf16.mxu0 0
      %1998 = vmatmul.mubr.bf16.gmra.mrb[0].mxu0 %v1908
      %v1999 = vpop.f32.mrb[0].mxu0
      %v2000 = vadd.f32 0.0, %v1999
      %v2001 = vpop.f32.mrb[0].mxu0
      %v2002 = vadd.f32 0.0, %v2001
      %v2003 = vpop.f32.mrb[0].mxu0
      %v2004 = vadd.f32 0.0, %v2003
      %v2005 = vpop.f32.mrb[0].mxu0
      %v2006 = vadd.f32 0.0, %v2005
      %2007 = vdwg.mxu0
      %v2008 = vadd.f32 %v1887, %v1957
      %v2009 = vadd.f32 %v1888, %v1959
      %v2010 = vadd.f32 %v1889, %v2000
      %v2011 = vadd.f32 %v1890, %v2002
      %v2012 = vadd.f32 %v1891, %v1961
      %v2013 = vadd.f32 %v1892, %v1963
      %v2014 = vadd.f32 %v1893, %v2004
      %v2015 = vadd.f32 %v1894, %v2006
      %2016 = vrot.lane.b32.xlu0 %v961, 127
      %v2017 = vpop.permute.xlu0 %2016
      %2018 = vrot.lane.b32.xlu0 %v962, 127
      %v2019 = vpop.permute.xlu0 %2018
      %2020 = vrot.lane.b32.xlu0 %v963, 127
      %v2021 = vpop.permute.xlu0 %2020
      %2022 = vrot.lane.b32.xlu0 %v964, 127
      %v2023 = vpop.permute.xlu0 %2022
      %v2024 = vsel %vm1225, %v2021, %v2023
      %v2025 = vsel %vm1225, %v2019, %v2021
      %v2026 = vsel %vm1225, %v2017, %v2019
      %v2027 = vsel %vm1225, %v2023, %v2017
      %v2028 = vsel %vm1234, %v2026, 0.0
      %v2029 = vsel %vm1235, %v2025, 0.0
      %v2030 = vsel %vm1236, %v2024, 0.0
      %v2031 = vsel %vm1237, %v2027, 0.0
      %s2032 = scalar_lea.vmem %s4, 64
      %v2033 = vld [vmem:[%s2032] sm:$0xf]
      %v2034 = vld [vmem:[%s2032 + $0x4] sm:$0xf]
      %v2035 = vpack.c.bf16 %v2028, %v2028
      %v2036 = vpack.c.bf16 %v2029, %v2029
      %v2037 = vpack.c.bf16 %v2030, %v2030
      %v2038 = vpack.c.bf16 %v2031, %v2031
      %v2041 = vunpack.c.l.b16 %v2033
      %v2042 = vunpack.c.l.b16 %v2034
      %v2043 = vpack.c.b16 %v2042, %v2041
      %v2045 = vsel %vm1008, %v2043, 0
      %v2048 = vsel %vm1012, %v2035, 0
      %v2051 = vsel %vm1012, %v2036, 0
      %v2054 = vsel %vm1012, %v2037, 0
      %v2057 = vsel %vm1012, %v2038, 0
      %2059 = vmatprep.subr.bf16.mxu0 %v2051
      %2060 = vmatpush1.bf16.msra.mxu0 %v2048
      %2061 = vmatprep.subr.bf16.mxu0 0
      %2062 = vmatpush1.bf16.msra.mxu0 0
      %2063 = vmatprep.subr.bf16.mxu0 0
      %2064 = vmatpush1.bf16.msra.mxu0 0
      %2065 = vmatprep.subr.bf16.mxu0 0
      %2066 = vmatpush1.bf16.msra.mxu0 0
      %2067 = vmatprep.subr.bf16.mxu0 0
      %2068 = vmatpush1.bf16.msra.mxu0 0
      %2069 = vmatprep.subr.bf16.mxu0 0
      %2070 = vmatpush1.bf16.msra.mxu0 0
      %2071 = vmatprep.subr.bf16.mxu0 0
      %2072 = vmatpush1.bf16.msra.mxu0 0
      %2073 = vmatprep.subr.bf16.mxu0 0
      %2074 = vmatpush1.bf16.msra.mxu0 0
      %2075 = vmatprep.subr.bf16.mxu0 0
      %2076 = vmatpush1.bf16.msra.mxu0 0
      %2077 = vmatprep.subr.bf16.mxu0 0
      %2078 = vmatpush1.bf16.msra.mxu0 0
      %2079 = vmatprep.subr.bf16.mxu0 0
      %2080 = vmatpush1.bf16.msra.mxu0 0
      %2081 = vmatprep.subr.bf16.mxu0 0
      %2082 = vmatpush1.bf16.msra.mxu0 0
      %2083 = vmatprep.subr.bf16.mxu0 0
      %2084 = vmatpush1.bf16.msra.mxu0 0
      %2085 = vmatprep.subr.bf16.mxu0 0
      %2086 = vmatpush1.bf16.msra.mxu0 0
      %2087 = vmatprep.subr.bf16.mxu0 0
      %2088 = vmatpush1.bf16.msra.mxu0 0
      %2089 = vmatprep.subr.bf16.mxu0 0
      %2090 = vmatpush1.bf16.msra.mxu0 0
      %2091 = vmatprep.mubr.bf16.mxu0 0
      %2092 = vmatmul.mubr.bf16.gmra.mrb[0].mxu0 %v2045
      %v2093 = vpop.f32.mrb[0].mxu0
      %v2094 = vadd.f32 0.0, %v2093
      %v2095 = vpop.f32.mrb[0].mxu0
      %v2096 = vadd.f32 0.0, %v2095
      %v2097 = vpop.f32.mrb[0].mxu0
      %v2098 = vadd.f32 0.0, %v2097
      %v2099 = vpop.f32.mrb[0].mxu0
      %v2100 = vadd.f32 0.0, %v2099
      %2101 = vdwg.mxu0
      %2102 = vmatprep.subr.bf16.mxu0 %v2057
      %2103 = vmatpush1.bf16.msra.mxu0 %v2054
      %2104 = vmatprep.subr.bf16.mxu0 0
      %2105 = vmatpush1.bf16.msra.mxu0 0
      %2106 = vmatprep.subr.bf16.mxu0 0
      %2107 = vmatpush1.bf16.msra.mxu0 0
      %2108 = vmatprep.subr.bf16.mxu0 0
      %2109 = vmatpush1.bf16.msra.mxu0 0
      %2110 = vmatprep.subr.bf16.mxu0 0
      %2111 = vmatpush1.bf16.msra.mxu0 0
      %2112 = vmatprep.subr.bf16.mxu0 0
      %2113 = vmatpush1.bf16.msra.mxu0 0
      %2114 = vmatprep.subr.bf16.mxu0 0
      %2115 = vmatpush1.bf16.msra.mxu0 0
      %2116 = vmatprep.subr.bf16.mxu0 0
      %2117 = vmatpush1.bf16.msra.mxu0 0
      %2118 = vmatprep.subr.bf16.mxu0 0
      %2119 = vmatpush1.bf16.msra.mxu0 0
      %2120 = vmatprep.subr.bf16.mxu0 0
      %2121 = vmatpush1.bf16.msra.mxu0 0
      %2122 = vmatprep.subr.bf16.mxu0 0
      %2123 = vmatpush1.bf16.msra.mxu0 0
      %2124 = vmatprep.subr.bf16.mxu0 0
      %2125 = vmatpush1.bf16.msra.mxu0 0
      %2126 = vmatprep.subr.bf16.mxu0 0
      %2127 = vmatpush1.bf16.msra.mxu0 0
      %2128 = vmatprep.subr.bf16.mxu0 0
      %2129 = vmatpush1.bf16.msra.mxu0 0
      %2130 = vmatprep.subr.bf16.mxu0 0
      %2131 = vmatpush1.bf16.msra.mxu0 0
      %2132 = vmatprep.subr.bf16.mxu0 0
      %2133 = vmatpush1.bf16.msra.mxu0 0
      %2134 = vmatprep.mubr.bf16.mxu0 0
      %2135 = vmatmul.mubr.bf16.gmra.mrb[0].mxu0 %v2045
      %v2136 = vpop.f32.mrb[0].mxu0
      %v2137 = vadd.f32 0.0, %v2136
      %v2138 = vpop.f32.mrb[0].mxu0
      %v2139 = vadd.f32 0.0, %v2138
      %v2140 = vpop.f32.mrb[0].mxu0
      %v2141 = vadd.f32 0.0, %v2140
      %v2142 = vpop.f32.mrb[0].mxu0
      %v2143 = vadd.f32 0.0, %v2142
      %2144 = vdwg.mxu0
      %v2145 = vadd.f32 %v2008, %v2094
      %v2146 = vadd.f32 %v2009, %v2096
      %v2147 = vadd.f32 %v2010, %v2137
      %v2148 = vadd.f32 %v2011, %v2139
      %v2149 = vadd.f32 %v2012, %v2098
      %v2150 = vadd.f32 %v2013, %v2100
      %v2151 = vadd.f32 %v2014, %v2141
      %v2152 = vadd.f32 %v2015, %v2143
      %v2153 = vld [vmem:[%s5] sm:$0xff]
      %v2154 = vld [vmem:[%s5 + $0x8] sm:$0xff]
      %2156 = vset.pattern.permute.xlu0 0
      %2157 = vperm.xlu0 %2156, %v2153
      %v2158 = vpop.permute.xlu0 %2157
      %2161 = vset.pattern.permute.xlu0 0
      %2162 = vperm.xlu0 %2161, %v2154
      %v2163 = vpop.permute.xlu0 %2162
      %v2165 = vadd.f32 %v2145, %v2158
      %v2166 = vadd.f32 %v2146, %v2158
      %v2167 = vadd.f32 %v2147, %v2158
      %v2168 = vadd.f32 %v2148, %v2158
      %v2169 = vadd.f32 %v2149, %v2163
      %v2170 = vadd.f32 %v2150, %v2163
      %v2171 = vadd.f32 %v2151, %v2163
      %v2172 = vadd.f32 %v2152, %v2163
      %v2173 = vmax.f32 %v2165, 0.0
      %v2174 = vmax.f32 %v2166, 0.0
      %v2175 = vmax.f32 %v2167, 0.0
      %v2176 = vmax.f32 %v2168, 0.0
      %v2177 = vmax.f32 %v2169, 0.0
      %v2178 = vmax.f32 %v2170, 0.0
      %v2179 = vmax.f32 %v2171, 0.0
      %v2180 = vmax.f32 %v2172, 0.0
      %s2181 = smul.addr %s948, 8
      %s2182 = scalar_lea.vmem [#allocation3], %s2181
      %2183 = vst [vmem:[%s2182] sm:$0xff] %v2173
      %2184 = vst [vmem:[%s2182 + $0x8] sm:$0xff] %v2174
      %2185 = vst [vmem:[%s2182 + $0x10] sm:$0xff] %v2175
      %2186 = vst [vmem:[%s2182 + $0x18] sm:$0xff] %v2176
      %2187 = vst [vmem:[%s2182 + $0x210] sm:$0xff] %v2177
      %2188 = vst [vmem:[%s2182 + $0x218] sm:$0xff] %v2178
      %2189 = vst [vmem:[%s2182 + $0x220] sm:$0xff] %v2179
      %2190 = vst [vmem:[%s2182 + $0x228] sm:$0xff] %v2180
    $region49: #{eigm_forward.1} parent=1 // loop_footer
      %s937 = sadd.s32 1, %s933
    $region50: #{eigm_forward.1} parent=1 // loop_footer_branch
      %932 = sbr.rel target = $region46
    $region51: #{eigm_forward.1} parent=1 // loop_exit
      _
    loop: start=0, step=1, limit=16
    $region52: #{eigm_forward.1} parent=1 // loop_pre_header
      _
    $region53: #{eigm_forward.1} parent=1 // loop_header
      %s2192 = sphi 0, %s2196
      %p2193 = scmp.ge.s32.totalorder %s2192, 16
    $region54: #{eigm_forward.1} parent=1 // loop_header_branch
      %2195 = sbr.rel (%p2193) target = $region58
    $region55: #{eigm_forward.1} parent=1 // loop_body
      %s2197 = smul.u32 %s2192, 512
      %s2198 = sshra.s32 %s2197, 7
      %s2199 = sand.u32 %s2197, 127
      %s2200 = smul.addr %s2198, 8
      %s2201 = scalar_lea.vmem [#allocation3], %s2200
      %v2202 = vld [vmem:[%s2201] sm:$0xff]
      %v2203 = vld [vmem:[%s2201 + $0x8] sm:$0xff]
      %v2204 = vld [vmem:[%s2201 + $0x10] sm:$0xff]
      %v2205 = vld [vmem:[%s2201 + $0x18] sm:$0xff]
      %v2206 = vld [vmem:[%s2201 + $0x210] sm:$0xff]
      %v2207 = vld [vmem:[%s2201 + $0x218] sm:$0xff]
      %v2208 = vld [vmem:[%s2201 + $0x220] sm:$0xff]
      %v2209 = vld [vmem:[%s2201 + $0x228] sm:$0xff]
      %s2210 = sadd.s32 %s2197, 128
      %s2211 = sshra.s32 %s2210, 7
      %s2212 = sand.u32 %s2210, 127
      %s2213 = smul.addr %s2211, 8
      %s2214 = scalar_lea.vmem [#allocation3], %s2213
      %v2215 = vld [vmem:[%s2214] sm:$0xff]
      %v2216 = vld [vmem:[%s2214 + $0x8] sm:$0xff]
      %v2217 = vld [vmem:[%s2214 + $0x10] sm:$0xff]
      %v2218 = vld [vmem:[%s2214 + $0x18] sm:$0xff]
      %v2219 = vld [vmem:[%s2214 + $0x210] sm:$0xff]
      %v2220 = vld [vmem:[%s2214 + $0x218] sm:$0xff]
      %v2221 = vld [vmem:[%s2214 + $0x220] sm:$0xff]
      %v2222 = vld [vmem:[%s2214 + $0x228] sm:$0xff]
      %s2223 = sadd.s32 %s2197, 256
      %s2224 = sshra.s32 %s2223, 7
      %s2225 = sand.u32 %s2223, 127
      %s2226 = smul.addr %s2224, 8
      %s2227 = scalar_lea.vmem [#allocation3], %s2226
      %v2228 = vld [vmem:[%s2227] sm:$0xff]
      %v2229 = vld [vmem:[%s2227 + $0x8] sm:$0xff]
      %v2230 = vld [vmem:[%s2227 + $0x10] sm:$0xff]
      %v2231 = vld [vmem:[%s2227 + $0x18] sm:$0xff]
      %v2232 = vld [vmem:[%s2227 + $0x210] sm:$0xff]
      %v2233 = vld [vmem:[%s2227 + $0x218] sm:$0xff]
      %v2234 = vld [vmem:[%s2227 + $0x220] sm:$0xff]
      %v2235 = vld [vmem:[%s2227 + $0x228] sm:$0xff]
      %2236 = vrot.lane.b32.xlu0 %v2202, 1
      %v2237 = vpop.permute.xlu0 %2236
      %2238 = vrot.lane.b32.xlu0 %v2206, 1
      %v2239 = vpop.permute.xlu0 %2238
      %2240 = vrot.lane.b32.xlu0 %v2203, 1
      %v2241 = vpop.permute.xlu0 %2240
      %2242 = vrot.lane.b32.xlu0 %v2207, 1
      %v2243 = vpop.permute.xlu0 %2242
      %2244 = vrot.lane.b32.xlu0 %v2204, 1
      %v2245 = vpop.permute.xlu0 %2244
      %2246 = vrot.lane.b32.xlu0 %v2208, 1
      %v2247 = vpop.permute.xlu0 %2246
      %2248 = vrot.lane.b32.xlu0 %v2205, 1
      %v2249 = vpop.permute.xlu0 %2248
      %2250 = vrot.lane.b32.xlu0 %v2209, 1
      %v2251 = vpop.permute.xlu0 %2250
      %vm2252 = vcmp.lt.s32.totalorder %v46, 1
      %v2253 = vsel %vm2252, %v2245, %v2249
      %v2254 = vsel %vm2252, %v2247, %v2251
      %v2255 = vsel %vm2252, %v2241, %v2245
      %v2256 = vsel %vm2252, %v2243, %v2247
      %v2257 = vsel %vm2252, %v2237, %v2241
      %v2258 = vsel %vm2252, %v2239, %v2243
      %v2259 = vsel %vm2252, %v2249, %v2237
      %v2260 = vsel %vm2252, %v2251, %v2239
      %v2261 = vsel %vm54, 1, 0
      %v2262 = vsel %vm55, 1, 0
      %v2263 = vsel %vm56, 1, 0
      %v2264 = vsel %vm57, 1, 0
      %vm2265 = vcmp.eq.s32.totalorder %v2261, 1
      %vm2266 = vcmp.eq.s32.totalorder %v2262, 1
      %vm2267 = vcmp.eq.s32.totalorder %v2263, 1
      %vm2268 = vcmp.eq.s32.totalorder %v2264, 1
      %v2269 = vsel %vm2265, %v2259, 0.0
      %v2270 = vsel %vm2266, %v2257, 0.0
      %v2271 = vsel %vm2267, %v2255, 0.0
      %v2272 = vsel %vm2268, %v2253, 0.0
      %v2273 = vsel %vm2265, %v2260, 0.0
      %v2274 = vsel %vm2266, %v2258, 0.0
      %v2275 = vsel %vm2267, %v2256, 0.0
      %v2276 = vsel %vm2268, %v2254, 0.0
      %v2277 = vld [vmem:[%s6] sm:$0xf]
      %v2278 = vld [vmem:[%s6 + $0x4] sm:$0xf]
      %v2279 = vld [vmem:[%s6 + $0x8] sm:$0xf]
      %v2280 = vld [vmem:[%s6 + $0xc] sm:$0xf]
      %v2281 = vpack.c.bf16 %v2273, %v2269
      %v2282 = vpack.c.bf16 %v2274, %v2270
      %v2283 = vpack.c.bf16 %v2275, %v2271
      %v2284 = vpack.c.bf16 %v2276, %v2272
      %s2285 = scalar_lea.vmem %s6, 16
      %v2286 = vld [vmem:[%s2285] sm:$0xf]
      %v2287 = vld [vmem:[%s2285 + $0x4] sm:$0xf]
      %v2288 = vld [vmem:[%s2285 + $0x8] sm:$0xf]
      %v2289 = vld [vmem:[%s2285 + $0xc] sm:$0xf]
      %v2290 = vpack.c.bf16 %v2206, %v2202
      %v2291 = vpack.c.bf16 %v2207, %v2203
      %v2292 = vpack.c.bf16 %v2208, %v2204
      %v2293 = vpack.c.bf16 %v2209, %v2205
      %v2298 = vunpack.c.l.b16 %v2286
      %v2299 = vunpack.c.l.b16 %v2287
      %v2300 = vunpack.c.l.b16 %v2288
      %v2301 = vunpack.c.l.b16 %v2289
      %v2302 = vpack.c.b16 %v2299, %v2298
      %v2303 = vpack.c.b16 %v2301, %v2300
      %vm2304 = vcmask 130048
      %v2306 = vsel %vm2304, %v2302, 0
      %v2309 = vsel %vm2304, %v2303, 0
      %2311 = vmatprep.subr.bf16.mxu0 %v2291
      %2312 = vmatpush1.bf16.msra.mxu0 %v2290
      %2313 = vmatprep.subr.bf16.mxu0 0
      %2314 = vmatpush1.bf16.msra.mxu0 0
      %2315 = vmatprep.subr.bf16.mxu0 0
      %2316 = vmatpush1.bf16.msra.mxu0 0
      %2317 = vmatprep.subr.bf16.mxu0 0
      %2318 = vmatpush1.bf16.msra.mxu0 0
      %2319 = vmatprep.subr.bf16.mxu0 0
      %2320 = vmatpush1.bf16.msra.mxu0 0
      %2321 = vmatprep.subr.bf16.mxu0 0
      %2322 = vmatpush1.bf16.msra.mxu0 0
      %2323 = vmatprep.subr.bf16.mxu0 0
      %2324 = vmatpush1.bf16.msra.mxu0 0
      %2325 = vmatprep.subr.bf16.mxu0 0
      %2326 = vmatpush1.bf16.msra.mxu0 0
      %2327 = vmatprep.subr.bf16.mxu0 0
      %2328 = vmatpush1.bf16.msra.mxu0 0
      %2329 = vmatprep.subr.bf16.mxu0 0
      %2330 = vmatpush1.bf16.msra.mxu0 0
      %2331 = vmatprep.subr.bf16.mxu0 0
      %2332 = vmatpush1.bf16.msra.mxu0 0
      %2333 = vmatprep.subr.bf16.mxu0 0
      %2334 = vmatpush1.bf16.msra.mxu0 0
      %2335 = vmatprep.subr.bf16.mxu0 0
      %2336 = vmatpush1.bf16.msra.mxu0 0
      %2337 = vmatprep.subr.bf16.mxu0 0
      %2338 = vmatpush1.bf16.msra.mxu0 0
      %2339 = vmatprep.subr.bf16.mxu0 0
      %2340 = vmatpush1.bf16.msra.mxu0 0
      %2341 = vmatprep.subr.bf16.mxu0 0
      %2342 = vmatpush1.bf16.msra.mxu0 0
      %2343 = vmatprep.mubr.bf16.mxu0 0
      %2344 = vmatmul.mubr.bf16.gmra.mrb[0].mxu0 %v2306
      %v2345 = vpop.f32.mrb[0].mxu0
      %v2346 = vadd.f32 0.0, %v2345
      %v2347 = vpop.f32.mrb[0].mxu0
      %v2348 = vadd.f32 0.0, %v2347
      %v2349 = vpop.f32.mrb[0].mxu0
      %v2350 = vadd.f32 0.0, %v2349
      %v2351 = vpop.f32.mrb[0].mxu0
      %v2352 = vadd.f32 0.0, %v2351
      %2353 = vmatprep.mubr.bf16.mxu0 0
      %2354 = vmatmul.mubr.bf16.gmra.mrb[0].mxu0 %v2309
      %v2355 = vpop.f32.mrb[0].mxu0
      %v2356 = vadd.f32 0.0, %v2355
      %v2357 = vpop.f32.mrb[0].mxu0
      %v2358 = vadd.f32 0.0, %v2357
      %v2359 = vpop.f32.mrb[0].mxu0
      %v2360 = vadd.f32 0.0, %v2359
      %v2361 = vpop.f32.mrb[0].mxu0
      %v2362 = vadd.f32 0.0, %v2361
      %2363 = vdwg.mxu0
      %2364 = vmatprep.subr.bf16.mxu0 %v2293
      %2365 = vmatpush1.bf16.msra.mxu0 %v2292
      %2366 = vmatprep.subr.bf16.mxu0 0
      %2367 = vmatpush1.bf16.msra.mxu0 0
      %2368 = vmatprep.subr.bf16.mxu0 0
      %2369 = vmatpush1.bf16.msra.mxu0 0
      %2370 = vmatprep.subr.bf16.mxu0 0
      %2371 = vmatpush1.bf16.msra.mxu0 0
      %2372 = vmatprep.subr.bf16.mxu0 0
      %2373 = vmatpush1.bf16.msra.mxu0 0
      %2374 = vmatprep.subr.bf16.mxu0 0
      %2375 = vmatpush1.bf16.msra.mxu0 0
      %2376 = vmatprep.subr.bf16.mxu0 0
      %2377 = vmatpush1.bf16.msra.mxu0 0
      %2378 = vmatprep.subr.bf16.mxu0 0
      %2379 = vmatpush1.bf16.msra.mxu0 0
      %2380 = vmatprep.subr.bf16.mxu0 0
      %2381 = vmatpush1.bf16.msra.mxu0 0
      %2382 = vmatprep.subr.bf16.mxu0 0
      %2383 = vmatpush1.bf16.msra.mxu0 0
      %2384 = vmatprep.subr.bf16.mxu0 0
      %2385 = vmatpush1.bf16.msra.mxu0 0
      %2386 = vmatprep.subr.bf16.mxu0 0
      %2387 = vmatpush1.bf16.msra.mxu0 0
      %2388 = vmatprep.subr.bf16.mxu0 0
      %2389 = vmatpush1.bf16.msra.mxu0 0
      %2390 = vmatprep.subr.bf16.mxu0 0
      %2391 = vmatpush1.bf16.msra.mxu0 0
      %2392 = vmatprep.subr.bf16.mxu0 0
      %2393 = vmatpush1.bf16.msra.mxu0 0
      %2394 = vmatprep.subr.bf16.mxu0 0
      %2395 = vmatpush1.bf16.msra.mxu0 0
      %2396 = vmatprep.mubr.bf16.mxu0 0
      %2397 = vmatmul.mubr.bf16.gmra.mrb[0].mxu0 %v2306
      %v2398 = vpop.f32.mrb[0].mxu0
      %v2399 = vadd.f32 0.0, %v2398
      %v2400 = vpop.f32.mrb[0].mxu0
      %v2401 = vadd.f32 0.0, %v2400
      %v2402 = vpop.f32.mrb[0].mxu0
      %v2403 = vadd.f32 0.0, %v2402
      %v2404 = vpop.f32.mrb[0].mxu0
      %v2405 = vadd.f32 0.0, %v2404
      %2406 = vmatprep.mubr.bf16.mxu0 0
      %2407 = vmatmul.mubr.bf16.gmra.mrb[0].mxu0 %v2309
      %v2408 = vpop.f32.mrb[0].mxu0
      %v2409 = vadd.f32 0.0, %v2408
      %v2410 = vpop.f32.mrb[0].mxu0
      %v2411 = vadd.f32 0.0, %v2410
      %v2412 = vpop.f32.mrb[0].mxu0
      %v2413 = vadd.f32 0.0, %v2412
      %v2414 = vpop.f32.mrb[0].mxu0
      %v2415 = vadd.f32 0.0, %v2414
      %2416 = vdwg.mxu0
      %v2421 = vunpack.c.l.b16 %v2277
      %v2422 = vunpack.c.l.b16 %v2278
      %v2423 = vunpack.c.l.b16 %v2279
      %v2424 = vunpack.c.l.b16 %v2280
      %v2425 = vpack.c.b16 %v2422, %v2421
      %v2426 = vpack.c.b16 %v2424, %v2423
      %v2428 = vsel %vm2304, %v2425, 0
      %v2431 = vsel %vm2304, %v2426, 0
      %2433 = vmatprep.subr.bf16.mxu0 %v2282
      %2434 = vmatpush1.bf16.msra.mxu0 %v2281
      %2435 = vmatprep.subr.bf16.mxu0 0
      %2436 = vmatpush1.bf16.msra.mxu0 0
      %2437 = vmatprep.subr.bf16.mxu0 0
      %2438 = vmatpush1.bf16.msra.mxu0 0
      %2439 = vmatprep.subr.bf16.mxu0 0
      %2440 = vmatpush1.bf16.msra.mxu0 0
      %2441 = vmatprep.subr.bf16.mxu0 0
      %2442 = vmatpush1.bf16.msra.mxu0 0
      %2443 = vmatprep.subr.bf16.mxu0 0
      %2444 = vmatpush1.bf16.msra.mxu0 0
      %2445 = vmatprep.subr.bf16.mxu0 0
      %2446 = vmatpush1.bf16.msra.mxu0 0
      %2447 = vmatprep.subr.bf16.mxu0 0
      %2448 = vmatpush1.bf16.msra.mxu0 0
      %2449 = vmatprep.subr.bf16.mxu0 0
      %2450 = vmatpush1.bf16.msra.mxu0 0
      %2451 = vmatprep.subr.bf16.mxu0 0
      %2452 = vmatpush1.bf16.msra.mxu0 0
      %2453 = vmatprep.subr.bf16.mxu0 0
      %2454 = vmatpush1.bf16.msra.mxu0 0
      %2455 = vmatprep.subr.bf16.mxu0 0
      %2456 = vmatpush1.bf16.msra.mxu0 0
      %2457 = vmatprep.subr.bf16.mxu0 0
      %2458 = vmatpush1.bf16.msra.mxu0 0
      %2459 = vmatprep.subr.bf16.mxu0 0
      %2460 = vmatpush1.bf16.msra.mxu0 0
      %2461 = vmatprep.subr.bf16.mxu0 0
      %2462 = vmatpush1.bf16.msra.mxu0 0
      %2463 = vmatprep.subr.bf16.mxu0 0
      %2464 = vmatpush1.bf16.msra.mxu0 0
      %2465 = vmatprep.mubr.bf16.mxu0 0
      %2466 = vmatmul.mubr.bf16.gmra.mrb[0].mxu0 %v2428
      %v2467 = vpop.f32.mrb[0].mxu0
      %v2468 = vadd.f32 %v2346, %v2467
      %v2469 = vpop.f32.mrb[0].mxu0
      %v2470 = vadd.f32 %v2348, %v2469
      %v2471 = vpop.f32.mrb[0].mxu0
      %v2472 = vadd.f32 %v2350, %v2471
      %v2473 = vpop.f32.mrb[0].mxu0
      %v2474 = vadd.f32 %v2352, %v2473
      %2475 = vmatprep.mubr.bf16.mxu0 0
      %2476 = vmatmul.mubr.bf16.gmra.mrb[0].mxu0 %v2431
      %v2477 = vpop.f32.mrb[0].mxu0
      %v2478 = vadd.f32 %v2356, %v2477
      %v2479 = vpop.f32.mrb[0].mxu0
      %v2480 = vadd.f32 %v2358, %v2479
      %v2481 = vpop.f32.mrb[0].mxu0
      %v2482 = vadd.f32 %v2360, %v2481
      %v2483 = vpop.f32.mrb[0].mxu0
      %v2484 = vadd.f32 %v2362, %v2483
      %2485 = vdwg.mxu0
      %2486 = vmatprep.subr.bf16.mxu0 %v2284
      %2487 = vmatpush1.bf16.msra.mxu0 %v2283
      %2488 = vmatprep.subr.bf16.mxu0 0
      %2489 = vmatpush1.bf16.msra.mxu0 0
      %2490 = vmatprep.subr.bf16.mxu0 0
      %2491 = vmatpush1.bf16.msra.mxu0 0
      %2492 = vmatprep.subr.bf16.mxu0 0
      %2493 = vmatpush1.bf16.msra.mxu0 0
      %2494 = vmatprep.subr.bf16.mxu0 0
      %2495 = vmatpush1.bf16.msra.mxu0 0
      %2496 = vmatprep.subr.bf16.mxu0 0
      %2497 = vmatpush1.bf16.msra.mxu0 0
      %2498 = vmatprep.subr.bf16.mxu0 0
      %2499 = vmatpush1.bf16.msra.mxu0 0
      %2500 = vmatprep.subr.bf16.mxu0 0
      %2501 = vmatpush1.bf16.msra.mxu0 0
      %2502 = vmatprep.subr.bf16.mxu0 0
      %2503 = vmatpush1.bf16.msra.mxu0 0
      %2504 = vmatprep.subr.bf16.mxu0 0
      %2505 = vmatpush1.bf16.msra.mxu0 0
      %2506 = vmatprep.subr.bf16.mxu0 0
      %2507 = vmatpush1.bf16.msra.mxu0 0
      %2508 = vmatprep.subr.bf16.mxu0 0
      %2509 = vmatpush1.bf16.msra.mxu0 0
      %2510 = vmatprep.subr.bf16.mxu0 0
      %2511 = vmatpush1.bf16.msra.mxu0 0
      %2512 = vmatprep.subr.bf16.mxu0 0
      %2513 = vmatpush1.bf16.msra.mxu0 0
      %2514 = vmatprep.subr.bf16.mxu0 0
      %2515 = vmatpush1.bf16.msra.mxu0 0
      %2516 = vmatprep.subr.bf16.mxu0 0
      %2517 = vmatpush1.bf16.msra.mxu0 0
      %2518 = vmatprep.mubr.bf16.mxu0 0
      %2519 = vmatmul.mubr.bf16.gmra.mrb[0].mxu0 %v2428
      %v2520 = vpop.f32.mrb[0].mxu0
      %v2521 = vadd.f32 %v2399, %v2520
      %v2522 = vpop.f32.mrb[0].mxu0
      %v2523 = vadd.f32 %v2401, %v2522
      %v2524 = vpop.f32.mrb[0].mxu0
      %v2525 = vadd.f32 %v2403, %v2524
      %v2526 = vpop.f32.mrb[0].mxu0
      %v2527 = vadd.f32 %v2405, %v2526
      %2528 = vmatprep.mubr.bf16.mxu0 0
      %2529 = vmatmul.mubr.bf16.gmra.mrb[0].mxu0 %v2431
      %v2530 = vpop.f32.mrb[0].mxu0
      %v2531 = vadd.f32 %v2409, %v2530
      %v2532 = vpop.f32.mrb[0].mxu0
      %v2533 = vadd.f32 %v2411, %v2532
      %v2534 = vpop.f32.mrb[0].mxu0
      %v2535 = vadd.f32 %v2413, %v2534
      %v2536 = vpop.f32.mrb[0].mxu0
      %v2537 = vadd.f32 %v2415, %v2536
      %2538 = vdwg.mxu0
      %2539 = vrot.lane.b32.xlu0 %v2202, 127
      %v2540 = vpop.permute.xlu0 %2539
      %2541 = vrot.lane.b32.xlu0 %v2206, 127
      %v2542 = vpop.permute.xlu0 %2541
      %2543 = vrot.lane.b32.xlu0 %v2203, 127
      %v2544 = vpop.permute.xlu0 %2543
      %2545 = vrot.lane.b32.xlu0 %v2207, 127
      %v2546 = vpop.permute.xlu0 %2545
      %2547 = vrot.lane.b32.xlu0 %v2204, 127
      %v2548 = vpop.permute.xlu0 %2547
      %2549 = vrot.lane.b32.xlu0 %v2208, 127
      %v2550 = vpop.permute.xlu0 %2549
      %2551 = vrot.lane.b32.xlu0 %v2205, 127
      %v2552 = vpop.permute.xlu0 %2551
      %2553 = vrot.lane.b32.xlu0 %v2209, 127
      %v2554 = vpop.permute.xlu0 %2553
      %vm2555 = vcmp.lt.s32.totalorder %v46, 127
      %v2556 = vsel %vm2555, %v2548, %v2552
      %v2557 = vsel %vm2555, %v2550, %v2554
      %v2558 = vsel %vm2555, %v2544, %v2548
      %v2559 = vsel %vm2555, %v2546, %v2550
      %v2560 = vsel %vm2555, %v2540, %v2544
      %v2561 = vsel %vm2555, %v2542, %v2546
      %v2562 = vsel %vm2555, %v2552, %v2540
      %v2563 = vsel %vm2555, %v2554, %v2542
      %v2564 = vsel %vm58, 1, 0
      %v2565 = vsel %vm59, 1, 0
      %v2566 = vsel %vm60, 1, 0
      %v2567 = vsel %vm61, 1, 0
      %vm2568 = vcmp.eq.s32.totalorder %v2564, 1
      %vm2569 = vcmp.eq.s32.totalorder %v2565, 1
      %vm2570 = vcmp.eq.s32.totalorder %v2566, 1
      %vm2571 = vcmp.eq.s32.totalorder %v2567, 1
      %v2572 = vsel %vm2568, %v2560, 0.0
      %v2573 = vsel %vm2569, %v2558, 0.0
      %v2574 = vsel %vm2570, %v2556, 0.0
      %v2575 = vsel %vm2571, %v2562, 0.0
      %v2576 = vsel %vm2568, %v2561, 0.0
      %v2577 = vsel %vm2569, %v2559, 0.0
      %v2578 = vsel %vm2570, %v2557, 0.0
      %v2579 = vsel %vm2571, %v2563, 0.0
      %s2580 = scalar_lea.vmem %s6, 32
      %v2581 = vld [vmem:[%s2580] sm:$0xf]
      %v2582 = vld [vmem:[%s2580 + $0x4] sm:$0xf]
      %v2583 = vld [vmem:[%s2580 + $0x8] sm:$0xf]
      %v2584 = vld [vmem:[%s2580 + $0xc] sm:$0xf]
      %v2585 = vpack.c.bf16 %v2576, %v2572
      %v2586 = vpack.c.bf16 %v2577, %v2573
      %v2587 = vpack.c.bf16 %v2578, %v2574
      %v2588 = vpack.c.bf16 %v2579, %v2575
      %v2593 = vunpack.c.l.b16 %v2581
      %v2594 = vunpack.c.l.b16 %v2582
      %v2595 = vunpack.c.l.b16 %v2583
      %v2596 = vunpack.c.l.b16 %v2584
      %v2597 = vpack.c.b16 %v2594, %v2593
      %v2598 = vpack.c.b16 %v2596, %v2595
      %v2600 = vsel %vm2304, %v2597, 0
      %v2603 = vsel %vm2304, %v2598, 0
      %2605 = vmatprep.subr.bf16.mxu0 %v2586
      %2606 = vmatpush1.bf16.msra.mxu0 %v2585
      %2607 = vmatprep.subr.bf16.mxu0 0
      %2608 = vmatpush1.bf16.msra.mxu0 0
      %2609 = vmatprep.subr.bf16.mxu0 0
      %2610 = vmatpush1.bf16.msra.mxu0 0
      %2611 = vmatprep.subr.bf16.mxu0 0
      %2612 = vmatpush1.bf16.msra.mxu0 0
      %2613 = vmatprep.subr.bf16.mxu0 0
      %2614 = vmatpush1.bf16.msra.mxu0 0
      %2615 = vmatprep.subr.bf16.mxu0 0
      %2616 = vmatpush1.bf16.msra.mxu0 0
      %2617 = vmatprep.subr.bf16.mxu0 0
      %2618 = vmatpush1.bf16.msra.mxu0 0
      %2619 = vmatprep.subr.bf16.mxu0 0
      %2620 = vmatpush1.bf16.msra.mxu0 0
      %2621 = vmatprep.subr.bf16.mxu0 0
      %2622 = vmatpush1.bf16.msra.mxu0 0
      %2623 = vmatprep.subr.bf16.mxu0 0
      %2624 = vmatpush1.bf16.msra.mxu0 0
      %2625 = vmatprep.subr.bf16.mxu0 0
      %2626 = vmatpush1.bf16.msra.mxu0 0
      %2627 = vmatprep.subr.bf16.mxu0 0
      %2628 = vmatpush1.bf16.msra.mxu0 0
      %2629 = vmatprep.subr.bf16.mxu0 0
      %2630 = vmatpush1.bf16.msra.mxu0 0
      %2631 = vmatprep.subr.bf16.mxu0 0
      %2632 = vmatpush1.bf16.msra.mxu0 0
      %2633 = vmatprep.subr.bf16.mxu0 0
      %2634 = vmatpush1.bf16.msra.mxu0 0
      %2635 = vmatprep.subr.bf16.mxu0 0
      %2636 = vmatpush1.bf16.msra.mxu0 0
      %2637 = vmatprep.mubr.bf16.mxu0 0
      %2638 = vmatmul.mubr.bf16.gmra.mrb[0].mxu0 %v2600
      %v2639 = vpop.f32.mrb[0].mxu0
      %v2640 = vadd.f32 0.0, %v2639
      %v2641 = vpop.f32.mrb[0].mxu0
      %v2642 = vadd.f32 0.0, %v2641
      %v2643 = vpop.f32.mrb[0].mxu0
      %v2644 = vadd.f32 0.0, %v2643
      %v2645 = vpop.f32.mrb[0].mxu0
      %v2646 = vadd.f32 0.0, %v2645
      %2647 = vmatprep.mubr.bf16.mxu0 0
      %2648 = vmatmul.mubr.bf16.gmra.mrb[0].mxu0 %v2603
      %v2649 = vpop.f32.mrb[0].mxu0
      %v2650 = vadd.f32 0.0, %v2649
      %v2651 = vpop.f32.mrb[0].mxu0
      %v2652 = vadd.f32 0.0, %v2651
      %v2653 = vpop.f32.mrb[0].mxu0
      %v2654 = vadd.f32 0.0, %v2653
      %v2655 = vpop.f32.mrb[0].mxu0
      %v2656 = vadd.f32 0.0, %v2655
      %2657 = vdwg.mxu0
      %2658 = vmatprep.subr.bf16.mxu0 %v2588
      %2659 = vmatpush1.bf16.msra.mxu0 %v2587
      %2660 = vmatprep.subr.bf16.mxu0 0
      %2661 = vmatpush1.bf16.msra.mxu0 0
      %2662 = vmatprep.subr.bf16.mxu0 0
      %2663 = vmatpush1.bf16.msra.mxu0 0
      %2664 = vmatprep.subr.bf16.mxu0 0
      %2665 = vmatpush1.bf16.msra.mxu0 0
      %2666 = vmatprep.subr.bf16.mxu0 0
      %2667 = vmatpush1.bf16.msra.mxu0 0
      %2668 = vmatprep.subr.bf16.mxu0 0
      %2669 = vmatpush1.bf16.msra.mxu0 0
      %2670 = vmatprep.subr.bf16.mxu0 0
      %2671 = vmatpush1.bf16.msra.mxu0 0
      %2672 = vmatprep.subr.bf16.mxu0 0
      %2673 = vmatpush1.bf16.msra.mxu0 0
      %2674 = vmatprep.subr.bf16.mxu0 0
      %2675 = vmatpush1.bf16.msra.mxu0 0
      %2676 = vmatprep.subr.bf16.mxu0 0
      %2677 = vmatpush1.bf16.msra.mxu0 0
      %2678 = vmatprep.subr.bf16.mxu0 0
      %2679 = vmatpush1.bf16.msra.mxu0 0
      %2680 = vmatprep.subr.bf16.mxu0 0
      %2681 = vmatpush1.bf16.msra.mxu0 0
      %2682 = vmatprep.subr.bf16.mxu0 0
      %2683 = vmatpush1.bf16.msra.mxu0 0
      %2684 = vmatprep.subr.bf16.mxu0 0
      %2685 = vmatpush1.bf16.msra.mxu0 0
      %2686 = vmatprep.subr.bf16.mxu0 0
      %2687 = vmatpush1.bf16.msra.mxu0 0
      %2688 = vmatprep.subr.bf16.mxu0 0
      %2689 = vmatpush1.bf16.msra.mxu0 0
      %2690 = vmatprep.mubr.bf16.mxu0 0
      %2691 = vmatmul.mubr.bf16.gmra.mrb[0].mxu0 %v2600
      %v2692 = vpop.f32.mrb[0].mxu0
      %v2693 = vadd.f32 0.0, %v2692
      %v2694 = vpop.f32.mrb[0].mxu0
      %v2695 = vadd.f32 0.0, %v2694
      %v2696 = vpop.f32.mrb[0].mxu0
      %v2697 = vadd.f32 0.0, %v2696
      %v2698 = vpop.f32.mrb[0].mxu0
      %v2699 = vadd.f32 0.0, %v2698
      %2700 = vmatprep.mubr.bf16.mxu0 0
      %2701 = vmatmul.mubr.bf16.gmra.mrb[0].mxu0 %v2603
      %v2702 = vpop.f32.mrb[0].mxu0
      %v2703 = vadd.f32 0.0, %v2702
      %v2704 = vpop.f32.mrb[0].mxu0
      %v2705 = vadd.f32 0.0, %v2704
      %v2706 = vpop.f32.mrb[0].mxu0
      %v2707 = vadd.f32 0.0, %v2706
      %v2708 = vpop.f32.mrb[0].mxu0
      %v2709 = vadd.f32 0.0, %v2708
      %2710 = vdwg.mxu0
      %v2711 = vadd.f32 %v2468, %v2640
      %v2712 = vadd.f32 %v2470, %v2642
      %v2713 = vadd.f32 %v2521, %v2693
      %v2714 = vadd.f32 %v2523, %v2695
      %v2715 = vadd.f32 %v2472, %v2644
      %v2716 = vadd.f32 %v2474, %v2646
      %v2717 = vadd.f32 %v2525, %v2697
      %v2718 = vadd.f32 %v2527, %v2699
      %v2719 = vadd.f32 %v2478, %v2650
      %v2720 = vadd.f32 %v2480, %v2652
      %v2721 = vadd.f32 %v2531, %v2703
      %v2722 = vadd.f32 %v2533, %v2705
      %v2723 = vadd.f32 %v2482, %v2654
      %v2724 = vadd.f32 %v2484, %v2656
      %v2725 = vadd.f32 %v2535, %v2707
      %v2726 = vadd.f32 %v2537, %v2709
      %2727 = vrot.lane.b32.xlu0 %v2215, 1
      %v2728 = vpop.permute.xlu0 %2727
      %2729 = vrot.lane.b32.xlu0 %v2219, 1
      %v2730 = vpop.permute.xlu0 %2729
      %2731 = vrot.lane.b32.xlu0 %v2216, 1
      %v2732 = vpop.permute.xlu0 %2731
      %2733 = vrot.lane.b32.xlu0 %v2220, 1
      %v2734 = vpop.permute.xlu0 %2733
      %2735 = vrot.lane.b32.xlu0 %v2217, 1
      %v2736 = vpop.permute.xlu0 %2735
      %2737 = vrot.lane.b32.xlu0 %v2221, 1
      %v2738 = vpop.permute.xlu0 %2737
      %2739 = vrot.lane.b32.xlu0 %v2218, 1
      %v2740 = vpop.permute.xlu0 %2739
      %2741 = vrot.lane.b32.xlu0 %v2222, 1
      %v2742 = vpop.permute.xlu0 %2741
      %v2743 = vsel %vm2252, %v2736, %v2740
      %v2744 = vsel %vm2252, %v2738, %v2742
      %v2745 = vsel %vm2252, %v2732, %v2736
      %v2746 = vsel %vm2252, %v2734, %v2738
      %v2747 = vsel %vm2252, %v2728, %v2732
      %v2748 = vsel %vm2252, %v2730, %v2734
      %v2749 = vsel %vm2252, %v2740, %v2728
      %v2750 = vsel %vm2252, %v2742, %v2730
      %v2751 = vsel %vm2265, %v2749, 0.0
      %v2752 = vsel %vm2266, %v2747, 0.0
      %v2753 = vsel %vm2267, %v2745, 0.0
      %v2754 = vsel %vm2268, %v2743, 0.0
      %v2755 = vsel %vm2265, %v2750, 0.0
      %v2756 = vsel %vm2266, %v2748, 0.0
      %v2757 = vsel %vm2267, %v2746, 0.0
      %v2758 = vsel %vm2268, %v2744, 0.0
      %s2759 = scalar_lea.vmem %s6, 48
      %v2760 = vld [vmem:[%s2759] sm:$0xf]
      %v2761 = vld [vmem:[%s2759 + $0x4] sm:$0xf]
      %v2762 = vld [vmem:[%s2759 + $0x8] sm:$0xf]
      %v2763 = vld [vmem:[%s2759 + $0xc] sm:$0xf]
      %v2764 = vpack.c.bf16 %v2755, %v2751
      %v2765 = vpack.c.bf16 %v2756, %v2752
      %v2766 = vpack.c.bf16 %v2757, %v2753
      %v2767 = vpack.c.bf16 %v2758, %v2754
      %v2772 = vunpack.c.l.b16 %v2760
      %v2773 = vunpack.c.l.b16 %v2761
      %v2774 = vunpack.c.l.b16 %v2762
      %v2775 = vunpack.c.l.b16 %v2763
      %v2776 = vpack.c.b16 %v2773, %v2772
      %v2777 = vpack.c.b16 %v2775, %v2774
      %v2779 = vsel %vm2304, %v2776, 0
      %v2782 = vsel %vm2304, %v2777, 0
      %2784 = vmatprep.subr.bf16.mxu0 %v2765
      %2785 = vmatpush1.bf16.msra.mxu0 %v2764
      %2786 = vmatprep.subr.bf16.mxu0 0
      %2787 = vmatpush1.bf16.msra.mxu0 0
      %2788 = vmatprep.subr.bf16.mxu0 0
      %2789 = vmatpush1.bf16.msra.mxu0 0
      %2790 = vmatprep.subr.bf16.mxu0 0
      %2791 = vmatpush1.bf16.msra.mxu0 0
      %2792 = vmatprep.subr.bf16.mxu0 0
      %2793 = vmatpush1.bf16.msra.mxu0 0
      %2794 = vmatprep.subr.bf16.mxu0 0
      %2795 = vmatpush1.bf16.msra.mxu0 0
      %2796 = vmatprep.subr.bf16.mxu0 0
      %2797 = vmatpush1.bf16.msra.mxu0 0
      %2798 = vmatprep.subr.bf16.mxu0 0
      %2799 = vmatpush1.bf16.msra.mxu0 0
      %2800 = vmatprep.subr.bf16.mxu0 0
      %2801 = vmatpush1.bf16.msra.mxu0 0
      %2802 = vmatprep.subr.bf16.mxu0 0
      %2803 = vmatpush1.bf16.msra.mxu0 0
      %2804 = vmatprep.subr.bf16.mxu0 0
      %2805 = vmatpush1.bf16.msra.mxu0 0
      %2806 = vmatprep.subr.bf16.mxu0 0
      %2807 = vmatpush1.bf16.msra.mxu0 0
      %2808 = vmatprep.subr.bf16.mxu0 0
      %2809 = vmatpush1.bf16.msra.mxu0 0
      %2810 = vmatprep.subr.bf16.mxu0 0
      %2811 = vmatpush1.bf16.msra.mxu0 0
      %2812 = vmatprep.subr.bf16.mxu0 0
      %2813 = vmatpush1.bf16.msra.mxu0 0
      %2814 = vmatprep.subr.bf16.mxu0 0
      %2815 = vmatpush1.bf16.msra.mxu0 0
      %2816 = vmatprep.mubr.bf16.mxu0 0
      %2817 = vmatmul.mubr.bf16.gmra.mrb[0].mxu0 %v2779
      %v2818 = vpop.f32.mrb[0].mxu0
      %v2819 = vadd.f32 0.0, %v2818
      %v2820 = vpop.f32.mrb[0].mxu0
      %v2821 = vadd.f32 0.0, %v2820
      %v2822 = vpop.f32.mrb[0].mxu0
      %v2823 = vadd.f32 0.0, %v2822
      %v2824 = vpop.f32.mrb[0].mxu0
      %v2825 = vadd.f32 0.0, %v2824
      %2826 = vmatprep.mubr.bf16.mxu0 0
      %2827 = vmatmul.mubr.bf16.gmra.mrb[0].mxu0 %v2782
      %v2828 = vpop.f32.mrb[0].mxu0
      %v2829 = vadd.f32 0.0, %v2828
      %v2830 = vpop.f32.mrb[0].mxu0
      %v2831 = vadd.f32 0.0, %v2830
      %v2832 = vpop.f32.mrb[0].mxu0
      %v2833 = vadd.f32 0.0, %v2832
      %v2834 = vpop.f32.mrb[0].mxu0
      %v2835 = vadd.f32 0.0, %v2834
      %2836 = vdwg.mxu0
      %2837 = vmatprep.subr.bf16.mxu0 %v2767
      %2838 = vmatpush1.bf16.msra.mxu0 %v2766
      %2839 = vmatprep.subr.bf16.mxu0 0
      %2840 = vmatpush1.bf16.msra.mxu0 0
      %2841 = vmatprep.subr.bf16.mxu0 0
      %2842 = vmatpush1.bf16.msra.mxu0 0
      %2843 = vmatprep.subr.bf16.mxu0 0
      %2844 = vmatpush1.bf16.msra.mxu0 0
      %2845 = vmatprep.subr.bf16.mxu0 0
      %2846 = vmatpush1.bf16.msra.mxu0 0
      %2847 = vmatprep.subr.bf16.mxu0 0
      %2848 = vmatpush1.bf16.msra.mxu0 0
      %2849 = vmatprep.subr.bf16.mxu0 0
      %2850 = vmatpush1.bf16.msra.mxu0 0
      %2851 = vmatprep.subr.bf16.mxu0 0
      %2852 = vmatpush1.bf16.msra.mxu0 0
      %2853 = vmatprep.subr.bf16.mxu0 0
      %2854 = vmatpush1.bf16.msra.mxu0 0
      %2855 = vmatprep.subr.bf16.mxu0 0
      %2856 = vmatpush1.bf16.msra.mxu0 0
      %2857 = vmatprep.subr.bf16.mxu0 0
      %2858 = vmatpush1.bf16.msra.mxu0 0
      %2859 = vmatprep.subr.bf16.mxu0 0
      %2860 = vmatpush1.bf16.msra.mxu0 0
      %2861 = vmatprep.subr.bf16.mxu0 0
      %2862 = vmatpush1.bf16.msra.mxu0 0
      %2863 = vmatprep.subr.bf16.mxu0 0
      %2864 = vmatpush1.bf16.msra.mxu0 0
      %2865 = vmatprep.subr.bf16.mxu0 0
      %2866 = vmatpush1.bf16.msra.mxu0 0
      %2867 = vmatprep.subr.bf16.mxu0 0
      %2868 = vmatpush1.bf16.msra.mxu0 0
      %2869 = vmatprep.mubr.bf16.mxu0 0
      %2870 = vmatmul.mubr.bf16.gmra.mrb[0].mxu0 %v2779
      %v2871 = vpop.f32.mrb[0].mxu0
      %v2872 = vadd.f32 0.0, %v2871
      %v2873 = vpop.f32.mrb[0].mxu0
      %v2874 = vadd.f32 0.0, %v2873
      %v2875 = vpop.f32.mrb[0].mxu0
      %v2876 = vadd.f32 0.0, %v2875
      %v2877 = vpop.f32.mrb[0].mxu0
      %v2878 = vadd.f32 0.0, %v2877
      %2879 = vmatprep.mubr.bf16.mxu0 0
      %2880 = vmatmul.mubr.bf16.gmra.mrb[0].mxu0 %v2782
      %v2881 = vpop.f32.mrb[0].mxu0
      %v2882 = vadd.f32 0.0, %v2881
      %v2883 = vpop.f32.mrb[0].mxu0
      %v2884 = vadd.f32 0.0, %v2883
      %v2885 = vpop.f32.mrb[0].mxu0
      %v2886 = vadd.f32 0.0, %v2885
      %v2887 = vpop.f32.mrb[0].mxu0
      %v2888 = vadd.f32 0.0, %v2887
      %2889 = vdwg.mxu0
      %v2890 = vadd.f32 %v2711, %v2819
      %v2891 = vadd.f32 %v2712, %v2821
      %v2892 = vadd.f32 %v2713, %v2872
      %v2893 = vadd.f32 %v2714, %v2874
      %v2894 = vadd.f32 %v2715, %v2823
      %v2895 = vadd.f32 %v2716, %v2825
      %v2896 = vadd.f32 %v2717, %v2876
      %v2897 = vadd.f32 %v2718, %v2878
      %v2898 = vadd.f32 %v2719, %v2829
      %v2899 = vadd.f32 %v2720, %v2831
      %v2900 = vadd.f32 %v2721, %v2882
      %v2901 = vadd.f32 %v2722, %v2884
      %v2902 = vadd.f32 %v2723, %v2833
      %v2903 = vadd.f32 %v2724, %v2835
      %v2904 = vadd.f32 %v2725, %v2886
      %v2905 = vadd.f32 %v2726, %v2888
      %s2906 = scalar_lea.vmem %s6, 64
      %v2907 = vld [vmem:[%s2906] sm:$0xf]
      %v2908 = vld [vmem:[%s2906 + $0x4] sm:$0xf]
      %v2909 = vld [vmem:[%s2906 + $0x8] sm:$0xf]
      %v2910 = vld [vmem:[%s2906 + $0xc] sm:$0xf]
      %v2911 = vpack.c.bf16 %v2219, %v2215
      %v2912 = vpack.c.bf16 %v2220, %v2216
      %v2913 = vpack.c.bf16 %v2221, %v2217
      %v2914 = vpack.c.bf16 %v2222, %v2218
      %v2919 = vunpack.c.l.b16 %v2907
      %v2920 = vunpack.c.l.b16 %v2908
      %v2921 = vunpack.c.l.b16 %v2909
      %v2922 = vunpack.c.l.b16 %v2910
      %v2923 = vpack.c.b16 %v2920, %v2919
      %v2924 = vpack.c.b16 %v2922, %v2921
      %v2926 = vsel %vm2304, %v2923, 0
      %v2929 = vsel %vm2304, %v2924, 0
      %2931 = vmatprep.subr.bf16.mxu0 %v2912
      %2932 = vmatpush1.bf16.msra.mxu0 %v2911
      %2933 = vmatprep.subr.bf16.mxu0 0
      %2934 = vmatpush1.bf16.msra.mxu0 0
      %2935 = vmatprep.subr.bf16.mxu0 0
      %2936 = vmatpush1.bf16.msra.mxu0 0
      %2937 = vmatprep.subr.bf16.mxu0 0
      %2938 = vmatpush1.bf16.msra.mxu0 0
      %2939 = vmatprep.subr.bf16.mxu0 0
      %2940 = vmatpush1.bf16.msra.mxu0 0
      %2941 = vmatprep.subr.bf16.mxu0 0
      %2942 = vmatpush1.bf16.msra.mxu0 0
      %2943 = vmatprep.subr.bf16.mxu0 0
      %2944 = vmatpush1.bf16.msra.mxu0 0
      %2945 = vmatprep.subr.bf16.mxu0 0
      %2946 = vmatpush1.bf16.msra.mxu0 0
      %2947 = vmatprep.subr.bf16.mxu0 0
      %2948 = vmatpush1.bf16.msra.mxu0 0
      %2949 = vmatprep.subr.bf16.mxu0 0
      %2950 = vmatpush1.bf16.msra.mxu0 0
      %2951 = vmatprep.subr.bf16.mxu0 0
      %2952 = vmatpush1.bf16.msra.mxu0 0
      %2953 = vmatprep.subr.bf16.mxu0 0
      %2954 = vmatpush1.bf16.msra.mxu0 0
      %2955 = vmatprep.subr.bf16.mxu0 0
      %2956 = vmatpush1.bf16.msra.mxu0 0
      %2957 = vmatprep.subr.bf16.mxu0 0
      %2958 = vmatpush1.bf16.msra.mxu0 0
      %2959 = vmatprep.subr.bf16.mxu0 0
      %2960 = vmatpush1.bf16.msra.mxu0 0
      %2961 = vmatprep.subr.bf16.mxu0 0
      %2962 = vmatpush1.bf16.msra.mxu0 0
      %2963 = vmatprep.mubr.bf16.mxu0 0
      %2964 = vmatmul.mubr.bf16.gmra.mrb[0].mxu0 %v2926
      %v2965 = vpop.f32.mrb[0].mxu0
      %v2966 = vadd.f32 0.0, %v2965
      %v2967 = vpop.f32.mrb[0].mxu0
      %v2968 = vadd.f32 0.0, %v2967
      %v2969 = vpop.f32.mrb[0].mxu0
      %v2970 = vadd.f32 0.0, %v2969
      %v2971 = vpop.f32.mrb[0].mxu0
      %v2972 = vadd.f32 0.0, %v2971
      %2973 = vmatprep.mubr.bf16.mxu0 0
      %2974 = vmatmul.mubr.bf16.gmra.mrb[0].mxu0 %v2929
      %v2975 = vpop.f32.mrb[0].mxu0
      %v2976 = vadd.f32 0.0, %v2975
      %v2977 = vpop.f32.mrb[0].mxu0
      %v2978 = vadd.f32 0.0, %v2977
      %v2979 = vpop.f32.mrb[0].mxu0
      %v2980 = vadd.f32 0.0, %v2979
      %v2981 = vpop.f32.mrb[0].mxu0
      %v2982 = vadd.f32 0.0, %v2981
      %2983 = vdwg.mxu0
      %2984 = vmatprep.subr.bf16.mxu0 %v2914
      %2985 = vmatpush1.bf16.msra.mxu0 %v2913
      %2986 = vmatprep.subr.bf16.mxu0 0
      %2987 = vmatpush1.bf16.msra.mxu0 0
      %2988 = vmatprep.subr.bf16.mxu0 0
      %2989 = vmatpush1.bf16.msra.mxu0 0
      %2990 = vmatprep.subr.bf16.mxu0 0
      %2991 = vmatpush1.bf16.msra.mxu0 0
      %2992 = vmatprep.subr.bf16.mxu0 0
      %2993 = vmatpush1.bf16.msra.mxu0 0
      %2994 = vmatprep.subr.bf16.mxu0 0
      %2995 = vmatpush1.bf16.msra.mxu0 0
      %2996 = vmatprep.subr.bf16.mxu0 0
      %2997 = vmatpush1.bf16.msra.mxu0 0
      %2998 = vmatprep.subr.bf16.mxu0 0
      %2999 = vmatpush1.bf16.msra.mxu0 0
      %3000 = vmatprep.subr.bf16.mxu0 0
      %3001 = vmatpush1.bf16.msra.mxu0 0
      %3002 = vmatprep.subr.bf16.mxu0 0
      %3003 = vmatpush1.bf16.msra.mxu0 0
      %3004 = vmatprep.subr.bf16.mxu0 0
      %3005 = vmatpush1.bf16.msra.mxu0 0
      %3006 = vmatprep.subr.bf16.mxu0 0
      %3007 = vmatpush1.bf16.msra.mxu0 0
      %3008 = vmatprep.subr.bf16.mxu0 0
      %3009 = vmatpush1.bf16.msra.mxu0 0
      %3010 = vmatprep.subr.bf16.mxu0 0
      %3011 = vmatpush1.bf16.msra.mxu0 0
      %3012 = vmatprep.subr.bf16.mxu0 0
      %3013 = vmatpush1.bf16.msra.mxu0 0
      %3014 = vmatprep.subr.bf16.mxu0 0
      %3015 = vmatpush1.bf16.msra.mxu0 0
      %3016 = vmatprep.mubr.bf16.mxu0 0
      %3017 = vmatmul.mubr.bf16.gmra.mrb[0].mxu0 %v2926
      %v3018 = vpop.f32.mrb[0].mxu0
      %v3019 = vadd.f32 0.0, %v3018
      %v3020 = vpop.f32.mrb[0].mxu0
      %v3021 = vadd.f32 0.0, %v3020
      %v3022 = vpop.f32.mrb[0].mxu0
      %v3023 = vadd.f32 0.0, %v3022
      %v3024 = vpop.f32.mrb[0].mxu0
      %v3025 = vadd.f32 0.0, %v3024
      %3026 = vmatprep.mubr.bf16.mxu0 0
      %3027 = vmatmul.mubr.bf16.gmra.mrb[0].mxu0 %v2929
      %v3028 = vpop.f32.mrb[0].mxu0
      %v3029 = vadd.f32 0.0, %v3028
      %v3030 = vpop.f32.mrb[0].mxu0
      %v3031 = vadd.f32 0.0, %v3030
      %v3032 = vpop.f32.mrb[0].mxu0
      %v3033 = vadd.f32 0.0, %v3032
      %v3034 = vpop.f32.mrb[0].mxu0
      %v3035 = vadd.f32 0.0, %v3034
      %3036 = vdwg.mxu0
      %v3037 = vadd.f32 %v2890, %v2966
      %v3038 = vadd.f32 %v2891, %v2968
      %v3039 = vadd.f32 %v2892, %v3019
      %v3040 = vadd.f32 %v2893, %v3021
      %v3041 = vadd.f32 %v2894, %v2970
      %v3042 = vadd.f32 %v2895, %v2972
      %v3043 = vadd.f32 %v2896, %v3023
      %v3044 = vadd.f32 %v2897, %v3025
      %v3045 = vadd.f32 %v2898, %v2976
      %v3046 = vadd.f32 %v2899, %v2978
      %v3047 = vadd.f32 %v2900, %v3029
      %v3048 = vadd.f32 %v2901, %v3031
      %v3049 = vadd.f32 %v2902, %v2980
      %v3050 = vadd.f32 %v2903, %v2982
      %v3051 = vadd.f32 %v2904, %v3033
      %v3052 = vadd.f32 %v2905, %v3035
      %3053 = vrot.lane.b32.xlu0 %v2215, 127
      %v3054 = vpop.permute.xlu0 %3053
      %3055 = vrot.lane.b32.xlu0 %v2219, 127
      %v3056 = vpop.permute.xlu0 %3055
      %3057 = vrot.lane.b32.xlu0 %v2216, 127
      %v3058 = vpop.permute.xlu0 %3057
      %3059 = vrot.lane.b32.xlu0 %v2220, 127
      %v3060 = vpop.permute.xlu0 %3059
      %3061 = vrot.lane.b32.xlu0 %v2217, 127
      %v3062 = vpop.permute.xlu0 %3061
      %3063 = vrot.lane.b32.xlu0 %v2221, 127
      %v3064 = vpop.permute.xlu0 %3063
      %3065 = vrot.lane.b32.xlu0 %v2218, 127
      %v3066 = vpop.permute.xlu0 %3065
      %3067 = vrot.lane.b32.xlu0 %v2222, 127
      %v3068 = vpop.permute.xlu0 %3067
      %v3069 = vsel %vm2555, %v3062, %v3066
      %v3070 = vsel %vm2555, %v3064, %v3068
      %v3071 = vsel %vm2555, %v3058, %v3062
      %v3072 = vsel %vm2555, %v3060, %v3064
      %v3073 = vsel %vm2555, %v3054, %v3058
      %v3074 = vsel %vm2555, %v3056, %v3060
      %v3075 = vsel %vm2555, %v3066, %v3054
      %v3076 = vsel %vm2555, %v3068, %v3056
      %v3077 = vsel %vm2568, %v3073, 0.0
      %v3078 = vsel %vm2569, %v3071, 0.0
      %v3079 = vsel %vm2570, %v3069, 0.0
      %v3080 = vsel %vm2571, %v3075, 0.0
      %v3081 = vsel %vm2568, %v3074, 0.0
      %v3082 = vsel %vm2569, %v3072, 0.0
      %v3083 = vsel %vm2570, %v3070, 0.0
      %v3084 = vsel %vm2571, %v3076, 0.0
      %s3085 = scalar_lea.vmem %s6, 80
      %v3086 = vld [vmem:[%s3085] sm:$0xf]
      %v3087 = vld [vmem:[%s3085 + $0x4] sm:$0xf]
      %v3088 = vld [vmem:[%s3085 + $0x8] sm:$0xf]
      %v3089 = vld [vmem:[%s3085 + $0xc] sm:$0xf]
      %v3090 = vpack.c.bf16 %v3081, %v3077
      %v3091 = vpack.c.bf16 %v3082, %v3078
      %v3092 = vpack.c.bf16 %v3083, %v3079
      %v3093 = vpack.c.bf16 %v3084, %v3080
      %v3098 = vunpack.c.l.b16 %v3086
      %v3099 = vunpack.c.l.b16 %v3087
      %v3100 = vunpack.c.l.b16 %v3088
      %v3101 = vunpack.c.l.b16 %v3089
      %v3102 = vpack.c.b16 %v3099, %v3098
      %v3103 = vpack.c.b16 %v3101, %v3100
      %v3105 = vsel %vm2304, %v3102, 0
      %v3108 = vsel %vm2304, %v3103, 0
      %3110 = vmatprep.subr.bf16.mxu0 %v3091
      %3111 = vmatpush1.bf16.msra.mxu0 %v3090
      %3112 = vmatprep.subr.bf16.mxu0 0
      %3113 = vmatpush1.bf16.msra.mxu0 0
      %3114 = vmatprep.subr.bf16.mxu0 0
      %3115 = vmatpush1.bf16.msra.mxu0 0
      %3116 = vmatprep.subr.bf16.mxu0 0
      %3117 = vmatpush1.bf16.msra.mxu0 0
      %3118 = vmatprep.subr.bf16.mxu0 0
      %3119 = vmatpush1.bf16.msra.mxu0 0
      %3120 = vmatprep.subr.bf16.mxu0 0
      %3121 = vmatpush1.bf16.msra.mxu0 0
      %3122 = vmatprep.subr.bf16.mxu0 0
      %3123 = vmatpush1.bf16.msra.mxu0 0
      %3124 = vmatprep.subr.bf16.mxu0 0
      %3125 = vmatpush1.bf16.msra.mxu0 0
      %3126 = vmatprep.subr.bf16.mxu0 0
      %3127 = vmatpush1.bf16.msra.mxu0 0
      %3128 = vmatprep.subr.bf16.mxu0 0
      %3129 = vmatpush1.bf16.msra.mxu0 0
      %3130 = vmatprep.subr.bf16.mxu0 0
      %3131 = vmatpush1.bf16.msra.mxu0 0
      %3132 = vmatprep.subr.bf16.mxu0 0
      %3133 = vmatpush1.bf16.msra.mxu0 0
      %3134 = vmatprep.subr.bf16.mxu0 0
      %3135 = vmatpush1.bf16.msra.mxu0 0
      %3136 = vmatprep.subr.bf16.mxu0 0
      %3137 = vmatpush1.bf16.msra.mxu0 0
      %3138 = vmatprep.subr.bf16.mxu0 0
      %3139 = vmatpush1.bf16.msra.mxu0 0
      %3140 = vmatprep.subr.bf16.mxu0 0
      %3141 = vmatpush1.bf16.msra.mxu0 0
      %3142 = vmatprep.mubr.bf16.mxu0 0
      %3143 = vmatmul.mubr.bf16.gmra.mrb[0].mxu0 %v3105
      %v3144 = vpop.f32.mrb[0].mxu0
      %v3145 = vadd.f32 0.0, %v3144
      %v3146 = vpop.f32.mrb[0].mxu0
      %v3147 = vadd.f32 0.0, %v3146
      %v3148 = vpop.f32.mrb[0].mxu0
      %v3149 = vadd.f32 0.0, %v3148
      %v3150 = vpop.f32.mrb[0].mxu0
      %v3151 = vadd.f32 0.0, %v3150
      %3152 = vmatprep.mubr.bf16.mxu0 0
      %3153 = vmatmul.mubr.bf16.gmra.mrb[0].mxu0 %v3108
      %v3154 = vpop.f32.mrb[0].mxu0
      %v3155 = vadd.f32 0.0, %v3154
      %v3156 = vpop.f32.mrb[0].mxu0
      %v3157 = vadd.f32 0.0, %v3156
      %v3158 = vpop.f32.mrb[0].mxu0
      %v3159 = vadd.f32 0.0, %v3158
      %v3160 = vpop.f32.mrb[0].mxu0
      %v3161 = vadd.f32 0.0, %v3160
      %3162 = vdwg.mxu0
      %3163 = vmatprep.subr.bf16.mxu0 %v3093
      %3164 = vmatpush1.bf16.msra.mxu0 %v3092
      %3165 = vmatprep.subr.bf16.mxu0 0
      %3166 = vmatpush1.bf16.msra.mxu0 0
      %3167 = vmatprep.subr.bf16.mxu0 0
      %3168 = vmatpush1.bf16.msra.mxu0 0
      %3169 = vmatprep.subr.bf16.mxu0 0
      %3170 = vmatpush1.bf16.msra.mxu0 0
      %3171 = vmatprep.subr.bf16.mxu0 0
      %3172 = vmatpush1.bf16.msra.mxu0 0
      %3173 = vmatprep.subr.bf16.mxu0 0
      %3174 = vmatpush1.bf16.msra.mxu0 0
      %3175 = vmatprep.subr.bf16.mxu0 0
      %3176 = vmatpush1.bf16.msra.mxu0 0
      %3177 = vmatprep.subr.bf16.mxu0 0
      %3178 = vmatpush1.bf16.msra.mxu0 0
      %3179 = vmatprep.subr.bf16.mxu0 0
      %3180 = vmatpush1.bf16.msra.mxu0 0
      %3181 = vmatprep.subr.bf16.mxu0 0
      %3182 = vmatpush1.bf16.msra.mxu0 0
      %3183 = vmatprep.subr.bf16.mxu0 0
      %3184 = vmatpush1.bf16.msra.mxu0 0
      %3185 = vmatprep.subr.bf16.mxu0 0
      %3186 = vmatpush1.bf16.msra.mxu0 0
      %3187 = vmatprep.subr.bf16.mxu0 0
      %3188 = vmatpush1.bf16.msra.mxu0 0
      %3189 = vmatprep.subr.bf16.mxu0 0
      %3190 = vmatpush1.bf16.msra.mxu0 0
      %3191 = vmatprep.subr.bf16.mxu0 0
      %3192 = vmatpush1.bf16.msra.mxu0 0
      %3193 = vmatprep.subr.bf16.mxu0 0
      %3194 = vmatpush1.bf16.msra.mxu0 0
      %3195 = vmatprep.mubr.bf16.mxu0 0
      %3196 = vmatmul.mubr.bf16.gmra.mrb[0].mxu0 %v3105
      %v3197 = vpop.f32.mrb[0].mxu0
      %v3198 = vadd.f32 0.0, %v3197
      %v3199 = vpop.f32.mrb[0].mxu0
      %v3200 = vadd.f32 0.0, %v3199
      %v3201 = vpop.f32.mrb[0].mxu0
      %v3202 = vadd.f32 0.0, %v3201
      %v3203 = vpop.f32.mrb[0].mxu0
      %v3204 = vadd.f32 0.0, %v3203
      %3205 = vmatprep.mubr.bf16.mxu0 0
      %3206 = vmatmul.mubr.bf16.gmra.mrb[0].mxu0 %v3108
      %v3207 = vpop.f32.mrb[0].mxu0
      %v3208 = vadd.f32 0.0, %v3207
      %v3209 = vpop.f32.mrb[0].mxu0
      %v3210 = vadd.f32 0.0, %v3209
      %v3211 = vpop.f32.mrb[0].mxu0
      %v3212 = vadd.f32 0.0, %v3211
      %v3213 = vpop.f32.mrb[0].mxu0
      %v3214 = vadd.f32 0.0, %v3213
      %3215 = vdwg.mxu0
      %v3216 = vadd.f32 %v3037, %v3145
      %v3217 = vadd.f32 %v3038, %v3147
      %v3218 = vadd.f32 %v3039, %v3198
      %v3219 = vadd.f32 %v3040, %v3200
      %v3220 = vadd.f32 %v3041, %v3149
      %v3221 = vadd.f32 %v3042, %v3151
      %v3222 = vadd.f32 %v3043, %v3202
      %v3223 = vadd.f32 %v3044, %v3204
      %v3224 = vadd.f32 %v3045, %v3155
      %v3225 = vadd.f32 %v3046, %v3157
      %v3226 = vadd.f32 %v3047, %v3208
      %v3227 = vadd.f32 %v3048, %v3210
      %v3228 = vadd.f32 %v3049, %v3159
      %v3229 = vadd.f32 %v3050, %v3161
      %v3230 = vadd.f32 %v3051, %v3212
      %v3231 = vadd.f32 %v3052, %v3214
      %3232 = vrot.lane.b32.xlu0 %v2228, 1
      %v3233 = vpop.permute.xlu0 %3232
      %3234 = vrot.lane.b32.xlu0 %v2232, 1
      %v3235 = vpop.permute.xlu0 %3234
      %3236 = vrot.lane.b32.xlu0 %v2229, 1
      %v3237 = vpop.permute.xlu0 %3236
      %3238 = vrot.lane.b32.xlu0 %v2233, 1
      %v3239 = vpop.permute.xlu0 %3238
      %3240 = vrot.lane.b32.xlu0 %v2230, 1
      %v3241 = vpop.permute.xlu0 %3240
      %3242 = vrot.lane.b32.xlu0 %v2234, 1
      %v3243 = vpop.permute.xlu0 %3242
      %3244 = vrot.lane.b32.xlu0 %v2231, 1
      %v3245 = vpop.permute.xlu0 %3244
      %3246 = vrot.lane.b32.xlu0 %v2235, 1
      %v3247 = vpop.permute.xlu0 %3246
      %v3248 = vsel %vm2252, %v3241, %v3245
      %v3249 = vsel %vm2252, %v3243, %v3247
      %v3250 = vsel %vm2252, %v3237, %v3241
      %v3251 = vsel %vm2252, %v3239, %v3243
      %v3252 = vsel %vm2252, %v3233, %v3237
      %v3253 = vsel %vm2252, %v3235, %v3239
      %v3254 = vsel %vm2252, %v3245, %v3233
      %v3255 = vsel %vm2252, %v3247, %v3235
      %v3256 = vsel %vm2265, %v3254, 0.0
      %v3257 = vsel %vm2266, %v3252, 0.0
      %v3258 = vsel %vm2267, %v3250, 0.0
      %v3259 = vsel %vm2268, %v3248, 0.0
      %v3260 = vsel %vm2265, %v3255, 0.0
      %v3261 = vsel %vm2266, %v3253, 0.0
      %v3262 = vsel %vm2267, %v3251, 0.0
      %v3263 = vsel %vm2268, %v3249, 0.0
      %s3264 = scalar_lea.vmem %s6, 96
      %v3265 = vld [vmem:[%s3264] sm:$0xf]
      %v3266 = vld [vmem:[%s3264 + $0x4] sm:$0xf]
      %v3267 = vld [vmem:[%s3264 + $0x8] sm:$0xf]
      %v3268 = vld [vmem:[%s3264 + $0xc] sm:$0xf]
      %v3269 = vpack.c.bf16 %v3260, %v3256
      %v3270 = vpack.c.bf16 %v3261, %v3257
      %v3271 = vpack.c.bf16 %v3262, %v3258
      %v3272 = vpack.c.bf16 %v3263, %v3259
      %v3277 = vunpack.c.l.b16 %v3265
      %v3278 = vunpack.c.l.b16 %v3266
      %v3279 = vunpack.c.l.b16 %v3267
      %v3280 = vunpack.c.l.b16 %v3268
      %v3281 = vpack.c.b16 %v3278, %v3277
      %v3282 = vpack.c.b16 %v3280, %v3279
      %v3284 = vsel %vm2304, %v3281, 0
      %v3287 = vsel %vm2304, %v3282, 0
      %3289 = vmatprep.subr.bf16.mxu0 %v3270
      %3290 = vmatpush1.bf16.msra.mxu0 %v3269
      %3291 = vmatprep.subr.bf16.mxu0 0
      %3292 = vmatpush1.bf16.msra.mxu0 0
      %3293 = vmatprep.subr.bf16.mxu0 0
      %3294 = vmatpush1.bf16.msra.mxu0 0
      %3295 = vmatprep.subr.bf16.mxu0 0
      %3296 = vmatpush1.bf16.msra.mxu0 0
      %3297 = vmatprep.subr.bf16.mxu0 0
      %3298 = vmatpush1.bf16.msra.mxu0 0
      %3299 = vmatprep.subr.bf16.mxu0 0
      %3300 = vmatpush1.bf16.msra.mxu0 0
      %3301 = vmatprep.subr.bf16.mxu0 0
      %3302 = vmatpush1.bf16.msra.mxu0 0
      %3303 = vmatprep.subr.bf16.mxu0 0
      %3304 = vmatpush1.bf16.msra.mxu0 0
      %3305 = vmatprep.subr.bf16.mxu0 0
      %3306 = vmatpush1.bf16.msra.mxu0 0
      %3307 = vmatprep.subr.bf16.mxu0 0
      %3308 = vmatpush1.bf16.msra.mxu0 0
      %3309 = vmatprep.subr.bf16.mxu0 0
      %3310 = vmatpush1.bf16.msra.mxu0 0
      %3311 = vmatprep.subr.bf16.mxu0 0
      %3312 = vmatpush1.bf16.msra.mxu0 0
      %3313 = vmatprep.subr.bf16.mxu0 0
      %3314 = vmatpush1.bf16.msra.mxu0 0
      %3315 = vmatprep.subr.bf16.mxu0 0
      %3316 = vmatpush1.bf16.msra.mxu0 0
      %3317 = vmatprep.subr.bf16.mxu0 0
      %3318 = vmatpush1.bf16.msra.mxu0 0
      %3319 = vmatprep.subr.bf16.mxu0 0
      %3320 = vmatpush1.bf16.msra.mxu0 0
      %3321 = vmatprep.mubr.bf16.mxu0 0
      %3322 = vmatmul.mubr.bf16.gmra.mrb[0].mxu0 %v3284
      %v3323 = vpop.f32.mrb[0].mxu0
      %v3324 = vadd.f32 0.0, %v3323
      %v3325 = vpop.f32.mrb[0].mxu0
      %v3326 = vadd.f32 0.0, %v3325
      %v3327 = vpop.f32.mrb[0].mxu0
      %v3328 = vadd.f32 0.0, %v3327
      %v3329 = vpop.f32.mrb[0].mxu0
      %v3330 = vadd.f32 0.0, %v3329
      %3331 = vmatprep.mubr.bf16.mxu0 0
      %3332 = vmatmul.mubr.bf16.gmra.mrb[0].mxu0 %v3287
      %v3333 = vpop.f32.mrb[0].mxu0
      %v3334 = vadd.f32 0.0, %v3333
      %v3335 = vpop.f32.mrb[0].mxu0
      %v3336 = vadd.f32 0.0, %v3335
      %v3337 = vpop.f32.mrb[0].mxu0
      %v3338 = vadd.f32 0.0, %v3337
      %v3339 = vpop.f32.mrb[0].mxu0
      %v3340 = vadd.f32 0.0, %v3339
      %3341 = vdwg.mxu0
      %3342 = vmatprep.subr.bf16.mxu0 %v3272
      %3343 = vmatpush1.bf16.msra.mxu0 %v3271
      %3344 = vmatprep.subr.bf16.mxu0 0
      %3345 = vmatpush1.bf16.msra.mxu0 0
      %3346 = vmatprep.subr.bf16.mxu0 0
      %3347 = vmatpush1.bf16.msra.mxu0 0
      %3348 = vmatprep.subr.bf16.mxu0 0
      %3349 = vmatpush1.bf16.msra.mxu0 0
      %3350 = vmatprep.subr.bf16.mxu0 0
      %3351 = vmatpush1.bf16.msra.mxu0 0
      %3352 = vmatprep.subr.bf16.mxu0 0
      %3353 = vmatpush1.bf16.msra.mxu0 0
      %3354 = vmatprep.subr.bf16.mxu0 0
      %3355 = vmatpush1.bf16.msra.mxu0 0
      %3356 = vmatprep.subr.bf16.mxu0 0
      %3357 = vmatpush1.bf16.msra.mxu0 0
      %3358 = vmatprep.subr.bf16.mxu0 0
      %3359 = vmatpush1.bf16.msra.mxu0 0
      %3360 = vmatprep.subr.bf16.mxu0 0
      %3361 = vmatpush1.bf16.msra.mxu0 0
      %3362 = vmatprep.subr.bf16.mxu0 0
      %3363 = vmatpush1.bf16.msra.mxu0 0
      %3364 = vmatprep.subr.bf16.mxu0 0
      %3365 = vmatpush1.bf16.msra.mxu0 0
      %3366 = vmatprep.subr.bf16.mxu0 0
      %3367 = vmatpush1.bf16.msra.mxu0 0
      %3368 = vmatprep.subr.bf16.mxu0 0
      %3369 = vmatpush1.bf16.msra.mxu0 0
      %3370 = vmatprep.subr.bf16.mxu0 0
      %3371 = vmatpush1.bf16.msra.mxu0 0
      %3372 = vmatprep.subr.bf16.mxu0 0
      %3373 = vmatpush1.bf16.msra.mxu0 0
      %3374 = vmatprep.mubr.bf16.mxu0 0
      %3375 = vmatmul.mubr.bf16.gmra.mrb[0].mxu0 %v3284
      %v3376 = vpop.f32.mrb[0].mxu0
      %v3377 = vadd.f32 0.0, %v3376
      %v3378 = vpop.f32.mrb[0].mxu0
      %v3379 = vadd.f32 0.0, %v3378
      %v3380 = vpop.f32.mrb[0].mxu0
      %v3381 = vadd.f32 0.0, %v3380
      %v3382 = vpop.f32.mrb[0].mxu0
      %v3383 = vadd.f32 0.0, %v3382
      %3384 = vmatprep.mubr.bf16.mxu0 0
      %3385 = vmatmul.mubr.bf16.gmra.mrb[0].mxu0 %v3287
      %v3386 = vpop.f32.mrb[0].mxu0
      %v3387 = vadd.f32 0.0, %v3386
      %v3388 = vpop.f32.mrb[0].mxu0
      %v3389 = vadd.f32 0.0, %v3388
      %v3390 = vpop.f32.mrb[0].mxu0
      %v3391 = vadd.f32 0.0, %v3390
      %v3392 = vpop.f32.mrb[0].mxu0
      %v3393 = vadd.f32 0.0, %v3392
      %3394 = vdwg.mxu0
      %v3395 = vadd.f32 %v3216, %v3324
      %v3396 = vadd.f32 %v3217, %v3326
      %v3397 = vadd.f32 %v3218, %v3377
      %v3398 = vadd.f32 %v3219, %v3379
      %v3399 = vadd.f32 %v3220, %v3328
      %v3400 = vadd.f32 %v3221, %v3330
      %v3401 = vadd.f32 %v3222, %v3381
      %v3402 = vadd.f32 %v3223, %v3383
      %v3403 = vadd.f32 %v3224, %v3334
      %v3404 = vadd.f32 %v3225, %v3336
      %v3405 = vadd.f32 %v3226, %v3387
      %v3406 = vadd.f32 %v3227, %v3389
      %v3407 = vadd.f32 %v3228, %v3338
      %v3408 = vadd.f32 %v3229, %v3340
      %v3409 = vadd.f32 %v3230, %v3391
      %v3410 = vadd.f32 %v3231, %v3393
      %s3411 = scalar_lea.vmem %s6, 112
      %v3412 = vld [vmem:[%s3411] sm:$0xf]
      %v3413 = vld [vmem:[%s3411 + $0x4] sm:$0xf]
      %v3414 = vld [vmem:[%s3411 + $0x8] sm:$0xf]
      %v3415 = vld [vmem:[%s3411 + $0xc] sm:$0xf]
      %v3416 = vpack.c.bf16 %v2232, %v2228
      %v3417 = vpack.c.bf16 %v2233, %v2229
      %v3418 = vpack.c.bf16 %v2234, %v2230
      %v3419 = vpack.c.bf16 %v2235, %v2231
      %v3424 = vunpack.c.l.b16 %v3412
      %v3425 = vunpack.c.l.b16 %v3413
      %v3426 = vunpack.c.l.b16 %v3414
      %v3427 = vunpack.c.l.b16 %v3415
      %v3428 = vpack.c.b16 %v3425, %v3424
      %v3429 = vpack.c.b16 %v3427, %v3426
      %v3431 = vsel %vm2304, %v3428, 0
      %v3434 = vsel %vm2304, %v3429, 0
      %3436 = vmatprep.subr.bf16.mxu0 %v3417
      %3437 = vmatpush1.bf16.msra.mxu0 %v3416
      %3438 = vmatprep.subr.bf16.mxu0 0
      %3439 = vmatpush1.bf16.msra.mxu0 0
      %3440 = vmatprep.subr.bf16.mxu0 0
      %3441 = vmatpush1.bf16.msra.mxu0 0
      %3442 = vmatprep.subr.bf16.mxu0 0
      %3443 = vmatpush1.bf16.msra.mxu0 0
      %3444 = vmatprep.subr.bf16.mxu0 0
      %3445 = vmatpush1.bf16.msra.mxu0 0
      %3446 = vmatprep.subr.bf16.mxu0 0
      %3447 = vmatpush1.bf16.msra.mxu0 0
      %3448 = vmatprep.subr.bf16.mxu0 0
      %3449 = vmatpush1.bf16.msra.mxu0 0
      %3450 = vmatprep.subr.bf16.mxu0 0
      %3451 = vmatpush1.bf16.msra.mxu0 0
      %3452 = vmatprep.subr.bf16.mxu0 0
      %3453 = vmatpush1.bf16.msra.mxu0 0
      %3454 = vmatprep.subr.bf16.mxu0 0
      %3455 = vmatpush1.bf16.msra.mxu0 0
      %3456 = vmatprep.subr.bf16.mxu0 0
      %3457 = vmatpush1.bf16.msra.mxu0 0
      %3458 = vmatprep.subr.bf16.mxu0 0
      %3459 = vmatpush1.bf16.msra.mxu0 0
      %3460 = vmatprep.subr.bf16.mxu0 0
      %3461 = vmatpush1.bf16.msra.mxu0 0
      %3462 = vmatprep.subr.bf16.mxu0 0
      %3463 = vmatpush1.bf16.msra.mxu0 0
      %3464 = vmatprep.subr.bf16.mxu0 0
      %3465 = vmatpush1.bf16.msra.mxu0 0
      %3466 = vmatprep.subr.bf16.mxu0 0
      %3467 = vmatpush1.bf16.msra.mxu0 0
      %3468 = vmatprep.mubr.bf16.mxu0 0
      %3469 = vmatmul.mubr.bf16.gmra.mrb[0].mxu0 %v3431
      %v3470 = vpop.f32.mrb[0].mxu0
      %v3471 = vadd.f32 0.0, %v3470
      %v3472 = vpop.f32.mrb[0].mxu0
      %v3473 = vadd.f32 0.0, %v3472
      %v3474 = vpop.f32.mrb[0].mxu0
      %v3475 = vadd.f32 0.0, %v3474
      %v3476 = vpop.f32.mrb[0].mxu0
      %v3477 = vadd.f32 0.0, %v3476
      %3478 = vmatprep.mubr.bf16.mxu0 0
      %3479 = vmatmul.mubr.bf16.gmra.mrb[0].mxu0 %v3434
      %v3480 = vpop.f32.mrb[0].mxu0
      %v3481 = vadd.f32 0.0, %v3480
      %v3482 = vpop.f32.mrb[0].mxu0
      %v3483 = vadd.f32 0.0, %v3482
      %v3484 = vpop.f32.mrb[0].mxu0
      %v3485 = vadd.f32 0.0, %v3484
      %v3486 = vpop.f32.mrb[0].mxu0
      %v3487 = vadd.f32 0.0, %v3486
      %3488 = vdwg.mxu0
      %3489 = vmatprep.subr.bf16.mxu0 %v3419
      %3490 = vmatpush1.bf16.msra.mxu0 %v3418
      %3491 = vmatprep.subr.bf16.mxu0 0
      %3492 = vmatpush1.bf16.msra.mxu0 0
      %3493 = vmatprep.subr.bf16.mxu0 0
      %3494 = vmatpush1.bf16.msra.mxu0 0
      %3495 = vmatprep.subr.bf16.mxu0 0
      %3496 = vmatpush1.bf16.msra.mxu0 0
      %3497 = vmatprep.subr.bf16.mxu0 0
      %3498 = vmatpush1.bf16.msra.mxu0 0
      %3499 = vmatprep.subr.bf16.mxu0 0
      %3500 = vmatpush1.bf16.msra.mxu0 0
      %3501 = vmatprep.subr.bf16.mxu0 0
      %3502 = vmatpush1.bf16.msra.mxu0 0
      %3503 = vmatprep.subr.bf16.mxu0 0
      %3504 = vmatpush1.bf16.msra.mxu0 0
      %3505 = vmatprep.subr.bf16.mxu0 0
      %3506 = vmatpush1.bf16.msra.mxu0 0
      %3507 = vmatprep.subr.bf16.mxu0 0
      %3508 = vmatpush1.bf16.msra.mxu0 0
      %3509 = vmatprep.subr.bf16.mxu0 0
      %3510 = vmatpush1.bf16.msra.mxu0 0
      %3511 = vmatprep.subr.bf16.mxu0 0
      %3512 = vmatpush1.bf16.msra.mxu0 0
      %3513 = vmatprep.subr.bf16.mxu0 0
      %3514 = vmatpush1.bf16.msra.mxu0 0
      %3515 = vmatprep.subr.bf16.mxu0 0
      %3516 = vmatpush1.bf16.msra.mxu0 0
      %3517 = vmatprep.subr.bf16.mxu0 0
      %3518 = vmatpush1.bf16.msra.mxu0 0
      %3519 = vmatprep.subr.bf16.mxu0 0
      %3520 = vmatpush1.bf16.msra.mxu0 0
      %3521 = vmatprep.mubr.bf16.mxu0 0
      %3522 = vmatmul.mubr.bf16.gmra.mrb[0].mxu0 %v3431
      %v3523 = vpop.f32.mrb[0].mxu0
      %v3524 = vadd.f32 0.0, %v3523
      %v3525 = vpop.f32.mrb[0].mxu0
      %v3526 = vadd.f32 0.0, %v3525
      %v3527 = vpop.f32.mrb[0].mxu0
      %v3528 = vadd.f32 0.0, %v3527
      %v3529 = vpop.f32.mrb[0].mxu0
      %v3530 = vadd.f32 0.0, %v3529
      %3531 = vmatprep.mubr.bf16.mxu0 0
      %3532 = vmatmul.mubr.bf16.gmra.mrb[0].mxu0 %v3434
      %v3533 = vpop.f32.mrb[0].mxu0
      %v3534 = vadd.f32 0.0, %v3533
      %v3535 = vpop.f32.mrb[0].mxu0
      %v3536 = vadd.f32 0.0, %v3535
      %v3537 = vpop.f32.mrb[0].mxu0
      %v3538 = vadd.f32 0.0, %v3537
      %v3539 = vpop.f32.mrb[0].mxu0
      %v3540 = vadd.f32 0.0, %v3539
      %3541 = vdwg.mxu0
      %v3542 = vadd.f32 %v3395, %v3471
      %v3543 = vadd.f32 %v3396, %v3473
      %v3544 = vadd.f32 %v3397, %v3524
      %v3545 = vadd.f32 %v3398, %v3526
      %v3546 = vadd.f32 %v3399, %v3475
      %v3547 = vadd.f32 %v3400, %v3477
      %v3548 = vadd.f32 %v3401, %v3528
      %v3549 = vadd.f32 %v3402, %v3530
      %v3550 = vadd.f32 %v3403, %v3481
      %v3551 = vadd.f32 %v3404, %v3483
      %v3552 = vadd.f32 %v3405, %v3534
      %v3553 = vadd.f32 %v3406, %v3536
      %v3554 = vadd.f32 %v3407, %v3485
      %v3555 = vadd.f32 %v3408, %v3487
      %v3556 = vadd.f32 %v3409, %v3538
      %v3557 = vadd.f32 %v3410, %v3540
      %3558 = vrot.lane.b32.xlu0 %v2228, 127
      %v3559 = vpop.permute.xlu0 %3558
      %3560 = vrot.lane.b32.xlu0 %v2232, 127
      %v3561 = vpop.permute.xlu0 %3560
      %3562 = vrot.lane.b32.xlu0 %v2229, 127
      %v3563 = vpop.permute.xlu0 %3562
      %3564 = vrot.lane.b32.xlu0 %v2233, 127
      %v3565 = vpop.permute.xlu0 %3564
      %3566 = vrot.lane.b32.xlu0 %v2230, 127
      %v3567 = vpop.permute.xlu0 %3566
      %3568 = vrot.lane.b32.xlu0 %v2234, 127
      %v3569 = vpop.permute.xlu0 %3568
      %3570 = vrot.lane.b32.xlu0 %v2231, 127
      %v3571 = vpop.permute.xlu0 %3570
      %3572 = vrot.lane.b32.xlu0 %v2235, 127
      %v3573 = vpop.permute.xlu0 %3572
      %v3574 = vsel %vm2555, %v3567, %v3571
      %v3575 = vsel %vm2555, %v3569, %v3573
      %v3576 = vsel %vm2555, %v3563, %v3567
      %v3577 = vsel %vm2555, %v3565, %v3569
      %v3578 = vsel %vm2555, %v3559, %v3563
      %v3579 = vsel %vm2555, %v3561, %v3565
      %v3580 = vsel %vm2555, %v3571, %v3559
      %v3581 = vsel %vm2555, %v3573, %v3561
      %v3582 = vsel %vm2568, %v3578, 0.0
      %v3583 = vsel %vm2569, %v3576, 0.0
      %v3584 = vsel %vm2570, %v3574, 0.0
      %v3585 = vsel %vm2571, %v3580, 0.0
      %v3586 = vsel %vm2568, %v3579, 0.0
      %v3587 = vsel %vm2569, %v3577, 0.0
      %v3588 = vsel %vm2570, %v3575, 0.0
      %v3589 = vsel %vm2571, %v3581, 0.0
      %s3590 = scalar_lea.vmem %s6, 128
      %v3591 = vld [vmem:[%s3590] sm:$0xf]
      %v3592 = vld [vmem:[%s3590 + $0x4] sm:$0xf]
      %v3593 = vld [vmem:[%s3590 + $0x8] sm:$0xf]
      %v3594 = vld [vmem:[%s3590 + $0xc] sm:$0xf]
      %v3595 = vpack.c.bf16 %v3586, %v3582
      %v3596 = vpack.c.bf16 %v3587, %v3583
      %v3597 = vpack.c.bf16 %v3588, %v3584
      %v3598 = vpack.c.bf16 %v3589, %v3585
      %v3603 = vunpack.c.l.b16 %v3591
      %v3604 = vunpack.c.l.b16 %v3592
      %v3605 = vunpack.c.l.b16 %v3593
      %v3606 = vunpack.c.l.b16 %v3594
      %v3607 = vpack.c.b16 %v3604, %v3603
      %v3608 = vpack.c.b16 %v3606, %v3605
      %v3610 = vsel %vm2304, %v3607, 0
      %v3613 = vsel %vm2304, %v3608, 0
      %3615 = vmatprep.subr.bf16.mxu0 %v3596
      %3616 = vmatpush1.bf16.msra.mxu0 %v3595
      %3617 = vmatprep.subr.bf16.mxu0 0
      %3618 = vmatpush1.bf16.msra.mxu0 0
      %3619 = vmatprep.subr.bf16.mxu0 0
      %3620 = vmatpush1.bf16.msra.mxu0 0
      %3621 = vmatprep.subr.bf16.mxu0 0
      %3622 = vmatpush1.bf16.msra.mxu0 0
      %3623 = vmatprep.subr.bf16.mxu0 0
      %3624 = vmatpush1.bf16.msra.mxu0 0
      %3625 = vmatprep.subr.bf16.mxu0 0
      %3626 = vmatpush1.bf16.msra.mxu0 0
      %3627 = vmatprep.subr.bf16.mxu0 0
      %3628 = vmatpush1.bf16.msra.mxu0 0
      %3629 = vmatprep.subr.bf16.mxu0 0
      %3630 = vmatpush1.bf16.msra.mxu0 0
      %3631 = vmatprep.subr.bf16.mxu0 0
      %3632 = vmatpush1.bf16.msra.mxu0 0
      %3633 = vmatprep.subr.bf16.mxu0 0
      %3634 = vmatpush1.bf16.msra.mxu0 0
      %3635 = vmatprep.subr.bf16.mxu0 0
      %3636 = vmatpush1.bf16.msra.mxu0 0
      %3637 = vmatprep.subr.bf16.mxu0 0
      %3638 = vmatpush1.bf16.msra.mxu0 0
      %3639 = vmatprep.subr.bf16.mxu0 0
      %3640 = vmatpush1.bf16.msra.mxu0 0
      %3641 = vmatprep.subr.bf16.mxu0 0
      %3642 = vmatpush1.bf16.msra.mxu0 0
      %3643 = vmatprep.subr.bf16.mxu0 0
      %3644 = vmatpush1.bf16.msra.mxu0 0
      %3645 = vmatprep.subr.bf16.mxu0 0
      %3646 = vmatpush1.bf16.msra.mxu0 0
      %3647 = vmatprep.mubr.bf16.mxu0 0
      %3648 = vmatmul.mubr.bf16.gmra.mrb[0].mxu0 %v3610
      %v3649 = vpop.f32.mrb[0].mxu0
      %v3650 = vadd.f32 0.0, %v3649
      %v3651 = vpop.f32.mrb[0].mxu0
      %v3652 = vadd.f32 0.0, %v3651
      %v3653 = vpop.f32.mrb[0].mxu0
      %v3654 = vadd.f32 0.0, %v3653
      %v3655 = vpop.f32.mrb[0].mxu0
      %v3656 = vadd.f32 0.0, %v3655
      %3657 = vmatprep.mubr.bf16.mxu0 0
      %3658 = vmatmul.mubr.bf16.gmra.mrb[0].mxu0 %v3613
      %v3659 = vpop.f32.mrb[0].mxu0
      %v3660 = vadd.f32 0.0, %v3659
      %v3661 = vpop.f32.mrb[0].mxu0
      %v3662 = vadd.f32 0.0, %v3661
      %v3663 = vpop.f32.mrb[0].mxu0
      %v3664 = vadd.f32 0.0, %v3663
      %v3665 = vpop.f32.mrb[0].mxu0
      %v3666 = vadd.f32 0.0, %v3665
      %3667 = vdwg.mxu0
      %3668 = vmatprep.subr.bf16.mxu0 %v3598
      %3669 = vmatpush1.bf16.msra.mxu0 %v3597
      %3670 = vmatprep.subr.bf16.mxu0 0
      %3671 = vmatpush1.bf16.msra.mxu0 0
      %3672 = vmatprep.subr.bf16.mxu0 0
      %3673 = vmatpush1.bf16.msra.mxu0 0
      %3674 = vmatprep.subr.bf16.mxu0 0
      %3675 = vmatpush1.bf16.msra.mxu0 0
      %3676 = vmatprep.subr.bf16.mxu0 0
      %3677 = vmatpush1.bf16.msra.mxu0 0
      %3678 = vmatprep.subr.bf16.mxu0 0
      %3679 = vmatpush1.bf16.msra.mxu0 0
      %3680 = vmatprep.subr.bf16.mxu0 0
      %3681 = vmatpush1.bf16.msra.mxu0 0
      %3682 = vmatprep.subr.bf16.mxu0 0
      %3683 = vmatpush1.bf16.msra.mxu0 0
      %3684 = vmatprep.subr.bf16.mxu0 0
      %3685 = vmatpush1.bf16.msra.mxu0 0
      %3686 = vmatprep.subr.bf16.mxu0 0
      %3687 = vmatpush1.bf16.msra.mxu0 0
      %3688 = vmatprep.subr.bf16.mxu0 0
      %3689 = vmatpush1.bf16.msra.mxu0 0
      %3690 = vmatprep.subr.bf16.mxu0 0
      %3691 = vmatpush1.bf16.msra.mxu0 0
      %3692 = vmatprep.subr.bf16.mxu0 0
      %3693 = vmatpush1.bf16.msra.mxu0 0
      %3694 = vmatprep.subr.bf16.mxu0 0
      %3695 = vmatpush1.bf16.msra.mxu0 0
      %3696 = vmatprep.subr.bf16.mxu0 0
      %3697 = vmatpush1.bf16.msra.mxu0 0
      %3698 = vmatprep.subr.bf16.mxu0 0
      %3699 = vmatpush1.bf16.msra.mxu0 0
      %3700 = vmatprep.mubr.bf16.mxu0 0
      %3701 = vmatmul.mubr.bf16.gmra.mrb[0].mxu0 %v3610
      %v3702 = vpop.f32.mrb[0].mxu0
      %v3703 = vadd.f32 0.0, %v3702
      %v3704 = vpop.f32.mrb[0].mxu0
      %v3705 = vadd.f32 0.0, %v3704
      %v3706 = vpop.f32.mrb[0].mxu0
      %v3707 = vadd.f32 0.0, %v3706
      %v3708 = vpop.f32.mrb[0].mxu0
      %v3709 = vadd.f32 0.0, %v3708
      %3710 = vmatprep.mubr.bf16.mxu0 0
      %3711 = vmatmul.mubr.bf16.gmra.mrb[0].mxu0 %v3613
      %v3712 = vpop.f32.mrb[0].mxu0
      %v3713 = vadd.f32 0.0, %v3712
      %v3714 = vpop.f32.mrb[0].mxu0
      %v3715 = vadd.f32 0.0, %v3714
      %v3716 = vpop.f32.mrb[0].mxu0
      %v3717 = vadd.f32 0.0, %v3716
      %v3718 = vpop.f32.mrb[0].mxu0
      %v3719 = vadd.f32 0.0, %v3718
      %3720 = vdwg.mxu0
      %v3721 = vadd.f32 %v3542, %v3650
      %v3722 = vadd.f32 %v3543, %v3652
      %v3723 = vadd.f32 %v3544, %v3703
      %v3724 = vadd.f32 %v3545, %v3705
      %v3725 = vadd.f32 %v3546, %v3654
      %v3726 = vadd.f32 %v3547, %v3656
      %v3727 = vadd.f32 %v3548, %v3707
      %v3728 = vadd.f32 %v3549, %v3709
      %v3729 = vadd.f32 %v3550, %v3660
      %v3730 = vadd.f32 %v3551, %v3662
      %v3731 = vadd.f32 %v3552, %v3713
      %v3732 = vadd.f32 %v3553, %v3715
      %v3733 = vadd.f32 %v3554, %v3664
      %v3734 = vadd.f32 %v3555, %v3666
      %v3735 = vadd.f32 %v3556, %v3717
      %v3736 = vadd.f32 %v3557, %v3719
      %v3737 = vld [vmem:[%s7] sm:$0xff]
      %v3738 = vld [vmem:[%s7 + $0x8] sm:$0xff]
      %v3739 = vld [vmem:[%s7 + $0x10] sm:$0xff]
      %v3740 = vld [vmem:[%s7 + $0x18] sm:$0xff]
      %3742 = vset.pattern.permute.xlu0 0
      %3743 = vperm.xlu0 %3742, %v3737
      %v3744 = vpop.permute.xlu0 %3743
      %3747 = vset.pattern.permute.xlu0 0
      %3748 = vperm.xlu0 %3747, %v3738
      %v3749 = vpop.permute.xlu0 %3748
      %3752 = vset.pattern.permute.xlu0 0
      %3753 = vperm.xlu0 %3752, %v3739
      %v3754 = vpop.permute.xlu0 %3753
      %3757 = vset.pattern.permute.xlu0 0
      %3758 = vperm.xlu0 %3757, %v3740
      %v3759 = vpop.permute.xlu0 %3758
      %v3761 = vadd.f32 %v3721, %v3744
      %v3762 = vadd.f32 %v3722, %v3744
      %v3763 = vadd.f32 %v3723, %v3744
      %v3764 = vadd.f32 %v3724, %v3744
      %v3765 = vadd.f32 %v3725, %v3749
      %v3766 = vadd.f32 %v3726, %v3749
      %v3767 = vadd.f32 %v3727, %v3749
      %v3768 = vadd.f32 %v3728, %v3749
      %v3769 = vadd.f32 %v3729, %v3754
      %v3770 = vadd.f32 %v3730, %v3754
      %v3771 = vadd.f32 %v3731, %v3754
      %v3772 = vadd.f32 %v3732, %v3754
      %v3773 = vadd.f32 %v3733, %v3759
      %v3774 = vadd.f32 %v3734, %v3759
      %v3775 = vadd.f32 %v3735, %v3759
      %v3776 = vadd.f32 %v3736, %v3759
      %v3777 = vmax.f32 %v3761, 0.0
      %v3778 = vmax.f32 %v3762, 0.0
      %v3779 = vmax.f32 %v3763, 0.0
      %v3780 = vmax.f32 %v3764, 0.0
      %v3781 = vmax.f32 %v3765, 0.0
      %v3782 = vmax.f32 %v3766, 0.0
      %v3783 = vmax.f32 %v3767, 0.0
      %v3784 = vmax.f32 %v3768, 0.0
      %v3785 = vmax.f32 %v3769, 0.0
      %v3786 = vmax.f32 %v3770, 0.0
      %v3787 = vmax.f32 %v3771, 0.0
      %v3788 = vmax.f32 %v3772, 0.0
      %v3789 = vmax.f32 %v3773, 0.0
      %v3790 = vmax.f32 %v3774, 0.0
      %v3791 = vmax.f32 %v3775, 0.0
      %v3792 = vmax.f32 %v3776, 0.0
      %s3793 = sshra.s32 %s2197, 7
      %s3794 = sand.u32 %s2197, 127
      %s3795 = smul.addr %s3793, 8
      %s3796 = scalar_lea.vmem %s9, %s3795
      %3797 = vst [vmem:[%s3796] sm:$0xff] %v3777
      %3798 = vst [vmem:[%s3796 + $0x8] sm:$0xff] %v3778
      %3799 = vst [vmem:[%s3796 + $0x10] sm:$0xff] %v3779
      %3800 = vst [vmem:[%s3796 + $0x18] sm:$0xff] %v3780
      %3801 = vst [vmem:[%s3796 + $0x200] sm:$0xff] %v3781
      %3802 = vst [vmem:[%s3796 + $0x208] sm:$0xff] %v3782
      %3803 = vst [vmem:[%s3796 + $0x210] sm:$0xff] %v3783
      %3804 = vst [vmem:[%s3796 + $0x218] sm:$0xff] %v3784
      %3805 = vst [vmem:[%s3796 + $0x400] sm:$0xff] %v3785
      %3806 = vst [vmem:[%s3796 + $0x408] sm:$0xff] %v3786
      %3807 = vst [vmem:[%s3796 + $0x410] sm:$0xff] %v3787
      %3808 = vst [vmem:[%s3796 + $0x418] sm:$0xff] %v3788
      %3809 = vst [vmem:[%s3796 + $0x600] sm:$0xff] %v3789
      %3810 = vst [vmem:[%s3796 + $0x608] sm:$0xff] %v3790
      %3811 = vst [vmem:[%s3796 + $0x610] sm:$0xff] %v3791
      %3812 = vst [vmem:[%s3796 + $0x618] sm:$0xff] %v3792
    $region56: #{eigm_forward.1} parent=1 // loop_footer
      %s2196 = sadd.s32 1, %s2192
    $region57: #{eigm_forward.1} parent=1 // loop_footer_branch
      %2191 = sbr.rel target = $region53
    $region58: #{eigm_forward.1} parent=1 // loop_exit
      _
    // Predicated region
    $region59: #{eigm_forward.1} parent=1 // pred_check
      _
    $region60: #{eigm_forward.1} parent=1 // pred_check_branch
      %3814 = sbr.rel (0) target = $region62
    $region61: #{eigm_forward.1} parent=1 // pred_region
      _
    $region62: #{eigm_forward.1} parent=1 // pred_fallthru
      _
    // Predicated region
    $region63: #{eigm_forward.1} parent=1 // pred_check
      _
    $region64: #{eigm_forward.1} parent=1 // pred_check_branch
      %3816 = sbr.rel (0) target = $region66
    $region65: #{eigm_forward.1} parent=1 // pred_region
      _
    $region66: #{eigm_forward.1} parent=1 // pred_fallthru
      _
    // Predicated region
    $region67: #{eigm_forward.1} parent=1 // pred_check
      _
    $region68: #{eigm_forward.1} parent=1 // pred_check_branch
      %3818 = sbr.rel (0) target = $region70
    $region69: #{eigm_forward.1} parent=1 // pred_region
      _
    $region70: #{eigm_forward.1} parent=1 // pred_fallthru
      _
    // Predicated region
    $region71: #{eigm_forward.1} parent=1 // pred_check
      _
    $region72: #{eigm_forward.1} parent=1 // pred_check_branch
      %3820 = sbr.rel (0) target = $region74
    $region73: #{eigm_forward.1} parent=1 // pred_region
      _
    $region74: #{eigm_forward.1} parent=1 // pred_fallthru
      _
    %3821 = vsyncpa [#allocation5], 1

</llo_original>
